<compile_context>
chip_gen: v7x
topology: tpu7x:2x2x1
jax: 0.10.0
libtpu: 0.0.40
codegen_flags: <defaults>
</compile_context>

<pallas_src>
import functools

import jax
import jax.numpy as jnp
from jax import lax
from jax.experimental import pallas as pl
from jax.experimental.pallas import tpu as pltpu


# ----------------------------------------------------------------------------
# Pallas kernel: one grid step = one batched conv matmul (Tb timesteps) + Tb
# reversed LTC elementwise updates on one lane-dense pixel block.
# ----------------------------------------------------------------------------
def _convltc_kernel(x_ref, w_ref, p_ref, out_ref, acc_ref, *,
                    time_block, tau_input, valid_rem, approx_recip):
    """
    x_ref   : (9*Cin, Tb*Nblk)  im2col slab, lane order = (timestep-major, pixel-minor)
    w_ref   : (Cout, 9*Cin)     conv weight with eval-mode BN scale folded in
    p_ref   : (Cout, 4)         per-channel constants [cm, num0, emult, den0]
    out_ref : (Cout, Nblk)      v_pre state == final output (constant index map along
                                the sequential time axis keeps it VMEM-resident)
    acc_ref : (Cout, Tb*Nblk)   f32 VMEM scratch for the batched conv result
    """
    t_blk = pl.program_id(1)
    n_pix = out_ref.shape[1]

    @pl.when(t_blk == 0)
    def _():
        out_ref[...] = jnp.zeros_like(out_ref)

    # One MXU matmul per grid step covers all Tb timesteps: the tiny (32, 36)
    # weight push / pipeline fill is amortized over Tb*Nblk columns.  Routing the
    # result through VMEM scratch keeps vreg pressure bounded.
    acc_ref[...] = jnp.dot(w_ref[...], x_ref[...], preferred_element_type=jnp.float32)

    cm = p_ref[:, 0:1]                  # (Cout, 1) — broadcast over lanes
    num0 = p_ref[:, 1:2]
    emult = p_ref[:, 2:3]
    den0 = p_ref[:, 3:4]

    v = out_ref[...]                    # (Cout, Nblk) persistent recurrence state
    # Reversed loop inside the block + reversed time index_map == global t = S-1 .. 0.
    for j in range(time_block - 1, -1, -1):
        wih = acc_ref[:, pl.ds(j * n_pix, n_pix)]          # static, lane-aligned slice
        num = cm * v + num0 + wih * emult
        den = (den0 + wih) if tau_input else den0
        if approx_recip:
            z = num * pl.reciprocal(den + 1e-8, approx=True)   # EUP vrcp (free slot)
        else:
            z = num / (den + 1e-8)                             # exact (validation mode)
        v_new = jax.nn.sigmoid(z)                              # EUP logistic
        if j < valid_rem:
            v = v_new                                          # always a real timestep
        else:
            # padded timestep: only present in the ragged last time block (grid step 0)
            v = jnp.where(t_blk > 0, v_new, v)
    out_ref[...] = v


# ----------------------------------------------------------------------------
# Block-size selection against an explicit VMEM budget.
# ----------------------------------------------------------------------------
def _block_vmem_bytes(tb, nblk, cin, cout, x_bytes):
    return (2 * 9 * cin * tb * nblk * x_bytes        # double-buffered x block
            + cout * tb * nblk * 4                   # batched-matmul f32 scratch
            + 2 * cout * nblk * 4                    # resident out block (+ margin)
            + 2 * (cout * 9 * cin * x_bytes + cout * 16))


def _pick_time_block(S, nblk, cin, cout, x_bytes, budget, cap=8):
    fitting = [tb for tb in range(1, max(1, min(S, cap)) + 1)
               if _block_vmem_bytes(tb, nblk, cin, cout, x_bytes) <= budget]
    if not fitting:
        return 1
    best = max(fitting)
    divisors = [tb for tb in fitting if S % tb == 0]
    if divisors and 2 * max(divisors) >= best:       # prefer no ragged block if cheap
        best = max(divisors)
    return best


def _auto_pixel_blocks(B, H, W, cin, cout, x_bytes, budget):
    P = 1
    try:
        # v7x-class chips have 2 TensorCores; span both with the "parallel" grid axis.
        if "7" in jax.devices()[0].device_kind.lower():
            P = 2
    except Exception:
        P = 1
    if B % P != 0 or ((B // P) * H * W) % 128 != 0:
        P = 1
    # Grow P further purely as VMEM tiling (independent of core count).
    while (_block_vmem_bytes(1, (B // P) * H * W, cin, cout, x_bytes) > budget
           and B % (2 * P) == 0 and ((B // (2 * P)) * H * W) % 128 == 0):
        P *= 2
    return P


# ----------------------------------------------------------------------------
# Wrapper: layout glue, im2col (built directly in kernel layout), BN folding.
# ----------------------------------------------------------------------------
def conv_ltc_forward(inputs, conv_w, bn_gamma, bn_beta, bn_mean, bn_var,
                     cm, vleak, tau_m_or_gleak, e_revin,
                     *, tau_input=True, usetaum=True, bn_eps=1e-5,
                     time_block=None, pixel_blocks=None,
                     matmul_dtype=jnp.bfloat16, approx_recip=True,
                     vmem_budget_bytes=40 << 20):
    """inputs: (B, C_in, S, H, W).  Returns (B, C_out, H, W) float32."""
    B, Cin, S, H, W = inputs.shape
    Cout = conv_w.shape[0]
    N = B * H * W
    x_bytes = jnp.dtype(matmul_dtype).itemsize

    # ---- pixel blocking (2-TC parallelism and/or VMEM tiling) ----
    P = (_auto_pixel_blocks(B, H, W, Cin, Cout, x_bytes, vmem_budget_bytes)
         if pixel_blocks is None else pixel_blocks)
    if P > 1 and (B % P != 0 or ((B // P) * H * W) % 128 != 0):
        P = 1                                    # must split batch, 128-lane aligned
    Bp = B // P
    Nblk = Bp * H * W

    # ---- time blocking against the VMEM budget (ragged last block allowed) ----
    Tb = (_pick_time_block(S, Nblk, Cin, Cout, x_bytes, vmem_budget_bytes)
          if time_block is None else max(1, min(int(time_block), S)))
    nT = -(-S // Tb)
    S_pad = nT * Tb
    s_rem = S - (nT - 1) * Tb                    # valid timesteps in the ragged block

    # ---- glue (plain JAX): cast early, transpose RAW input only, build the im2col
    #      slab directly in (nT, 9*Cin, P*Tb*Nblk) kernel layout ----
    x = inputs.astype(matmul_dtype)
    if S_pad != S:
        # padded timesteps are skipped inside the kernel (never folded into v_pre)
        x = jnp.pad(x, ((0, 0), (0, 0), (0, S_pad - S), (0, 0), (0, 0)))
    x = x.reshape(P, Bp, Cin, nT, Tb, H, W)
    x = jnp.transpose(x, (3, 2, 0, 4, 1, 5, 6))              # (nT,Cin,P,Tb,Bp,H,W) raw
    x = jnp.pad(x, ((0, 0),) * 5 + ((1, 1), (1, 1)))         # 3x3 halo (per image)
    taps = [x[..., dy:dy + H, dx:dx + W] for dy in range(3) for dx in range(3)]
    x_col = jnp.stack(taps, axis=1)                          # (nT,9,Cin,P,Tb,Bp,H,W)
    x_col = x_col.reshape(nT, 9 * Cin, P * Tb * Nblk)        # contiguous merges only

    # fold eval-mode BatchNorm into the conv: wih = conv(x, w*scale) + bias
    scale = (bn_gamma / jnp.sqrt(bn_var + bn_eps)).astype(jnp.float32)
    bias = (bn_beta - bn_mean * scale).astype(jnp.float32)
    w_folded = conv_w.astype(jnp.float32) * scale[:, None, None, None]
    w_t = jnp.transpose(w_folded, (0, 2, 3, 1)).reshape(Cout, 9 * Cin)   # (tap, ci)
    w_t = w_t.astype(matmul_dtype)

    cm_f = cm.reshape(-1).astype(jnp.float32)
    vleak_f = vleak.reshape(-1).astype(jnp.float32)
    bd = (cm_f / tau_m_or_gleak.reshape(-1) if usetaum
          else tau_m_or_gleak.reshape(-1)).astype(jnp.float32)           # cm/tau_m or gleak
    a = bd * vleak_f
    e = e_revin.reshape(-1).astype(jnp.float32)
    if tau_input:
        num0, emult, den0 = a + bias * e, e, cm_f + bd + bias
    else:
        num0, emult, den0 = a + bias, jnp.ones_like(cm_f), cm_f + bd
    params = jnp.stack([cm_f, num0, emult, den0], axis=1)                # (Cout, 4)

    kernel = functools.partial(_convltc_kernel, time_block=Tb, tau_input=tau_input,
                               valid_rem=s_rem, approx_recip=approx_recip)

    vmem_limit = int(min(48 << 20,
                         max(32 << 20,
                             _block_vmem_bytes(Tb, Nblk, Cin, Cout, x_bytes) + (4 << 20))))

    out_cn = pl.pallas_call(
        kernel,
        out_shape=jax.ShapeDtypeStruct((Cout, N), jnp.float32),
        grid_spec=pltpu.PrefetchScalarGridSpec(
            num_scalar_prefetch=0,
            grid=(P, nT),                        # (parallel pixel blocks, sequential time)
            in_specs=[
                # time-reversed iteration: grid step g reads time block nT-1-g
                pl.BlockSpec((None, 9 * Cin, Tb * Nblk),
                             lambda p, g: (nT - 1 - g, 0, p)),
                pl.BlockSpec((Cout, 9 * Cin), lambda p, g: (0, 0)),
                pl.BlockSpec((Cout, 4), lambda p, g: (0, 0)),
            ],
            out_specs=pl.BlockSpec((Cout, Nblk), lambda p, g: (0, p)),
            scratch_shapes=[pltpu.VMEM((Cout, Tb * Nblk), jnp.float32)],
        ),
        compiler_params=pltpu.CompilerParams(
            dimension_semantics=("parallel", "arbitrary"),
            vmem_limit_bytes=vmem_limit),
    )(x_col, w_t, params)

    # back to PyTorch convention (B, C_out, H, W)
    return jnp.transpose(out_cn.reshape(Cout, B, H, W), (1, 0, 2, 3))


# ----------------------------------------------------------------------------
# Pure-JAX reference (mirrors the PyTorch forward) for correctness checking.
# ----------------------------------------------------------------------------
def conv_ltc_reference(inputs, conv_w, bn_gamma, bn_beta, bn_mean, bn_var,
                       cm, vleak, tau_m_or_gleak, e_revin,
                       *, tau_input=True, usetaum=True, bn_eps=1e-5):
    B, Cin, S, H, W = inputs.shape
    Cout = conv_w.shape[0]
    scale = (bn_gamma / jnp.sqrt(bn_var + bn_eps)).reshape(1, Cout, 1, 1)
    shift = (bn_beta - bn_mean * bn_gamma / jnp.sqrt(bn_var + bn_eps)).reshape(1, Cout, 1, 1)
    v_pre = jnp.zeros((B, Cout, H, W), jnp.float32)
    for t in range(S - 1, -1, -1):
        xt = inputs[:, :, t]
        conv = lax.conv_general_dilated(
            xt, conv_w, window_strides=(1, 1), padding="SAME",
            dimension_numbers=("NCHW", "OIHW", "NCHW"))
        wih = conv * scale + shift
        leak = cm / tau_m_or_gleak if usetaum else tau_m_or_gleak
        if tau_input:
            num = cm * v_pre + leak * vleak + wih * e_revin
            den = cm + leak + wih
        else:
            num = cm * v_pre + leak * vleak + wih
            den = cm + leak
        v_pre = jax.nn.sigmoid(num / (den + 1e-8))
    return v_pre


if __name__ == "__main__":
    # hparams: num_plane=4, nltc=32, use_erevin=True, taum_ini=(5,10),
    #          usetaum=True, stream_opt=False, burn_in_time=0
    B, Cin, S, H, W = 2, 4, 8, 16, 16
    Cout = 32
    tau_input, usetaum = True, True
    taum_ini = (5.0, 10.0)

    key = jax.random.PRNGKey(0)
    ks = jax.random.split(key, 8)

    # conv weight: xavier_normal_ on (Cout, Cin, 3, 3)
    fan_in, fan_out = Cin * 9, Cout * 9
    xavier_std = (2.0 / (fan_in + fan_out)) ** 0.5
    conv_w = xavier_std * jax.random.normal(ks[0], (Cout, Cin, 3, 3), jnp.float32)

    # BatchNorm2d (eval mode) parameters -- default-style init
    bn_gamma = jnp.ones((Cout,), jnp.float32)
    bn_beta = jnp.zeros((Cout,), jnp.float32)
    bn_mean = jnp.zeros((Cout,), jnp.float32)
    bn_var = jnp.ones((Cout,), jnp.float32)

    # LTC parameters, same distributions as the PyTorch __init__
    cm = 0.6 - 0.2 * jax.random.uniform(ks[1], (Cout, 1, 1), jnp.float32)       # U[0.4,0.6]
    vleak = 0.2 - 0.4 * jax.random.uniform(ks[2], (Cout, 1, 1), jnp.float32)    # U[-0.2,0.2]
    tau_m = (taum_ini[0] - taum_ini[1]) * jax.random.uniform(ks[3], (Cout, 1, 1), jnp.float32) + taum_ini[1]
    e_revin = 1.0 + 0.1 * jax.random.normal(ks[4], (Cout, 1, 1), jnp.float32)

    inputs = jax.random.normal(ks[5], (B, Cin, S, H, W), jnp.float32)

    ref = conv_ltc_reference(inputs, conv_w, bn_gamma, bn_beta, bn_mean, bn_var,
                             cm, vleak, tau_m, e_revin,
                             tau_input=tau_input, usetaum=usetaum)

    # 1) exact validation mode (f32 matmul, exact division): tight tolerance.
    out_exact = conv_ltc_forward(inputs, conv_w, bn_gamma, bn_beta, bn_mean, bn_var,
                                 cm, vleak, tau_m, e_revin,
                                 tau_input=tau_input, usetaum=usetaum,
                                 matmul_dtype=jnp.float32, approx_recip=False,
                                 pixel_blocks=1)
    out_exact = jax.block_until_ready(out_exact)
    assert out_exact.shape == (B, Cout, H, W), out_exact.shape
    assert jnp.allclose(out_exact, ref, rtol=1e-4, atol=1e-4), \
        float(jnp.max(jnp.abs(out_exact - ref)))

    # 2) exact mode with a ragged time block (S=8, Tb=3 -> nT=3, last block ragged)
    #    and 2 pixel blocks (multi-block recurrence carry + parallel pixel axis).
    out_ragged = conv_ltc_forward(inputs, conv_w, bn_gamma, bn_beta, bn_mean, bn_var,
                                  cm, vleak, tau_m, e_revin,
                                  tau_input=tau_input, usetaum=usetaum,
                                  matmul_dtype=jnp.float32, approx_recip=False,
                                  time_block=3, pixel_blocks=2)
    out_ragged = jax.block_until_ready(out_ragged)
    assert jnp.allclose(out_ragged, ref, rtol=1e-4, atol=1e-4), \
        float(jnp.max(jnp.abs(out_ragged - ref)))

    # 3) default performance mode (bf16 matmul + approx reciprocal): loose sanity
    #    check only -- bf16 conv near the den~0 singularity legitimately differs
    #    from the f32 reference on a few elements.
    out_fast = conv_ltc_forward(inputs, conv_w, bn_gamma, bn_beta, bn_mean, bn_var,
                                cm, vleak, tau_m, e_revin,
                                tau_input=tau_input, usetaum=usetaum)
    out_fast = jax.block_until_ready(out_fast)
    assert out_fast.shape == (B, Cout, H, W), out_fast.shape
    assert bool(jnp.all(jnp.isfinite(out_fast)))
    mean_err = float(jnp.mean(jnp.abs(out_fast - ref)))
    assert mean_err < 0.05, mean_err

    print("KERNEL_OK")
</pallas_src>

<mosaic_0001>
module attributes {stable_mosaic.version = 11 : i64} {
  func.func @_convltc_kernel(%arg0: i32, %arg1: i32, %arg2: memref<1x36x4096xf32, #tpu.memory_space<vmem>>, %arg3: memref<32x36xf32, #tpu.memory_space<vmem>>, %arg4: memref<32x4xf32, #tpu.memory_space<vmem>>, %arg5: memref<32x512xf32, #tpu.memory_space<vmem>>, %arg6: memref<32x4096xf32, #tpu.memory_space<vmem>>) attributes {dimension_semantics = [#tpu.dimension_semantics<parallel>, #tpu.dimension_semantics<arbitrary>], iteration_bounds = array<i64: 1, 1>, scalar_prefetch = 0 : i64, scratch_operands = 1 : i64, tpu.core_type = #tpu.core_type<tc>, window_params = [{transform_indices = @transform_0, window_bounds = array<i64: 1, 36, 4096>}, {pipeline_mode = #tpu.pipeline_mode<synchronous>, transform_indices = @transform_1, window_bounds = array<i64: 32, 36>}, {pipeline_mode = #tpu.pipeline_mode<synchronous>, transform_indices = @transform_2, window_bounds = array<i64: 32, 4>}, {transform_indices = @transform_3, window_bounds = array<i64: 32, 512>}]} {
    %c0_i32 = arith.constant 0 : i32
    %0 = arith.cmpi eq, %arg1, %c0_i32 : i32
    %1 = arith.extui %0 : i1 to i32
    %c0_i32_0 = arith.constant 0 : i32
    %2 = arith.cmpi ne, %1, %c0_i32_0 : i32
    scf.if %2 {
      %cst_41 = arith.constant 0.000000e+00 : f32
      %158 = vector.broadcast %cst_41 : f32 to vector<32x512xf32>
      %c0_42 = arith.constant 0 : index
      %c0_43 = arith.constant 0 : index
      %159 = vector.load %arg5[%c0_42, %c0_43] : memref<32x512xf32, #tpu.memory_space<vmem>>, vector<32x512xf32>
      tpu.vector_store %arg5[%c0_42, %c0_43], %158 {strides = array<i32>} : memref<32x512xf32, #tpu.memory_space<vmem>>, vector<32x512xf32>,
    } else {
    }
    %c0 = arith.constant 0 : index
    %c0_1 = arith.constant 0 : index
    %3 = vector.load %arg3[%c0, %c0_1] : memref<32x36xf32, #tpu.memory_space<vmem>>, vector<32x36xf32>
    %c0_2 = arith.constant 0 : index
    %c0_3 = arith.constant 0 : index
    %c0_4 = arith.constant 0 : index
    %4 = vector.load %arg2[%c0_2, %c0_3, %c0_4] : memref<1x36x4096xf32, #tpu.memory_space<vmem>>, vector<1x36x4096xf32>
    %5 = vector.shape_cast %4 : vector<1x36x4096xf32> to vector<36x4096xf32>
    %cst = arith.constant dense<0.000000e+00> : vector<32x4096xf32>
    %6 = tpu.matmul %3, %5, %cst {dimension_numbers = #tpu.dot_dimension_numbers<[1], [0], [0], [1], [0, 0, 1, 1], [], []>} : vector<32x36xf32>, vector<36x4096xf32>, vector<32x4096xf32> -> vector<32x4096xf32>
    %c0_5 = arith.constant 0 : index
    %c0_6 = arith.constant 0 : index
    %7 = vector.load %arg6[%c0_5, %c0_6] : memref<32x4096xf32, #tpu.memory_space<vmem>>, vector<32x4096xf32>
    tpu.vector_store %arg6[%c0_5, %c0_6], %6 {strides = array<i32>} : memref<32x4096xf32, #tpu.memory_space<vmem>>, vector<32x4096xf32>,
    %c0_7 = arith.constant 0 : index
    %c0_8 = arith.constant 0 : index
    %8 = vector.load %arg4[%c0_7, %c0_8] : memref<32x4xf32, #tpu.memory_space<vmem>>, vector<32x1xf32>
    %c0_9 = arith.constant 0 : index
    %c1 = arith.constant 1 : index
    %9 = vector.load %arg4[%c0_9, %c1] : memref<32x4xf32, #tpu.memory_space<vmem>>, vector<32x1xf32>
    %c0_10 = arith.constant 0 : index
    %c2 = arith.constant 2 : index
    %10 = vector.load %arg4[%c0_10, %c2] : memref<32x4xf32, #tpu.memory_space<vmem>>, vector<32x1xf32>
    %c0_11 = arith.constant 0 : index
    %c3 = arith.constant 3 : index
    %11 = vector.load %arg4[%c0_11, %c3] : memref<32x4xf32, #tpu.memory_space<vmem>>, vector<32x1xf32>
    %c0_12 = arith.constant 0 : index
    %c0_13 = arith.constant 0 : index
    %12 = vector.load %arg5[%c0_12, %c0_13] : memref<32x512xf32, #tpu.memory_space<vmem>>, vector<32x512xf32>
    %c0_14 = arith.constant 0 : index
    %c3584 = arith.constant 3584 : index
    %13 = vector.load %arg6[%c0_14, %c3584] : memref<32x4096xf32, #tpu.memory_space<vmem>>, vector<32x512xf32>
    %14 = vector.broadcast %8 : vector<32x1xf32> to vector<32x512xf32>
    %15 = arith.mulf %14, %12 : vector<32x512xf32>
    %16 = vector.broadcast %9 : vector<32x1xf32> to vector<32x512xf32>
    %17 = arith.addf %15, %16 : vector<32x512xf32>
    %18 = vector.broadcast %10 : vector<32x1xf32> to vector<32x512xf32>
    %19 = arith.mulf %13, %18 : vector<32x512xf32>
    %20 = arith.addf %17, %19 : vector<32x512xf32>
    %21 = vector.broadcast %11 : vector<32x1xf32> to vector<32x512xf32>
    %22 = arith.addf %21, %13 : vector<32x512xf32>
    %cst_15 = arith.constant 9.99999993E-9 : f32
    %23 = vector.broadcast %cst_15 : f32 to vector<32x512xf32>
    %24 = arith.addf %22, %23 : vector<32x512xf32>
    %25 = arith.divf %20, %24 : vector<32x512xf32>
    %26 = arith.negf %25 : vector<32x512xf32>
    %27 = math.exp %26 : vector<32x512xf32>
    %cst_16 = arith.constant 1.000000e+00 : f32
    %28 = vector.broadcast %cst_16 : f32 to vector<32x512xf32>
    %29 = arith.addf %28, %27 : vector<32x512xf32>
    %30 = arith.divf %28, %29 : vector<32x512xf32>
    %c0_17 = arith.constant 0 : index
    %c3072 = arith.constant 3072 : index
    %31 = vector.load %arg6[%c0_17, %c3072] : memref<32x4096xf32, #tpu.memory_space<vmem>>, vector<32x512xf32>
    %32 = vector.broadcast %8 : vector<32x1xf32> to vector<32x512xf32>
    %33 = arith.mulf %32, %30 : vector<32x512xf32>
    %34 = vector.broadcast %9 : vector<32x1xf32> to vector<32x512xf32>
    %35 = arith.addf %33, %34 : vector<32x512xf32>
    %36 = vector.broadcast %10 : vector<32x1xf32> to vector<32x512xf32>
    %37 = arith.mulf %31, %36 : vector<32x512xf32>
    %38 = arith.addf %35, %37 : vector<32x512xf32>
    %39 = vector.broadcast %11 : vector<32x1xf32> to vector<32x512xf32>
    %40 = arith.addf %39, %31 : vector<32x512xf32>
    %cst_18 = arith.constant 9.99999993E-9 : f32
    %41 = vector.broadcast %cst_18 : f32 to vector<32x512xf32>
    %42 = arith.addf %40, %41 : vector<32x512xf32>
    %43 = arith.divf %38, %42 : vector<32x512xf32>
    %44 = arith.negf %43 : vector<32x512xf32>
    %45 = math.exp %44 : vector<32x512xf32>
    %cst_19 = arith.constant 1.000000e+00 : f32
    %46 = vector.broadcast %cst_19 : f32 to vector<32x512xf32>
    %47 = arith.addf %46, %45 : vector<32x512xf32>
    %48 = arith.divf %46, %47 : vector<32x512xf32>
    %c0_20 = arith.constant 0 : index
    %c2560 = arith.constant 2560 : index
    %49 = vector.load %arg6[%c0_20, %c2560] : memref<32x4096xf32, #tpu.memory_space<vmem>>, vector<32x512xf32>
    %50 = vector.broadcast %8 : vector<32x1xf32> to vector<32x512xf32>
    %51 = arith.mulf %50, %48 : vector<32x512xf32>
    %52 = vector.broadcast %9 : vector<32x1xf32> to vector<32x512xf32>
    %53 = arith.addf %51, %52 : vector<32x512xf32>
    %54 = vector.broadcast %10 : vector<32x1xf32> to vector<32x512xf32>
    %55 = arith.mulf %49, %54 : vector<32x512xf32>
    %56 = arith.addf %53, %55 : vector<32x512xf32>
    %57 = vector.broadcast %11 : vector<32x1xf32> to vector<32x512xf32>
    %58 = arith.addf %57, %49 : vector<32x512xf32>
    %cst_21 = arith.constant 9.99999993E-9 : f32
    %59 = vector.broadcast %cst_21 : f32 to vector<32x512xf32>
    %60 = arith.addf %58, %59 : vector<32x512xf32>
    %61 = arith.divf %56, %60 : vector<32x512xf32>
    %62 = arith.negf %61 : vector<32x512xf32>
    %63 = math.exp %62 : vector<32x512xf32>
    %cst_22 = arith.constant 1.000000e+00 : f32
    %64 = vector.broadcast %cst_22 : f32 to vector<32x512xf32>
    %65 = arith.addf %64, %63 : vector<32x512xf32>
    %66 = arith.divf %64, %65 : vector<32x512xf32>
    %c0_23 = arith.constant 0 : index
    %c2048 = arith.constant 2048 : index
    %67 = vector.load %arg6[%c0_23, %c2048] : memref<32x4096xf32, #tpu.memory_space<vmem>>, vector<32x512xf32>
    %68 = vector.broadcast %8 : vector<32x1xf32> to vector<32x512xf32>
    %69 = arith.mulf %68, %66 : vector<32x512xf32>
    %70 = vector.broadcast %9 : vector<32x1xf32> to vector<32x512xf32>
    %71 = arith.addf %69, %70 : vector<32x512xf32>
    %72 = vector.broadcast %10 : vector<32x1xf32> to vector<32x512xf32>
    %73 = arith.mulf %67, %72 : vector<32x512xf32>
    %74 = arith.addf %71, %73 : vector<32x512xf32>
    %75 = vector.broadcast %11 : vector<32x1xf32> to vector<32x512xf32>
    %76 = arith.addf %75, %67 : vector<32x512xf32>
    %cst_24 = arith.constant 9.99999993E-9 : f32
    %77 = vector.broadcast %cst_24 : f32 to vector<32x512xf32>
    %78 = arith.addf %76, %77 : vector<32x512xf32>
    %79 = arith.divf %74, %78 : vector<32x512xf32>
    %80 = arith.negf %79 : vector<32x512xf32>
    %81 = math.exp %80 : vector<32x512xf32>
    %cst_25 = arith.constant 1.000000e+00 : f32
    %82 = vector.broadcast %cst_25 : f32 to vector<32x512xf32>
    %83 = arith.addf %82, %81 : vector<32x512xf32>
    %84 = arith.divf %82, %83 : vector<32x512xf32>
    %c0_26 = arith.constant 0 : index
    %c1536 = arith.constant 1536 : index
    %85 = vector.load %arg6[%c0_26, %c1536] : memref<32x4096xf32, #tpu.memory_space<vmem>>, vector<32x512xf32>
    %86 = vector.broadcast %8 : vector<32x1xf32> to vector<32x512xf32>
    %87 = arith.mulf %86, %84 : vector<32x512xf32>
    %88 = vector.broadcast %9 : vector<32x1xf32> to vector<32x512xf32>
    %89 = arith.addf %87, %88 : vector<32x512xf32>
    %90 = vector.broadcast %10 : vector<32x1xf32> to vector<32x512xf32>
    %91 = arith.mulf %85, %90 : vector<32x512xf32>
    %92 = arith.addf %89, %91 : vector<32x512xf32>
    %93 = vector.broadcast %11 : vector<32x1xf32> to vector<32x512xf32>
    %94 = arith.addf %93, %85 : vector<32x512xf32>
    %cst_27 = arith.constant 9.99999993E-9 : f32
    %95 = vector.broadcast %cst_27 : f32 to vector<32x512xf32>
    %96 = arith.addf %94, %95 : vector<32x512xf32>
    %97 = arith.divf %92, %96 : vector<32x512xf32>
    %98 = arith.negf %97 : vector<32x512xf32>
    %99 = math.exp %98 : vector<32x512xf32>
    %cst_28 = arith.constant 1.000000e+00 : f32
    %100 = vector.broadcast %cst_28 : f32 to vector<32x512xf32>
    %101 = arith.addf %100, %99 : vector<32x512xf32>
    %102 = arith.divf %100, %101 : vector<32x512xf32>
    %c0_29 = arith.constant 0 : index
    %c1024 = arith.constant 1024 : index
    %103 = vector.load %arg6[%c0_29, %c1024] : memref<32x4096xf32, #tpu.memory_space<vmem>>, vector<32x512xf32>
    %104 = vector.broadcast %8 : vector<32x1xf32> to vector<32x512xf32>
    %105 = arith.mulf %104, %102 : vector<32x512xf32>
    %106 = vector.broadcast %9 : vector<32x1xf32> to vector<32x512xf32>
    %107 = arith.addf %105, %106 : vector<32x512xf32>
    %108 = vector.broadcast %10 : vector<32x1xf32> to vector<32x512xf32>
    %109 = arith.mulf %103, %108 : vector<32x512xf32>
    %110 = arith.addf %107, %109 : vector<32x512xf32>
    %111 = vector.broadcast %11 : vector<32x1xf32> to vector<32x512xf32>
    %112 = arith.addf %111, %103 : vector<32x512xf32>
    %cst_30 = arith.constant 9.99999993E-9 : f32
    %113 = vector.broadcast %cst_30 : f32 to vector<32x512xf32>
    %114 = arith.addf %112, %113 : vector<32x512xf32>
    %115 = arith.divf %110, %114 : vector<32x512xf32>
    %116 = arith.negf %115 : vector<32x512xf32>
    %117 = math.exp %116 : vector<32x512xf32>
    %cst_31 = arith.constant 1.000000e+00 : f32
    %118 = vector.broadcast %cst_31 : f32 to vector<32x512xf32>
    %119 = arith.addf %118, %117 : vector<32x512xf32>
    %120 = arith.divf %118, %119 : vector<32x512xf32>
    %c0_32 = arith.constant 0 : index
    %c512 = arith.constant 512 : index
    %121 = vector.load %arg6[%c0_32, %c512] : memref<32x4096xf32, #tpu.memory_space<vmem>>, vector<32x512xf32>
    %122 = vector.broadcast %8 : vector<32x1xf32> to vector<32x512xf32>
    %123 = arith.mulf %122, %120 : vector<32x512xf32>
    %124 = vector.broadcast %9 : vector<32x1xf32> to vector<32x512xf32>
    %125 = arith.addf %123, %124 : vector<32x512xf32>
    %126 = vector.broadcast %10 : vector<32x1xf32> to vector<32x512xf32>
    %127 = arith.mulf %121, %126 : vector<32x512xf32>
    %128 = arith.addf %125, %127 : vector<32x512xf32>
    %129 = vector.broadcast %11 : vector<32x1xf32> to vector<32x512xf32>
    %130 = arith.addf %129, %121 : vector<32x512xf32>
    %cst_33 = arith.constant 9.99999993E-9 : f32
    %131 = vector.broadcast %cst_33 : f32 to vector<32x512xf32>
    %132 = arith.addf %130, %131 : vector<32x512xf32>
    %133 = arith.divf %128, %132 : vector<32x512xf32>
    %134 = arith.negf %133 : vector<32x512xf32>
    %135 = math.exp %134 : vector<32x512xf32>
    %cst_34 = arith.constant 1.000000e+00 : f32
    %136 = vector.broadcast %cst_34 : f32 to vector<32x512xf32>
    %137 = arith.addf %136, %135 : vector<32x512xf32>
    %138 = arith.divf %136, %137 : vector<32x512xf32>
    %c0_35 = arith.constant 0 : index
    %c0_36 = arith.constant 0 : index
    %139 = vector.load %arg6[%c0_35, %c0_36] : memref<32x4096xf32, #tpu.memory_space<vmem>>, vector<32x512xf32>
    %140 = vector.broadcast %8 : vector<32x1xf32> to vector<32x512xf32>
    %141 = arith.mulf %140, %138 : vector<32x512xf32>
    %142 = vector.broadcast %9 : vector<32x1xf32> to vector<32x512xf32>
    %143 = arith.addf %141, %142 : vector<32x512xf32>
    %144 = vector.broadcast %10 : vector<32x1xf32> to vector<32x512xf32>
    %145 = arith.mulf %139, %144 : vector<32x512xf32>
    %146 = arith.addf %143, %145 : vector<32x512xf32>
    %147 = vector.broadcast %11 : vector<32x1xf32> to vector<32x512xf32>
    %148 = arith.addf %147, %139 : vector<32x512xf32>
    %cst_37 = arith.constant 9.99999993E-9 : f32
    %149 = vector.broadcast %cst_37 : f32 to vector<32x512xf32>
    %150 = arith.addf %148, %149 : vector<32x512xf32>
    %151 = arith.divf %146, %150 : vector<32x512xf32>
    %152 = arith.negf %151 : vector<32x512xf32>
    %153 = math.exp %152 : vector<32x512xf32>
    %cst_38 = arith.constant 1.000000e+00 : f32
    %154 = vector.broadcast %cst_38 : f32 to vector<32x512xf32>
    %155 = arith.addf %154, %153 : vector<32x512xf32>
    %156 = arith.divf %154, %155 : vector<32x512xf32>
    %c0_39 = arith.constant 0 : index
    %c0_40 = arith.constant 0 : index
    %157 = vector.load %arg5[%c0_39, %c0_40] : memref<32x512xf32, #tpu.memory_space<vmem>>, vector<32x512xf32>
    tpu.vector_store %arg5[%c0_39, %c0_40], %156 {strides = array<i32>} : memref<32x512xf32, #tpu.memory_space<vmem>>, vector<32x512xf32>,
    return
  }
  func.func @transform_0(%arg0: i32, %arg1: i32) -> (i32, i32, i32) {
    %c0_i32 = arith.constant 0 : i32
    %0 = arith.subi %c0_i32, %arg1 : i32
    %c0_i32_0 = arith.constant 0 : i32
    %c0_i32_1 = arith.constant 0 : i32
    return %0, %c0_i32_0, %arg0 : i32, i32, i32
  }
  func.func @transform_1(%arg0: i32, %arg1: i32) -> (i32, i32) {
    %c0_i32 = arith.constant 0 : i32
    %c0_i32_0 = arith.constant 0 : i32
    %c0_i32_1 = arith.constant 0 : i32
    return %c0_i32, %c0_i32_0 : i32, i32
  }
  func.func @transform_2(%arg0: i32, %arg1: i32) -> (i32, i32) {
    %c0_i32 = arith.constant 0 : i32
    %c0_i32_0 = arith.constant 0 : i32
    %c0_i32_1 = arith.constant 0 : i32
    return %c0_i32, %c0_i32_0 : i32, i32
  }
  func.func @transform_3(%arg0: i32, %arg1: i32) -> (i32, i32) {
    %c0_i32 = arith.constant 0 : i32
    %c0_i32_0 = arith.constant 0 : i32
    return %c0_i32, %arg0 : i32, i32
  }
}

</mosaic_0001>

<llo_original>
// kernel: tpu_custom_call.1
$region0: #{tpu_custom_call.1}
  #allocation0 [shape = 'u32[]', space=smem, size = 0x4, offset = 0x4, fixed_abs, tag = 'smem constant byte address 0x4 - core index']
  #allocation1 [shape = 'u32[144,128]{1,0:T(1,128)}', space=vmem, size = 0x12000, scoped, tag = 'internal scratch']
  #allocation2 [shape = 'f32[32,4096]{1,0:T(8,128)}', space=vmem, size = 0x80000, scoped, tag = 'scratch operand']
  %s0 = inlined_call_operand.vmem [shape: f32[1,36,4096], index: 0, kind: input, shape index: {}]
  %s1 = inlined_call_operand.vmem [shape: f32[32,36], index: 1, kind: input, shape index: {}]
  %s2 = inlined_call_operand.vmem [shape: f32[32,4], index: 2, kind: input, shape index: {}]
  %s3 = inlined_call_operand.hbm [shape: f32[32,512], index: 3, kind: output, shape index: {}]
  %s4 = sld [smem:[#allocation0]]
  $region26: #{tpu_custom_call.1} parent=0
    _
  %s6 = ssub.s32 1, %s4
  %s7 = scalar_select 0, %s6, %s4
  $region1: #{tpu_custom_call.1} parent=0
    #allocation3 [shape = 'u8[65536]{0}', space=vmem, size = 0x10000, scoped, tag = 'output window, operand 0, single buffered']
    #allocation4 [shape = 's32[1]{0}', space=sflag, size = 0x4, scoped, tag = 'scoped memory for tpu_custom_call.1']
    %8 = vsyncpa [#allocation4], 0
    // Predicated region
    $region2: #{tpu_custom_call.1} parent=1 // pred_check
      _
    $region3: #{tpu_custom_call.1} parent=1 // pred_check_branch
      %10 = sbr.rel (0) target = $region5
    $region4: #{tpu_custom_call.1} parent=1 // pred_region
      %s11 = ssub.s32 0, 0
      %p12 = scmp.lt.s32.totalorder %s11, 0
      %s13 = scalar_select %p12, %s11, 0
      %s14 = smul.addr %s13, 160
      %s15 = smul.addr %s14, 8
      %s16 = scalar_lea.vmem %s0, %s15
      %s17 = ssub.s32 0, 0
    $region5: #{tpu_custom_call.1} parent=1 // pred_fallthru
      _
    // Predicated region
    $region6: #{tpu_custom_call.1} parent=1 // pred_check
      _
    $region7: #{tpu_custom_call.1} parent=1 // pred_check_branch
      %19 = sbr.rel (0) target = $region9
    $region8: #{tpu_custom_call.1} parent=1 // pred_region
      _
    $region9: #{tpu_custom_call.1} parent=1 // pred_fallthru
      _
    // Predicated region
    $region10: #{tpu_custom_call.1} parent=1 // pred_check
      _
    $region11: #{tpu_custom_call.1} parent=1 // pred_check_branch
      %21 = sbr.rel (0) target = $region13
    $region12: #{tpu_custom_call.1} parent=1 // pred_region
      _
    $region13: #{tpu_custom_call.1} parent=1 // pred_fallthru
      _
    %s22 = ssub.s32 0, 0
    %p23 = scmp.lt.s32.totalorder %s22, 0
    %s24 = scalar_select %p23, %s22, 0
    %s25 = smul.addr %s24, 160
    %s26 = smul.addr %s25, 8
    %s27 = scalar_lea.vmem %s0, %s26
    %s28 = ssub.s32 0, 0
    %p29 = scmp.lt.s32.totalorder %s28, 0
    %s30 = scalar_select %p29, %s28, 0
    %s31 = smul.addr %s30, 160
    %s32 = smul.addr %s31, 8
    %s33 = scalar_lea.vmem %s0, %s32
    %s34 = ssub.s32 0, 0
    %p35 = scmp.eq.s32.totalorder 0, 0
    // Predicated region
    $region14: #{tpu_custom_call.1} parent=1 // pred_check
      %p36 = pneg %p35
    $region15: #{tpu_custom_call.1} parent=1 // pred_check_branch
      %38 = sbr.rel (%p36) target = $region17
    $region16: #{tpu_custom_call.1} parent=1 // pred_region
      %39 = vst [vmem:[#allocation3] sm:$0xff] 0.0
      %40 = vst [vmem:[#allocation3 + $0x8] sm:$0xff] 0.0
      %41 = vst [vmem:[#allocation3 + $0x10] sm:$0xff] 0.0
      %42 = vst [vmem:[#allocation3 + $0x18] sm:$0xff] 0.0
      %43 = vst [vmem:[#allocation3 + $0x20] sm:$0xff] 0.0
      %44 = vst [vmem:[#allocation3 + $0x28] sm:$0xff] 0.0
      %45 = vst [vmem:[#allocation3 + $0x30] sm:$0xff] 0.0
      %46 = vst [vmem:[#allocation3 + $0x38] sm:$0xff] 0.0
      %47 = vst [vmem:[#allocation3 + $0x40] sm:$0xff] 0.0
      %48 = vst [vmem:[#allocation3 + $0x48] sm:$0xff] 0.0
      %49 = vst [vmem:[#allocation3 + $0x50] sm:$0xff] 0.0
      %50 = vst [vmem:[#allocation3 + $0x58] sm:$0xff] 0.0
      %51 = vst [vmem:[#allocation3 + $0x60] sm:$0xff] 0.0
      %52 = vst [vmem:[#allocation3 + $0x68] sm:$0xff] 0.0
      %53 = vst [vmem:[#allocation3 + $0x70] sm:$0xff] 0.0
      %54 = vst [vmem:[#allocation3 + $0x78] sm:$0xff] 0.0
    $region17: #{tpu_custom_call.1} parent=1 // pred_fallthru
      _
    %v55 = vld [vmem:[%s1] sm:$0xff]
    %v56 = vld [vmem:[%s1 + $0x8] sm:$0xff]
    %v57 = vld [vmem:[%s1 + $0x10] sm:$0xff]
    %v58 = vld [vmem:[%s1 + $0x18] sm:$0xff]
    %v59 = vld [vmem:[%s33] sm:$0xff]
    %v60 = vld [vmem:[%s33 + $0x8] sm:$0xff]
    %v61 = vld [vmem:[%s33 + $0x10] sm:$0xff]
    %v62 = vld [vmem:[%s33 + $0x18] sm:$0xff]
    %v63 = vld [vmem:[%s33 + $0x20] sm:$0xff]
    %v64 = vld [vmem:[%s33 + $0x28] sm:$0xff]
    %v65 = vld [vmem:[%s33 + $0x30] sm:$0xff]
    %v66 = vld [vmem:[%s33 + $0x38] sm:$0xff]
    %v67 = vld [vmem:[%s33 + $0x40] sm:$0xff]
    %v68 = vld [vmem:[%s33 + $0x48] sm:$0xff]
    %v69 = vld [vmem:[%s33 + $0x50] sm:$0xff]
    %v70 = vld [vmem:[%s33 + $0x58] sm:$0xff]
    %v71 = vld [vmem:[%s33 + $0x60] sm:$0xff]
    %v72 = vld [vmem:[%s33 + $0x68] sm:$0xff]
    %v73 = vld [vmem:[%s33 + $0x70] sm:$0xff]
    %v74 = vld [vmem:[%s33 + $0x78] sm:$0xff]
    %v75 = vld [vmem:[%s33 + $0x80] sm:$0xff]
    %v76 = vld [vmem:[%s33 + $0x88] sm:$0xff]
    %v77 = vld [vmem:[%s33 + $0x90] sm:$0xff]
    %v78 = vld [vmem:[%s33 + $0x98] sm:$0xff]
    %v79 = vld [vmem:[%s33 + $0xa0] sm:$0xff]
    %v80 = vld [vmem:[%s33 + $0xa8] sm:$0xff]
    %v81 = vld [vmem:[%s33 + $0xb0] sm:$0xff]
    %v82 = vld [vmem:[%s33 + $0xb8] sm:$0xff]
    %v83 = vld [vmem:[%s33 + $0xc0] sm:$0xff]
    %v84 = vld [vmem:[%s33 + $0xc8] sm:$0xff]
    %v85 = vld [vmem:[%s33 + $0xd0] sm:$0xff]
    %v86 = vld [vmem:[%s33 + $0xd8] sm:$0xff]
    %v87 = vld [vmem:[%s33 + $0xe0] sm:$0xff]
    %v88 = vld [vmem:[%s33 + $0xe8] sm:$0xff]
    %v89 = vld [vmem:[%s33 + $0xf0] sm:$0xff]
    %v90 = vld [vmem:[%s33 + $0xf8] sm:$0xff]
    %v91 = vld [vmem:[%s33 + $0x100] sm:$0xff]
    %v92 = vld [vmem:[%s33 + $0x108] sm:$0xff]
    %v93 = vld [vmem:[%s33 + $0x110] sm:$0xff]
    %v94 = vld [vmem:[%s33 + $0x118] sm:$0xff]
    %v95 = vld [vmem:[%s33 + $0x120] sm:$0xff]
    %v96 = vld [vmem:[%s33 + $0x128] sm:$0xff]
    %v97 = vld [vmem:[%s33 + $0x130] sm:$0xff]
    %v98 = vld [vmem:[%s33 + $0x138] sm:$0xff]
    %v99 = vld [vmem:[%s33 + $0x140] sm:$0xff]
    %v100 = vld [vmem:[%s33 + $0x148] sm:$0xff]
    %v101 = vld [vmem:[%s33 + $0x150] sm:$0xff]
    %v102 = vld [vmem:[%s33 + $0x158] sm:$0xff]
    %v103 = vld [vmem:[%s33 + $0x160] sm:$0xff]
    %v104 = vld [vmem:[%s33 + $0x168] sm:$0xff]
    %v105 = vld [vmem:[%s33 + $0x170] sm:$0xff]
    %v106 = vld [vmem:[%s33 + $0x178] sm:$0xff]
    %v107 = vld [vmem:[%s33 + $0x180] sm:$0xff]
    %v108 = vld [vmem:[%s33 + $0x188] sm:$0xff]
    %v109 = vld [vmem:[%s33 + $0x190] sm:$0xff]
    %v110 = vld [vmem:[%s33 + $0x198] sm:$0xff]
    %v111 = vld [vmem:[%s33 + $0x1a0] sm:$0xff]
    %v112 = vld [vmem:[%s33 + $0x1a8] sm:$0xff]
    %v113 = vld [vmem:[%s33 + $0x1b0] sm:$0xff]
    %v114 = vld [vmem:[%s33 + $0x1b8] sm:$0xff]
    %v115 = vld [vmem:[%s33 + $0x1c0] sm:$0xff]
    %v116 = vld [vmem:[%s33 + $0x1c8] sm:$0xff]
    %v117 = vld [vmem:[%s33 + $0x1d0] sm:$0xff]
    %v118 = vld [vmem:[%s33 + $0x1d8] sm:$0xff]
    %v119 = vld [vmem:[%s33 + $0x1e0] sm:$0xff]
    %v120 = vld [vmem:[%s33 + $0x1e8] sm:$0xff]
    %v121 = vld [vmem:[%s33 + $0x1f0] sm:$0xff]
    %v122 = vld [vmem:[%s33 + $0x1f8] sm:$0xff]
    %v123 = vld [vmem:[%s33 + $0x200] sm:$0xff]
    %v124 = vld [vmem:[%s33 + $0x208] sm:$0xff]
    %v125 = vld [vmem:[%s33 + $0x210] sm:$0xff]
    %v126 = vld [vmem:[%s33 + $0x218] sm:$0xff]
    %v127 = vld [vmem:[%s33 + $0x220] sm:$0xff]
    %v128 = vld [vmem:[%s33 + $0x228] sm:$0xff]
    %v129 = vld [vmem:[%s33 + $0x230] sm:$0xff]
    %v130 = vld [vmem:[%s33 + $0x238] sm:$0xff]
    %v131 = vld [vmem:[%s33 + $0x240] sm:$0xff]
    %v132 = vld [vmem:[%s33 + $0x248] sm:$0xff]
    %v133 = vld [vmem:[%s33 + $0x250] sm:$0xff]
    %v134 = vld [vmem:[%s33 + $0x258] sm:$0xff]
    %v135 = vld [vmem:[%s33 + $0x260] sm:$0xff]
    %v136 = vld [vmem:[%s33 + $0x268] sm:$0xff]
    %v137 = vld [vmem:[%s33 + $0x270] sm:$0xff]
    %v138 = vld [vmem:[%s33 + $0x278] sm:$0xff]
    %v139 = vld [vmem:[%s33 + $0x280] sm:$0xff]
    %v140 = vld [vmem:[%s33 + $0x288] sm:$0xff]
    %v141 = vld [vmem:[%s33 + $0x290] sm:$0xff]
    %v142 = vld [vmem:[%s33 + $0x298] sm:$0xff]
    %v143 = vld [vmem:[%s33 + $0x2a0] sm:$0xff]
    %v144 = vld [vmem:[%s33 + $0x2a8] sm:$0xff]
    %v145 = vld [vmem:[%s33 + $0x2b0] sm:$0xff]
    %v146 = vld [vmem:[%s33 + $0x2b8] sm:$0xff]
    %v147 = vld [vmem:[%s33 + $0x2c0] sm:$0xff]
    %v148 = vld [vmem:[%s33 + $0x2c8] sm:$0xff]
    %v149 = vld [vmem:[%s33 + $0x2d0] sm:$0xff]
    %v150 = vld [vmem:[%s33 + $0x2d8] sm:$0xff]
    %v151 = vld [vmem:[%s33 + $0x2e0] sm:$0xff]
    %v152 = vld [vmem:[%s33 + $0x2e8] sm:$0xff]
    %v153 = vld [vmem:[%s33 + $0x2f0] sm:$0xff]
    %v154 = vld [vmem:[%s33 + $0x2f8] sm:$0xff]
    %v155 = vld [vmem:[%s33 + $0x300] sm:$0xff]
    %v156 = vld [vmem:[%s33 + $0x308] sm:$0xff]
    %v157 = vld [vmem:[%s33 + $0x310] sm:$0xff]
    %v158 = vld [vmem:[%s33 + $0x318] sm:$0xff]
    %v159 = vld [vmem:[%s33 + $0x320] sm:$0xff]
    %v160 = vld [vmem:[%s33 + $0x328] sm:$0xff]
    %v161 = vld [vmem:[%s33 + $0x330] sm:$0xff]
    %v162 = vld [vmem:[%s33 + $0x338] sm:$0xff]
    %v163 = vld [vmem:[%s33 + $0x340] sm:$0xff]
    %v164 = vld [vmem:[%s33 + $0x348] sm:$0xff]
    %v165 = vld [vmem:[%s33 + $0x350] sm:$0xff]
    %v166 = vld [vmem:[%s33 + $0x358] sm:$0xff]
    %v167 = vld [vmem:[%s33 + $0x360] sm:$0xff]
    %v168 = vld [vmem:[%s33 + $0x368] sm:$0xff]
    %v169 = vld [vmem:[%s33 + $0x370] sm:$0xff]
    %v170 = vld [vmem:[%s33 + $0x378] sm:$0xff]
    %v171 = vld [vmem:[%s33 + $0x380] sm:$0xff]
    %v172 = vld [vmem:[%s33 + $0x388] sm:$0xff]
    %v173 = vld [vmem:[%s33 + $0x390] sm:$0xff]
    %v174 = vld [vmem:[%s33 + $0x398] sm:$0xff]
    %v175 = vld [vmem:[%s33 + $0x3a0] sm:$0xff]
    %v176 = vld [vmem:[%s33 + $0x3a8] sm:$0xff]
    %v177 = vld [vmem:[%s33 + $0x3b0] sm:$0xff]
    %v178 = vld [vmem:[%s33 + $0x3b8] sm:$0xff]
    %v179 = vld [vmem:[%s33 + $0x3c0] sm:$0xff]
    %v180 = vld [vmem:[%s33 + $0x3c8] sm:$0xff]
    %v181 = vld [vmem:[%s33 + $0x3d0] sm:$0xff]
    %v182 = vld [vmem:[%s33 + $0x3d8] sm:$0xff]
    %v183 = vld [vmem:[%s33 + $0x3e0] sm:$0xff]
    %v184 = vld [vmem:[%s33 + $0x3e8] sm:$0xff]
    %v185 = vld [vmem:[%s33 + $0x3f0] sm:$0xff]
    %v186 = vld [vmem:[%s33 + $0x3f8] sm:$0xff]
    %v187 = vld [vmem:[%s33 + $0x400] sm:$0xf]
    %v188 = vld [vmem:[%s33 + $0x408] sm:$0xf]
    %v189 = vld [vmem:[%s33 + $0x410] sm:$0xf]
    %v190 = vld [vmem:[%s33 + $0x418] sm:$0xf]
    %v191 = vld [vmem:[%s33 + $0x420] sm:$0xf]
    %v192 = vld [vmem:[%s33 + $0x428] sm:$0xf]
    %v193 = vld [vmem:[%s33 + $0x430] sm:$0xf]
    %v194 = vld [vmem:[%s33 + $0x438] sm:$0xf]
    %v195 = vld [vmem:[%s33 + $0x440] sm:$0xf]
    %v196 = vld [vmem:[%s33 + $0x448] sm:$0xf]
    %v197 = vld [vmem:[%s33 + $0x450] sm:$0xf]
    %v198 = vld [vmem:[%s33 + $0x458] sm:$0xf]
    %v199 = vld [vmem:[%s33 + $0x460] sm:$0xf]
    %v200 = vld [vmem:[%s33 + $0x468] sm:$0xf]
    %v201 = vld [vmem:[%s33 + $0x470] sm:$0xf]
    %v202 = vld [vmem:[%s33 + $0x478] sm:$0xf]
    %v203 = vld [vmem:[%s33 + $0x480] sm:$0xf]
    %v204 = vld [vmem:[%s33 + $0x488] sm:$0xf]
    %v205 = vld [vmem:[%s33 + $0x490] sm:$0xf]
    %v206 = vld [vmem:[%s33 + $0x498] sm:$0xf]
    %v207 = vld [vmem:[%s33 + $0x4a0] sm:$0xf]
    %v208 = vld [vmem:[%s33 + $0x4a8] sm:$0xf]
    %v209 = vld [vmem:[%s33 + $0x4b0] sm:$0xf]
    %v210 = vld [vmem:[%s33 + $0x4b8] sm:$0xf]
    %v211 = vld [vmem:[%s33 + $0x4c0] sm:$0xf]
    %v212 = vld [vmem:[%s33 + $0x4c8] sm:$0xf]
    %v213 = vld [vmem:[%s33 + $0x4d0] sm:$0xf]
    %v214 = vld [vmem:[%s33 + $0x4d8] sm:$0xf]
    %v215 = vld [vmem:[%s33 + $0x4e0] sm:$0xf]
    %v216 = vld [vmem:[%s33 + $0x4e8] sm:$0xf]
    %v217 = vld [vmem:[%s33 + $0x4f0] sm:$0xf]
    %v218 = vld [vmem:[%s33 + $0x4f8] sm:$0xf]
    %vm219 = vcmask 293888
    %v221 = vsel %vm219, %v55, 0
    %v224 = vsel %vm219, %v56, 0
    %v227 = vsel %vm219, %v57, 0
    %v230 = vsel %vm219, %v58, 0
    %vm232 = vcmask 1043456
    %v234 = vsel %vm232, %v187, 0
    %v237 = vsel %vm232, %v188, 0
    %v240 = vsel %vm232, %v189, 0
    %v243 = vsel %vm232, %v190, 0
    %v246 = vsel %vm232, %v191, 0
    %v249 = vsel %vm232, %v192, 0
    %v252 = vsel %vm232, %v193, 0
    %v255 = vsel %vm232, %v194, 0
    %v258 = vsel %vm232, %v195, 0
    %v261 = vsel %vm232, %v196, 0
    %v264 = vsel %vm232, %v197, 0
    %v267 = vsel %vm232, %v198, 0
    %v270 = vsel %vm232, %v199, 0
    %v273 = vsel %vm232, %v200, 0
    %v276 = vsel %vm232, %v201, 0
    %v279 = vsel %vm232, %v202, 0
    %v282 = vsel %vm232, %v203, 0
    %v285 = vsel %vm232, %v204, 0
    %v288 = vsel %vm232, %v205, 0
    %v291 = vsel %vm232, %v206, 0
    %v294 = vsel %vm232, %v207, 0
    %v297 = vsel %vm232, %v208, 0
    %v300 = vsel %vm232, %v209, 0
    %v303 = vsel %vm232, %v210, 0
    %v306 = vsel %vm232, %v211, 0
    %v309 = vsel %vm232, %v212, 0
    %v312 = vsel %vm232, %v213, 0
    %v315 = vsel %vm232, %v214, 0
    %v318 = vsel %vm232, %v215, 0
    %v321 = vsel %vm232, %v216, 0
    %v324 = vsel %vm232, %v217, 0
    %v327 = vsel %vm232, %v218, 0
    %329 = vmatprep.subr.mxu0 %v60
    %330 = vmatpush1.msra.mxu0 %v59
    %331 = vmatprep.subr.mxu0 %v92
    %332 = vmatpush1.msra.mxu0 %v91
    %333 = vmatprep.subr.mxu0 %v124
    %334 = vmatpush1.msra.mxu0 %v123
    %335 = vmatprep.subr.mxu0 %v156
    %336 = vmatpush1.msra.mxu0 %v155
    %337 = vmatprep.subr.mxu0 %v237
    %338 = vmatpush1.msra.mxu0 %v234
    %339 = vmatprep.subr.mxu0 0.0
    %340 = vmatpush1.msra.mxu0 0.0
    %341 = vmatprep.subr.mxu0 0.0
    %342 = vmatpush1.msra.mxu0 0.0
    %343 = vmatprep.subr.mxu0 0.0
    %344 = vmatpush1.msra.mxu0 0.0
    %345 = vmatprep.subr.mxu0 0.0
    %346 = vmatpush1.msra.mxu0 0.0
    %347 = vmatprep.subr.mxu0 0.0
    %348 = vmatpush1.msra.mxu0 0.0
    %349 = vmatprep.subr.mxu0 0.0
    %350 = vmatpush1.msra.mxu0 0.0
    %351 = vmatprep.subr.mxu0 0.0
    %352 = vmatpush1.msra.mxu0 0.0
    %353 = vmatprep.subr.mxu0 0.0
    %354 = vmatpush1.msra.mxu0 0.0
    %355 = vmatprep.subr.mxu0 0.0
    %356 = vmatpush1.msra.mxu0 0.0
    %357 = vmatprep.subr.mxu0 0.0
    %358 = vmatpush1.msra.mxu0 0.0
    %359 = vmatprep.subr.mxu0 0.0
    %360 = vmatpush1.msra.mxu0 0.0
    %361 = vmatprep.subr.mxu0 0.0
    %362 = vmatpush1.msra.mxu0 0.0
    %363 = vmatprep.subr.mxu0 0.0
    %364 = vmatpush1.msra.mxu0 0.0
    %365 = vmatprep.subr.mxu0 0.0
    %366 = vmatpush1.msra.mxu0 0.0
    %367 = vmatprep.subr.mxu0 0.0
    %368 = vmatpush1.msra.mxu0 0.0
    %369 = vmatprep.subr.mxu0 0.0
    %370 = vmatpush1.msra.mxu0 0.0
    %371 = vmatprep.subr.mxu0 0.0
    %372 = vmatpush1.msra.mxu0 0.0
    %373 = vmatprep.subr.mxu0 0.0
    %374 = vmatpush1.msra.mxu0 0.0
    %375 = vmatprep.subr.mxu0 0.0
    %376 = vmatpush1.msra.mxu0 0.0
    %377 = vmatprep.subr.mxu0 0.0
    %378 = vmatpush1.msra.mxu0 0.0
    %379 = vmatprep.subr.mxu0 0.0
    %380 = vmatpush1.msra.mxu0 0.0
    %381 = vmatprep.subr.mxu0 0.0
    %382 = vmatpush1.msra.mxu0 0.0
    %383 = vmatprep.subr.mxu0 0.0
    %384 = vmatpush1.msra.mxu0 0.0
    %385 = vmatprep.subr.mxu0 0.0
    %386 = vmatpush1.msra.mxu0 0.0
    %387 = vmatprep.subr.mxu0 0.0
    %388 = vmatpush1.msra.mxu0 0.0
    %389 = vmatprep.subr.mxu0 0.0
    %390 = vmatpush1.msra.mxu0 0.0
    %391 = vmatprep.subr.mxu0 0.0
    %392 = vmatpush1.msra.mxu0 0.0
    %393 = vmatprep.mubr.f32.mxu0 0.0
    %394 = vmatmul.mubr.f32.gmra.mrb[0].mxu0 %v221
    %v395 = vpop.f32.mrb[0].mxu0
    %v396 = vadd.f32 0.0, %v395
    %v397 = vpop.f32.mrb[0].mxu0
    %v398 = vadd.f32 0.0, %v397
    %399 = vmatprep.mubr.f32.mxu0 0.0
    %400 = vmatmul.mubr.f32.gmra.mrb[0].mxu0 %v224
    %v401 = vpop.f32.mrb[0].mxu0
    %v402 = vadd.f32 0.0, %v401
    %v403 = vpop.f32.mrb[0].mxu0
    %v404 = vadd.f32 0.0, %v403
    %405 = vmatprep.mubr.f32.mxu0 0.0
    %406 = vmatmul.mubr.f32.gmra.mrb[0].mxu0 %v227
    %v407 = vpop.f32.mrb[0].mxu0
    %v408 = vadd.f32 0.0, %v407
    %v409 = vpop.f32.mrb[0].mxu0
    %v410 = vadd.f32 0.0, %v409
    %411 = vmatprep.mubr.f32.mxu0 0.0
    %412 = vmatmul.mubr.f32.gmra.mrb[0].mxu0 %v230
    %v413 = vpop.f32.mrb[0].mxu0
    %v414 = vadd.f32 0.0, %v413
    %v415 = vpop.f32.mrb[0].mxu0
    %v416 = vadd.f32 0.0, %v415
    %417 = vdwg.mxu0
    %418 = vmatprep.subr.mxu0 %v62
    %419 = vmatpush1.msra.mxu0 %v61
    %420 = vmatprep.subr.mxu0 %v94
    %421 = vmatpush1.msra.mxu0 %v93
    %422 = vmatprep.subr.mxu0 %v126
    %423 = vmatpush1.msra.mxu0 %v125
    %424 = vmatprep.subr.mxu0 %v158
    %425 = vmatpush1.msra.mxu0 %v157
    %426 = vmatprep.subr.mxu0 %v243
    %427 = vmatpush1.msra.mxu0 %v240
    %428 = vmatprep.subr.mxu0 0.0
    %429 = vmatpush1.msra.mxu0 0.0
    %430 = vmatprep.subr.mxu0 0.0
    %431 = vmatpush1.msra.mxu0 0.0
    %432 = vmatprep.subr.mxu0 0.0
    %433 = vmatpush1.msra.mxu0 0.0
    %434 = vmatprep.subr.mxu0 0.0
    %435 = vmatpush1.msra.mxu0 0.0
    %436 = vmatprep.subr.mxu0 0.0
    %437 = vmatpush1.msra.mxu0 0.0
    %438 = vmatprep.subr.mxu0 0.0
    %439 = vmatpush1.msra.mxu0 0.0
    %440 = vmatprep.subr.mxu0 0.0
    %441 = vmatpush1.msra.mxu0 0.0
    %442 = vmatprep.subr.mxu0 0.0
    %443 = vmatpush1.msra.mxu0 0.0
    %444 = vmatprep.subr.mxu0 0.0
    %445 = vmatpush1.msra.mxu0 0.0
    %446 = vmatprep.subr.mxu0 0.0
    %447 = vmatpush1.msra.mxu0 0.0
    %448 = vmatprep.subr.mxu0 0.0
    %449 = vmatpush1.msra.mxu0 0.0
    %450 = vmatprep.subr.mxu0 0.0
    %451 = vmatpush1.msra.mxu0 0.0
    %452 = vmatprep.subr.mxu0 0.0
    %453 = vmatpush1.msra.mxu0 0.0
    %454 = vmatprep.subr.mxu0 0.0
    %455 = vmatpush1.msra.mxu0 0.0
    %456 = vmatprep.subr.mxu0 0.0
    %457 = vmatpush1.msra.mxu0 0.0
    %458 = vmatprep.subr.mxu0 0.0
    %459 = vmatpush1.msra.mxu0 0.0
    %460 = vmatprep.subr.mxu0 0.0
    %461 = vmatpush1.msra.mxu0 0.0
    %462 = vmatprep.subr.mxu0 0.0
    %463 = vmatpush1.msra.mxu0 0.0
    %464 = vmatprep.subr.mxu0 0.0
    %465 = vmatpush1.msra.mxu0 0.0
    %466 = vmatprep.subr.mxu0 0.0
    %467 = vmatpush1.msra.mxu0 0.0
    %468 = vmatprep.subr.mxu0 0.0
    %469 = vmatpush1.msra.mxu0 0.0
    %470 = vmatprep.subr.mxu0 0.0
    %471 = vmatpush1.msra.mxu0 0.0
    %472 = vmatprep.subr.mxu0 0.0
    %473 = vmatpush1.msra.mxu0 0.0
    %474 = vmatprep.subr.mxu0 0.0
    %475 = vmatpush1.msra.mxu0 0.0
    %476 = vmatprep.subr.mxu0 0.0
    %477 = vmatpush1.msra.mxu0 0.0
    %478 = vmatprep.subr.mxu0 0.0
    %479 = vmatpush1.msra.mxu0 0.0
    %480 = vmatprep.subr.mxu0 0.0
    %481 = vmatpush1.msra.mxu0 0.0
    %482 = vmatprep.mubr.f32.mxu0 0.0
    %483 = vmatmul.mubr.f32.gmra.mrb[0].mxu0 %v221
    %v484 = vpop.f32.mrb[0].mxu0
    %v485 = vadd.f32 0.0, %v484
    %v486 = vpop.f32.mrb[0].mxu0
    %v487 = vadd.f32 0.0, %v486
    %488 = vmatprep.mubr.f32.mxu0 0.0
    %489 = vmatmul.mubr.f32.gmra.mrb[0].mxu0 %v224
    %v490 = vpop.f32.mrb[0].mxu0
    %v491 = vadd.f32 0.0, %v490
    %v492 = vpop.f32.mrb[0].mxu0
    %v493 = vadd.f32 0.0, %v492
    %494 = vmatprep.mubr.f32.mxu0 0.0
    %495 = vmatmul.mubr.f32.gmra.mrb[0].mxu0 %v227
    %v496 = vpop.f32.mrb[0].mxu0
    %v497 = vadd.f32 0.0, %v496
    %v498 = vpop.f32.mrb[0].mxu0
    %v499 = vadd.f32 0.0, %v498
    %500 = vmatprep.mubr.f32.mxu0 0.0
    %501 = vmatmul.mubr.f32.gmra.mrb[0].mxu0 %v230
    %v502 = vpop.f32.mrb[0].mxu0
    %v503 = vadd.f32 0.0, %v502
    %v504 = vpop.f32.mrb[0].mxu0
    %v505 = vadd.f32 0.0, %v504
    %506 = vdwg.mxu0
    %507 = vmatprep.subr.mxu0 %v64
    %508 = vmatpush1.msra.mxu0 %v63
    %509 = vmatprep.subr.mxu0 %v96
    %510 = vmatpush1.msra.mxu0 %v95
    %511 = vmatprep.subr.mxu0 %v128
    %512 = vmatpush1.msra.mxu0 %v127
    %513 = vmatprep.subr.mxu0 %v160
    %514 = vmatpush1.msra.mxu0 %v159
    %515 = vmatprep.subr.mxu0 %v249
    %516 = vmatpush1.msra.mxu0 %v246
    %517 = vmatprep.subr.mxu0 0.0
    %518 = vmatpush1.msra.mxu0 0.0
    %519 = vmatprep.subr.mxu0 0.0
    %520 = vmatpush1.msra.mxu0 0.0
    %521 = vmatprep.subr.mxu0 0.0
    %522 = vmatpush1.msra.mxu0 0.0
    %523 = vmatprep.subr.mxu0 0.0
    %524 = vmatpush1.msra.mxu0 0.0
    %525 = vmatprep.subr.mxu0 0.0
    %526 = vmatpush1.msra.mxu0 0.0
    %527 = vmatprep.subr.mxu0 0.0
    %528 = vmatpush1.msra.mxu0 0.0
    %529 = vmatprep.subr.mxu0 0.0
    %530 = vmatpush1.msra.mxu0 0.0
    %531 = vmatprep.subr.mxu0 0.0
    %532 = vmatpush1.msra.mxu0 0.0
    %533 = vmatprep.subr.mxu0 0.0
    %534 = vmatpush1.msra.mxu0 0.0
    %535 = vmatprep.subr.mxu0 0.0
    %536 = vmatpush1.msra.mxu0 0.0
    %537 = vmatprep.subr.mxu0 0.0
    %538 = vmatpush1.msra.mxu0 0.0
    %539 = vmatprep.subr.mxu0 0.0
    %540 = vmatpush1.msra.mxu0 0.0
    %541 = vmatprep.subr.mxu0 0.0
    %542 = vmatpush1.msra.mxu0 0.0
    %543 = vmatprep.subr.mxu0 0.0
    %544 = vmatpush1.msra.mxu0 0.0
    %545 = vmatprep.subr.mxu0 0.0
    %546 = vmatpush1.msra.mxu0 0.0
    %547 = vmatprep.subr.mxu0 0.0
    %548 = vmatpush1.msra.mxu0 0.0
    %549 = vmatprep.subr.mxu0 0.0
    %550 = vmatpush1.msra.mxu0 0.0
    %551 = vmatprep.subr.mxu0 0.0
    %552 = vmatpush1.msra.mxu0 0.0
    %553 = vmatprep.subr.mxu0 0.0
    %554 = vmatpush1.msra.mxu0 0.0
    %555 = vmatprep.subr.mxu0 0.0
    %556 = vmatpush1.msra.mxu0 0.0
    %557 = vmatprep.subr.mxu0 0.0
    %558 = vmatpush1.msra.mxu0 0.0
    %559 = vmatprep.subr.mxu0 0.0
    %560 = vmatpush1.msra.mxu0 0.0
    %561 = vmatprep.subr.mxu0 0.0
    %562 = vmatpush1.msra.mxu0 0.0
    %563 = vmatprep.subr.mxu0 0.0
    %564 = vmatpush1.msra.mxu0 0.0
    %565 = vmatprep.subr.mxu0 0.0
    %566 = vmatpush1.msra.mxu0 0.0
    %567 = vmatprep.subr.mxu0 0.0
    %568 = vmatpush1.msra.mxu0 0.0
    %569 = vmatprep.subr.mxu0 0.0
    %570 = vmatpush1.msra.mxu0 0.0
    %571 = vmatprep.mubr.f32.mxu0 0.0
    %572 = vmatmul.mubr.f32.gmra.mrb[0].mxu0 %v221
    %v573 = vpop.f32.mrb[0].mxu0
    %v574 = vadd.f32 0.0, %v573
    %v575 = vpop.f32.mrb[0].mxu0
    %v576 = vadd.f32 0.0, %v575
    %577 = vmatprep.mubr.f32.mxu0 0.0
    %578 = vmatmul.mubr.f32.gmra.mrb[0].mxu0 %v224
    %v579 = vpop.f32.mrb[0].mxu0
    %v580 = vadd.f32 0.0, %v579
    %v581 = vpop.f32.mrb[0].mxu0
    %v582 = vadd.f32 0.0, %v581
    %583 = vmatprep.mubr.f32.mxu0 0.0
    %584 = vmatmul.mubr.f32.gmra.mrb[0].mxu0 %v227
    %v585 = vpop.f32.mrb[0].mxu0
    %v586 = vadd.f32 0.0, %v585
    %v587 = vpop.f32.mrb[0].mxu0
    %v588 = vadd.f32 0.0, %v587
    %589 = vmatprep.mubr.f32.mxu0 0.0
    %590 = vmatmul.mubr.f32.gmra.mrb[0].mxu0 %v230
    %v591 = vpop.f32.mrb[0].mxu0
    %v592 = vadd.f32 0.0, %v591
    %v593 = vpop.f32.mrb[0].mxu0
    %v594 = vadd.f32 0.0, %v593
    %595 = vdwg.mxu0
    %596 = vmatprep.subr.mxu0 %v66
    %597 = vmatpush1.msra.mxu0 %v65
    %598 = vmatprep.subr.mxu0 %v98
    %599 = vmatpush1.msra.mxu0 %v97
    %600 = vmatprep.subr.mxu0 %v130
    %601 = vmatpush1.msra.mxu0 %v129
    %602 = vmatprep.subr.mxu0 %v162
    %603 = vmatpush1.msra.mxu0 %v161
    %604 = vmatprep.subr.mxu0 %v255
    %605 = vmatpush1.msra.mxu0 %v252
    %606 = vmatprep.subr.mxu0 0.0
    %607 = vmatpush1.msra.mxu0 0.0
    %608 = vmatprep.subr.mxu0 0.0
    %609 = vmatpush1.msra.mxu0 0.0
    %610 = vmatprep.subr.mxu0 0.0
    %611 = vmatpush1.msra.mxu0 0.0
    %612 = vmatprep.subr.mxu0 0.0
    %613 = vmatpush1.msra.mxu0 0.0
    %614 = vmatprep.subr.mxu0 0.0
    %615 = vmatpush1.msra.mxu0 0.0
    %616 = vmatprep.subr.mxu0 0.0
    %617 = vmatpush1.msra.mxu0 0.0
    %618 = vmatprep.subr.mxu0 0.0
    %619 = vmatpush1.msra.mxu0 0.0
    %620 = vmatprep.subr.mxu0 0.0
    %621 = vmatpush1.msra.mxu0 0.0
    %622 = vmatprep.subr.mxu0 0.0
    %623 = vmatpush1.msra.mxu0 0.0
    %624 = vmatprep.subr.mxu0 0.0
    %625 = vmatpush1.msra.mxu0 0.0
    %626 = vmatprep.subr.mxu0 0.0
    %627 = vmatpush1.msra.mxu0 0.0
    %628 = vmatprep.subr.mxu0 0.0
    %629 = vmatpush1.msra.mxu0 0.0
    %630 = vmatprep.subr.mxu0 0.0
    %631 = vmatpush1.msra.mxu0 0.0
    %632 = vmatprep.subr.mxu0 0.0
    %633 = vmatpush1.msra.mxu0 0.0
    %634 = vmatprep.subr.mxu0 0.0
    %635 = vmatpush1.msra.mxu0 0.0
    %636 = vmatprep.subr.mxu0 0.0
    %637 = vmatpush1.msra.mxu0 0.0
    %638 = vmatprep.subr.mxu0 0.0
    %639 = vmatpush1.msra.mxu0 0.0
    %640 = vmatprep.subr.mxu0 0.0
    %641 = vmatpush1.msra.mxu0 0.0
    %642 = vmatprep.subr.mxu0 0.0
    %643 = vmatpush1.msra.mxu0 0.0
    %644 = vmatprep.subr.mxu0 0.0
    %645 = vmatpush1.msra.mxu0 0.0
    %646 = vmatprep.subr.mxu0 0.0
    %647 = vmatpush1.msra.mxu0 0.0
    %648 = vmatprep.subr.mxu0 0.0
    %649 = vmatpush1.msra.mxu0 0.0
    %650 = vmatprep.subr.mxu0 0.0
    %651 = vmatpush1.msra.mxu0 0.0
    %652 = vmatprep.subr.mxu0 0.0
    %653 = vmatpush1.msra.mxu0 0.0
    %654 = vmatprep.subr.mxu0 0.0
    %655 = vmatpush1.msra.mxu0 0.0
    %656 = vmatprep.subr.mxu0 0.0
    %657 = vmatpush1.msra.mxu0 0.0
    %658 = vmatprep.subr.mxu0 0.0
    %659 = vmatpush1.msra.mxu0 0.0
    %660 = vmatprep.mubr.f32.mxu0 0.0
    %661 = vmatmul.mubr.f32.gmra.mrb[0].mxu0 %v221
    %v662 = vpop.f32.mrb[0].mxu0
    %v663 = vadd.f32 0.0, %v662
    %v664 = vpop.f32.mrb[0].mxu0
    %v665 = vadd.f32 0.0, %v664
    %666 = vmatprep.mubr.f32.mxu0 0.0
    %667 = vmatmul.mubr.f32.gmra.mrb[0].mxu0 %v224
    %v668 = vpop.f32.mrb[0].mxu0
    %v669 = vadd.f32 0.0, %v668
    %v670 = vpop.f32.mrb[0].mxu0
    %v671 = vadd.f32 0.0, %v670
    %672 = vmatprep.mubr.f32.mxu0 0.0
    %673 = vmatmul.mubr.f32.gmra.mrb[0].mxu0 %v227
    %v674 = vpop.f32.mrb[0].mxu0
    %v675 = vadd.f32 0.0, %v674
    %v676 = vpop.f32.mrb[0].mxu0
    %v677 = vadd.f32 0.0, %v676
    %678 = vmatprep.mubr.f32.mxu0 0.0
    %679 = vmatmul.mubr.f32.gmra.mrb[0].mxu0 %v230
    %v680 = vpop.f32.mrb[0].mxu0
    %v681 = vadd.f32 0.0, %v680
    %v682 = vpop.f32.mrb[0].mxu0
    %v683 = vadd.f32 0.0, %v682
    %684 = vdwg.mxu0
    %685 = vmatprep.subr.mxu0 %v68
    %686 = vmatpush1.msra.mxu0 %v67
    %687 = vmatprep.subr.mxu0 %v100
    %688 = vmatpush1.msra.mxu0 %v99
    %689 = vmatprep.subr.mxu0 %v132
    %690 = vmatpush1.msra.mxu0 %v131
    %691 = vmatprep.subr.mxu0 %v164
    %692 = vmatpush1.msra.mxu0 %v163
    %693 = vmatprep.subr.mxu0 %v261
    %694 = vmatpush1.msra.mxu0 %v258
    %695 = vmatprep.subr.mxu0 0.0
    %696 = vmatpush1.msra.mxu0 0.0
    %697 = vmatprep.subr.mxu0 0.0
    %698 = vmatpush1.msra.mxu0 0.0
    %699 = vmatprep.subr.mxu0 0.0
    %700 = vmatpush1.msra.mxu0 0.0
    %701 = vmatprep.subr.mxu0 0.0
    %702 = vmatpush1.msra.mxu0 0.0
    %703 = vmatprep.subr.mxu0 0.0
    %704 = vmatpush1.msra.mxu0 0.0
    %705 = vmatprep.subr.mxu0 0.0
    %706 = vmatpush1.msra.mxu0 0.0
    %707 = vmatprep.subr.mxu0 0.0
    %708 = vmatpush1.msra.mxu0 0.0
    %709 = vmatprep.subr.mxu0 0.0
    %710 = vmatpush1.msra.mxu0 0.0
    %711 = vmatprep.subr.mxu0 0.0
    %712 = vmatpush1.msra.mxu0 0.0
    %713 = vmatprep.subr.mxu0 0.0
    %714 = vmatpush1.msra.mxu0 0.0
    %715 = vmatprep.subr.mxu0 0.0
    %716 = vmatpush1.msra.mxu0 0.0
    %717 = vmatprep.subr.mxu0 0.0
    %718 = vmatpush1.msra.mxu0 0.0
    %719 = vmatprep.subr.mxu0 0.0
    %720 = vmatpush1.msra.mxu0 0.0
    %721 = vmatprep.subr.mxu0 0.0
    %722 = vmatpush1.msra.mxu0 0.0
    %723 = vmatprep.subr.mxu0 0.0
    %724 = vmatpush1.msra.mxu0 0.0
    %725 = vmatprep.subr.mxu0 0.0
    %726 = vmatpush1.msra.mxu0 0.0
    %727 = vmatprep.subr.mxu0 0.0
    %728 = vmatpush1.msra.mxu0 0.0
    %729 = vmatprep.subr.mxu0 0.0
    %730 = vmatpush1.msra.mxu0 0.0
    %731 = vmatprep.subr.mxu0 0.0
    %732 = vmatpush1.msra.mxu0 0.0
    %733 = vmatprep.subr.mxu0 0.0
    %734 = vmatpush1.msra.mxu0 0.0
    %735 = vmatprep.subr.mxu0 0.0
    %736 = vmatpush1.msra.mxu0 0.0
    %737 = vmatprep.subr.mxu0 0.0
    %738 = vmatpush1.msra.mxu0 0.0
    %739 = vmatprep.subr.mxu0 0.0
    %740 = vmatpush1.msra.mxu0 0.0
    %741 = vmatprep.subr.mxu0 0.0
    %742 = vmatpush1.msra.mxu0 0.0
    %743 = vmatprep.subr.mxu0 0.0
    %744 = vmatpush1.msra.mxu0 0.0
    %745 = vmatprep.subr.mxu0 0.0
    %746 = vmatpush1.msra.mxu0 0.0
    %747 = vmatprep.subr.mxu0 0.0
    %748 = vmatpush1.msra.mxu0 0.0
    %749 = vmatprep.mubr.f32.mxu0 0.0
    %750 = vmatmul.mubr.f32.gmra.mrb[0].mxu0 %v221
    %v751 = vpop.f32.mrb[0].mxu0
    %v752 = vadd.f32 0.0, %v751
    %v753 = vpop.f32.mrb[0].mxu0
    %v754 = vadd.f32 0.0, %v753
    %755 = vmatprep.mubr.f32.mxu0 0.0
    %756 = vmatmul.mubr.f32.gmra.mrb[0].mxu0 %v224
    %v757 = vpop.f32.mrb[0].mxu0
    %v758 = vadd.f32 0.0, %v757
    %v759 = vpop.f32.mrb[0].mxu0
    %v760 = vadd.f32 0.0, %v759
    %761 = vmatprep.mubr.f32.mxu0 0.0
    %762 = vmatmul.mubr.f32.gmra.mrb[0].mxu0 %v227
    %v763 = vpop.f32.mrb[0].mxu0
    %v764 = vadd.f32 0.0, %v763
    %v765 = vpop.f32.mrb[0].mxu0
    %v766 = vadd.f32 0.0, %v765
    %767 = vmatprep.mubr.f32.mxu0 0.0
    %768 = vmatmul.mubr.f32.gmra.mrb[0].mxu0 %v230
    %v769 = vpop.f32.mrb[0].mxu0
    %v770 = vadd.f32 0.0, %v769
    %v771 = vpop.f32.mrb[0].mxu0
    %v772 = vadd.f32 0.0, %v771
    %773 = vdwg.mxu0
    %774 = vmatprep.subr.mxu0 %v70
    %775 = vmatpush1.msra.mxu0 %v69
    %776 = vmatprep.subr.mxu0 %v102
    %777 = vmatpush1.msra.mxu0 %v101
    %778 = vmatprep.subr.mxu0 %v134
    %779 = vmatpush1.msra.mxu0 %v133
    %780 = vmatprep.subr.mxu0 %v166
    %781 = vmatpush1.msra.mxu0 %v165
    %782 = vmatprep.subr.mxu0 %v267
    %783 = vmatpush1.msra.mxu0 %v264
    %784 = vmatprep.subr.mxu0 0.0
    %785 = vmatpush1.msra.mxu0 0.0
    %786 = vmatprep.subr.mxu0 0.0
    %787 = vmatpush1.msra.mxu0 0.0
    %788 = vmatprep.subr.mxu0 0.0
    %789 = vmatpush1.msra.mxu0 0.0
    %790 = vmatprep.subr.mxu0 0.0
    %791 = vmatpush1.msra.mxu0 0.0
    %792 = vmatprep.subr.mxu0 0.0
    %793 = vmatpush1.msra.mxu0 0.0
    %794 = vmatprep.subr.mxu0 0.0
    %795 = vmatpush1.msra.mxu0 0.0
    %796 = vmatprep.subr.mxu0 0.0
    %797 = vmatpush1.msra.mxu0 0.0
    %798 = vmatprep.subr.mxu0 0.0
    %799 = vmatpush1.msra.mxu0 0.0
    %800 = vmatprep.subr.mxu0 0.0
    %801 = vmatpush1.msra.mxu0 0.0
    %802 = vmatprep.subr.mxu0 0.0
    %803 = vmatpush1.msra.mxu0 0.0
    %804 = vmatprep.subr.mxu0 0.0
    %805 = vmatpush1.msra.mxu0 0.0
    %806 = vmatprep.subr.mxu0 0.0
    %807 = vmatpush1.msra.mxu0 0.0
    %808 = vmatprep.subr.mxu0 0.0
    %809 = vmatpush1.msra.mxu0 0.0
    %810 = vmatprep.subr.mxu0 0.0
    %811 = vmatpush1.msra.mxu0 0.0
    %812 = vmatprep.subr.mxu0 0.0
    %813 = vmatpush1.msra.mxu0 0.0
    %814 = vmatprep.subr.mxu0 0.0
    %815 = vmatpush1.msra.mxu0 0.0
    %816 = vmatprep.subr.mxu0 0.0
    %817 = vmatpush1.msra.mxu0 0.0
    %818 = vmatprep.subr.mxu0 0.0
    %819 = vmatpush1.msra.mxu0 0.0
    %820 = vmatprep.subr.mxu0 0.0
    %821 = vmatpush1.msra.mxu0 0.0
    %822 = vmatprep.subr.mxu0 0.0
    %823 = vmatpush1.msra.mxu0 0.0
    %824 = vmatprep.subr.mxu0 0.0
    %825 = vmatpush1.msra.mxu0 0.0
    %826 = vmatprep.subr.mxu0 0.0
    %827 = vmatpush1.msra.mxu0 0.0
    %828 = vmatprep.subr.mxu0 0.0
    %829 = vmatpush1.msra.mxu0 0.0
    %830 = vmatprep.subr.mxu0 0.0
    %831 = vmatpush1.msra.mxu0 0.0
    %832 = vmatprep.subr.mxu0 0.0
    %833 = vmatpush1.msra.mxu0 0.0
    %834 = vmatprep.subr.mxu0 0.0
    %835 = vmatpush1.msra.mxu0 0.0
    %836 = vmatprep.subr.mxu0 0.0
    %837 = vmatpush1.msra.mxu0 0.0
    %838 = vmatprep.mubr.f32.mxu0 0.0
    %839 = vmatmul.mubr.f32.gmra.mrb[0].mxu0 %v221
    %v840 = vpop.f32.mrb[0].mxu0
    %v841 = vadd.f32 0.0, %v840
    %v842 = vpop.f32.mrb[0].mxu0
    %v843 = vadd.f32 0.0, %v842
    %844 = vmatprep.mubr.f32.mxu0 0.0
    %845 = vmatmul.mubr.f32.gmra.mrb[0].mxu0 %v224
    %v846 = vpop.f32.mrb[0].mxu0
    %v847 = vadd.f32 0.0, %v846
    %v848 = vpop.f32.mrb[0].mxu0
    %v849 = vadd.f32 0.0, %v848
    %850 = vmatprep.mubr.f32.mxu0 0.0
    %851 = vmatmul.mubr.f32.gmra.mrb[0].mxu0 %v227
    %v852 = vpop.f32.mrb[0].mxu0
    %v853 = vadd.f32 0.0, %v852
    %v854 = vpop.f32.mrb[0].mxu0
    %v855 = vadd.f32 0.0, %v854
    %856 = vmatprep.mubr.f32.mxu0 0.0
    %857 = vmatmul.mubr.f32.gmra.mrb[0].mxu0 %v230
    %v858 = vpop.f32.mrb[0].mxu0
    %v859 = vadd.f32 0.0, %v858
    %v860 = vpop.f32.mrb[0].mxu0
    %v861 = vadd.f32 0.0, %v860
    %862 = vdwg.mxu0
    %863 = vmatprep.subr.mxu0 %v72
    %864 = vmatpush1.msra.mxu0 %v71
    %865 = vmatprep.subr.mxu0 %v104
    %866 = vmatpush1.msra.mxu0 %v103
    %867 = vmatprep.subr.mxu0 %v136
    %868 = vmatpush1.msra.mxu0 %v135
    %869 = vmatprep.subr.mxu0 %v168
    %870 = vmatpush1.msra.mxu0 %v167
    %871 = vmatprep.subr.mxu0 %v273
    %872 = vmatpush1.msra.mxu0 %v270
    %873 = vmatprep.subr.mxu0 0.0
    %874 = vmatpush1.msra.mxu0 0.0
    %875 = vmatprep.subr.mxu0 0.0
    %876 = vmatpush1.msra.mxu0 0.0
    %877 = vmatprep.subr.mxu0 0.0
    %878 = vmatpush1.msra.mxu0 0.0
    %879 = vmatprep.subr.mxu0 0.0
    %880 = vmatpush1.msra.mxu0 0.0
    %881 = vmatprep.subr.mxu0 0.0
    %882 = vmatpush1.msra.mxu0 0.0
    %883 = vmatprep.subr.mxu0 0.0
    %884 = vmatpush1.msra.mxu0 0.0
    %885 = vmatprep.subr.mxu0 0.0
    %886 = vmatpush1.msra.mxu0 0.0
    %887 = vmatprep.subr.mxu0 0.0
    %888 = vmatpush1.msra.mxu0 0.0
    %889 = vmatprep.subr.mxu0 0.0
    %890 = vmatpush1.msra.mxu0 0.0
    %891 = vmatprep.subr.mxu0 0.0
    %892 = vmatpush1.msra.mxu0 0.0
    %893 = vmatprep.subr.mxu0 0.0
    %894 = vmatpush1.msra.mxu0 0.0
    %895 = vmatprep.subr.mxu0 0.0
    %896 = vmatpush1.msra.mxu0 0.0
    %897 = vmatprep.subr.mxu0 0.0
    %898 = vmatpush1.msra.mxu0 0.0
    %899 = vmatprep.subr.mxu0 0.0
    %900 = vmatpush1.msra.mxu0 0.0
    %901 = vmatprep.subr.mxu0 0.0
    %902 = vmatpush1.msra.mxu0 0.0
    %903 = vmatprep.subr.mxu0 0.0
    %904 = vmatpush1.msra.mxu0 0.0
    %905 = vmatprep.subr.mxu0 0.0
    %906 = vmatpush1.msra.mxu0 0.0
    %907 = vmatprep.subr.mxu0 0.0
    %908 = vmatpush1.msra.mxu0 0.0
    %909 = vmatprep.subr.mxu0 0.0
    %910 = vmatpush1.msra.mxu0 0.0
    %911 = vmatprep.subr.mxu0 0.0
    %912 = vmatpush1.msra.mxu0 0.0
    %913 = vmatprep.subr.mxu0 0.0
    %914 = vmatpush1.msra.mxu0 0.0
    %915 = vmatprep.subr.mxu0 0.0
    %916 = vmatpush1.msra.mxu0 0.0
    %917 = vmatprep.subr.mxu0 0.0
    %918 = vmatpush1.msra.mxu0 0.0
    %919 = vmatprep.subr.mxu0 0.0
    %920 = vmatpush1.msra.mxu0 0.0
    %921 = vmatprep.subr.mxu0 0.0
    %922 = vmatpush1.msra.mxu0 0.0
    %923 = vmatprep.subr.mxu0 0.0
    %924 = vmatpush1.msra.mxu0 0.0
    %925 = vmatprep.subr.mxu0 0.0
    %926 = vmatpush1.msra.mxu0 0.0
    %927 = vmatprep.mubr.f32.mxu0 0.0
    %928 = vmatmul.mubr.f32.gmra.mrb[0].mxu0 %v221
    %v929 = vpop.f32.mrb[0].mxu0
    %v930 = vadd.f32 0.0, %v929
    %v931 = vpop.f32.mrb[0].mxu0
    %v932 = vadd.f32 0.0, %v931
    %933 = vmatprep.mubr.f32.mxu0 0.0
    %934 = vmatmul.mubr.f32.gmra.mrb[0].mxu0 %v224
    %v935 = vpop.f32.mrb[0].mxu0
    %v936 = vadd.f32 0.0, %v935
    %v937 = vpop.f32.mrb[0].mxu0
    %v938 = vadd.f32 0.0, %v937
    %939 = vmatprep.mubr.f32.mxu0 0.0
    %940 = vmatmul.mubr.f32.gmra.mrb[0].mxu0 %v227
    %v941 = vpop.f32.mrb[0].mxu0
    %v942 = vadd.f32 0.0, %v941
    %v943 = vpop.f32.mrb[0].mxu0
    %v944 = vadd.f32 0.0, %v943
    %945 = vmatprep.mubr.f32.mxu0 0.0
    %946 = vmatmul.mubr.f32.gmra.mrb[0].mxu0 %v230
    %v947 = vpop.f32.mrb[0].mxu0
    %v948 = vadd.f32 0.0, %v947
    %v949 = vpop.f32.mrb[0].mxu0
    %v950 = vadd.f32 0.0, %v949
    %951 = vdwg.mxu0
    %952 = vmatprep.subr.mxu0 %v74
    %953 = vmatpush1.msra.mxu0 %v73
    %954 = vmatprep.subr.mxu0 %v106
    %955 = vmatpush1.msra.mxu0 %v105
    %956 = vmatprep.subr.mxu0 %v138
    %957 = vmatpush1.msra.mxu0 %v137
    %958 = vmatprep.subr.mxu0 %v170
    %959 = vmatpush1.msra.mxu0 %v169
    %960 = vmatprep.subr.mxu0 %v279
    %961 = vmatpush1.msra.mxu0 %v276
    %962 = vmatprep.subr.mxu0 0.0
    %963 = vmatpush1.msra.mxu0 0.0
    %964 = vmatprep.subr.mxu0 0.0
    %965 = vmatpush1.msra.mxu0 0.0
    %966 = vmatprep.subr.mxu0 0.0
    %967 = vmatpush1.msra.mxu0 0.0
    %968 = vmatprep.subr.mxu0 0.0
    %969 = vmatpush1.msra.mxu0 0.0
    %970 = vmatprep.subr.mxu0 0.0
    %971 = vmatpush1.msra.mxu0 0.0
    %972 = vmatprep.subr.mxu0 0.0
    %973 = vmatpush1.msra.mxu0 0.0
    %974 = vmatprep.subr.mxu0 0.0
    %975 = vmatpush1.msra.mxu0 0.0
    %976 = vmatprep.subr.mxu0 0.0
    %977 = vmatpush1.msra.mxu0 0.0
    %978 = vmatprep.subr.mxu0 0.0
    %979 = vmatpush1.msra.mxu0 0.0
    %980 = vmatprep.subr.mxu0 0.0
    %981 = vmatpush1.msra.mxu0 0.0
    %982 = vmatprep.subr.mxu0 0.0
    %983 = vmatpush1.msra.mxu0 0.0
    %984 = vmatprep.subr.mxu0 0.0
    %985 = vmatpush1.msra.mxu0 0.0
    %986 = vmatprep.subr.mxu0 0.0
    %987 = vmatpush1.msra.mxu0 0.0
    %988 = vmatprep.subr.mxu0 0.0
    %989 = vmatpush1.msra.mxu0 0.0
    %990 = vmatprep.subr.mxu0 0.0
    %991 = vmatpush1.msra.mxu0 0.0
    %992 = vmatprep.subr.mxu0 0.0
    %993 = vmatpush1.msra.mxu0 0.0
    %994 = vmatprep.subr.mxu0 0.0
    %995 = vmatpush1.msra.mxu0 0.0
    %996 = vmatprep.subr.mxu0 0.0
    %997 = vmatpush1.msra.mxu0 0.0
    %998 = vmatprep.subr.mxu0 0.0
    %999 = vmatpush1.msra.mxu0 0.0
    %1000 = vmatprep.subr.mxu0 0.0
    %1001 = vmatpush1.msra.mxu0 0.0
    %1002 = vmatprep.subr.mxu0 0.0
    %1003 = vmatpush1.msra.mxu0 0.0
    %1004 = vmatprep.subr.mxu0 0.0
    %1005 = vmatpush1.msra.mxu0 0.0
    %1006 = vmatprep.subr.mxu0 0.0
    %1007 = vmatpush1.msra.mxu0 0.0
    %1008 = vmatprep.subr.mxu0 0.0
    %1009 = vmatpush1.msra.mxu0 0.0
    %1010 = vmatprep.subr.mxu0 0.0
    %1011 = vmatpush1.msra.mxu0 0.0
    %1012 = vmatprep.subr.mxu0 0.0
    %1013 = vmatpush1.msra.mxu0 0.0
    %1014 = vmatprep.subr.mxu0 0.0
    %1015 = vmatpush1.msra.mxu0 0.0
    %1016 = vmatprep.mubr.f32.mxu0 0.0
    %1017 = vmatmul.mubr.f32.gmra.mrb[0].mxu0 %v221
    %v1018 = vpop.f32.mrb[0].mxu0
    %v1019 = vadd.f32 0.0, %v1018
    %v1020 = vpop.f32.mrb[0].mxu0
    %v1021 = vadd.f32 0.0, %v1020
    %1022 = vmatprep.mubr.f32.mxu0 0.0
    %1023 = vmatmul.mubr.f32.gmra.mrb[0].mxu0 %v224
    %v1024 = vpop.f32.mrb[0].mxu0
    %v1025 = vadd.f32 0.0, %v1024
    %v1026 = vpop.f32.mrb[0].mxu0
    %v1027 = vadd.f32 0.0, %v1026
    %1028 = vmatprep.mubr.f32.mxu0 0.0
    %1029 = vmatmul.mubr.f32.gmra.mrb[0].mxu0 %v227
    %v1030 = vpop.f32.mrb[0].mxu0
    %v1031 = vadd.f32 0.0, %v1030
    %v1032 = vpop.f32.mrb[0].mxu0
    %v1033 = vadd.f32 0.0, %v1032
    %1034 = vmatprep.mubr.f32.mxu0 0.0
    %1035 = vmatmul.mubr.f32.gmra.mrb[0].mxu0 %v230
    %v1036 = vpop.f32.mrb[0].mxu0
    %v1037 = vadd.f32 0.0, %v1036
    %v1038 = vpop.f32.mrb[0].mxu0
    %v1039 = vadd.f32 0.0, %v1038
    %1040 = vdwg.mxu0
    %1041 = vmatprep.subr.mxu0 %v76
    %1042 = vmatpush1.msra.mxu0 %v75
    %1043 = vmatprep.subr.mxu0 %v108
    %1044 = vmatpush1.msra.mxu0 %v107
    %1045 = vmatprep.subr.mxu0 %v140
    %1046 = vmatpush1.msra.mxu0 %v139
    %1047 = vmatprep.subr.mxu0 %v172
    %1048 = vmatpush1.msra.mxu0 %v171
    %1049 = vmatprep.subr.mxu0 %v285
    %1050 = vmatpush1.msra.mxu0 %v282
    %1051 = vmatprep.subr.mxu0 0.0
    %1052 = vmatpush1.msra.mxu0 0.0
    %1053 = vmatprep.subr.mxu0 0.0
    %1054 = vmatpush1.msra.mxu0 0.0
    %1055 = vmatprep.subr.mxu0 0.0
    %1056 = vmatpush1.msra.mxu0 0.0
    %1057 = vmatprep.subr.mxu0 0.0
    %1058 = vmatpush1.msra.mxu0 0.0
    %1059 = vmatprep.subr.mxu0 0.0
    %1060 = vmatpush1.msra.mxu0 0.0
    %1061 = vmatprep.subr.mxu0 0.0
    %1062 = vmatpush1.msra.mxu0 0.0
    %1063 = vmatprep.subr.mxu0 0.0
    %1064 = vmatpush1.msra.mxu0 0.0
    %1065 = vmatprep.subr.mxu0 0.0
    %1066 = vmatpush1.msra.mxu0 0.0
    %1067 = vmatprep.subr.mxu0 0.0
    %1068 = vmatpush1.msra.mxu0 0.0
    %1069 = vmatprep.subr.mxu0 0.0
    %1070 = vmatpush1.msra.mxu0 0.0
    %1071 = vmatprep.subr.mxu0 0.0
    %1072 = vmatpush1.msra.mxu0 0.0
    %1073 = vmatprep.subr.mxu0 0.0
    %1074 = vmatpush1.msra.mxu0 0.0
    %1075 = vmatprep.subr.mxu0 0.0
    %1076 = vmatpush1.msra.mxu0 0.0
    %1077 = vmatprep.subr.mxu0 0.0
    %1078 = vmatpush1.msra.mxu0 0.0
    %1079 = vmatprep.subr.mxu0 0.0
    %1080 = vmatpush1.msra.mxu0 0.0
    %1081 = vmatprep.subr.mxu0 0.0
    %1082 = vmatpush1.msra.mxu0 0.0
    %1083 = vmatprep.subr.mxu0 0.0
    %1084 = vmatpush1.msra.mxu0 0.0
    %1085 = vmatprep.subr.mxu0 0.0
    %1086 = vmatpush1.msra.mxu0 0.0
    %1087 = vmatprep.subr.mxu0 0.0
    %1088 = vmatpush1.msra.mxu0 0.0
    %1089 = vmatprep.subr.mxu0 0.0
    %1090 = vmatpush1.msra.mxu0 0.0
    %1091 = vmatprep.subr.mxu0 0.0
    %1092 = vmatpush1.msra.mxu0 0.0
    %1093 = vmatprep.subr.mxu0 0.0
    %1094 = vmatpush1.msra.mxu0 0.0
    %1095 = vmatprep.subr.mxu0 0.0
    %1096 = vmatpush1.msra.mxu0 0.0
    %1097 = vmatprep.subr.mxu0 0.0
    %1098 = vmatpush1.msra.mxu0 0.0
    %1099 = vmatprep.subr.mxu0 0.0
    %1100 = vmatpush1.msra.mxu0 0.0
    %1101 = vmatprep.subr.mxu0 0.0
    %1102 = vmatpush1.msra.mxu0 0.0
    %1103 = vmatprep.subr.mxu0 0.0
    %1104 = vmatpush1.msra.mxu0 0.0
    %1105 = vmatprep.mubr.f32.mxu0 0.0
    %1106 = vmatmul.mubr.f32.gmra.mrb[0].mxu0 %v221
    %v1107 = vpop.f32.mrb[0].mxu0
    %v1108 = vadd.f32 0.0, %v1107
    %v1109 = vpop.f32.mrb[0].mxu0
    %v1110 = vadd.f32 0.0, %v1109
    %1111 = vmatprep.mubr.f32.mxu0 0.0
    %1112 = vmatmul.mubr.f32.gmra.mrb[0].mxu0 %v224
    %v1113 = vpop.f32.mrb[0].mxu0
    %v1114 = vadd.f32 0.0, %v1113
    %v1115 = vpop.f32.mrb[0].mxu0
    %v1116 = vadd.f32 0.0, %v1115
    %1117 = vmatprep.mubr.f32.mxu0 0.0
    %1118 = vmatmul.mubr.f32.gmra.mrb[0].mxu0 %v227
    %v1119 = vpop.f32.mrb[0].mxu0
    %v1120 = vadd.f32 0.0, %v1119
    %v1121 = vpop.f32.mrb[0].mxu0
    %v1122 = vadd.f32 0.0, %v1121
    %1123 = vmatprep.mubr.f32.mxu0 0.0
    %1124 = vmatmul.mubr.f32.gmra.mrb[0].mxu0 %v230
    %v1125 = vpop.f32.mrb[0].mxu0
    %v1126 = vadd.f32 0.0, %v1125
    %v1127 = vpop.f32.mrb[0].mxu0
    %v1128 = vadd.f32 0.0, %v1127
    %1129 = vdwg.mxu0
    %1130 = vmatprep.subr.mxu0 %v78
    %1131 = vmatpush1.msra.mxu0 %v77
    %1132 = vmatprep.subr.mxu0 %v110
    %1133 = vmatpush1.msra.mxu0 %v109
    %1134 = vmatprep.subr.mxu0 %v142
    %1135 = vmatpush1.msra.mxu0 %v141
    %1136 = vmatprep.subr.mxu0 %v174
    %1137 = vmatpush1.msra.mxu0 %v173
    %1138 = vmatprep.subr.mxu0 %v291
    %1139 = vmatpush1.msra.mxu0 %v288
    %1140 = vmatprep.subr.mxu0 0.0
    %1141 = vmatpush1.msra.mxu0 0.0
    %1142 = vmatprep.subr.mxu0 0.0
    %1143 = vmatpush1.msra.mxu0 0.0
    %1144 = vmatprep.subr.mxu0 0.0
    %1145 = vmatpush1.msra.mxu0 0.0
    %1146 = vmatprep.subr.mxu0 0.0
    %1147 = vmatpush1.msra.mxu0 0.0
    %1148 = vmatprep.subr.mxu0 0.0
    %1149 = vmatpush1.msra.mxu0 0.0
    %1150 = vmatprep.subr.mxu0 0.0
    %1151 = vmatpush1.msra.mxu0 0.0
    %1152 = vmatprep.subr.mxu0 0.0
    %1153 = vmatpush1.msra.mxu0 0.0
    %1154 = vmatprep.subr.mxu0 0.0
    %1155 = vmatpush1.msra.mxu0 0.0
    %1156 = vmatprep.subr.mxu0 0.0
    %1157 = vmatpush1.msra.mxu0 0.0
    %1158 = vmatprep.subr.mxu0 0.0
    %1159 = vmatpush1.msra.mxu0 0.0
    %1160 = vmatprep.subr.mxu0 0.0
    %1161 = vmatpush1.msra.mxu0 0.0
    %1162 = vmatprep.subr.mxu0 0.0
    %1163 = vmatpush1.msra.mxu0 0.0
    %1164 = vmatprep.subr.mxu0 0.0
    %1165 = vmatpush1.msra.mxu0 0.0
    %1166 = vmatprep.subr.mxu0 0.0
    %1167 = vmatpush1.msra.mxu0 0.0
    %1168 = vmatprep.subr.mxu0 0.0
    %1169 = vmatpush1.msra.mxu0 0.0
    %1170 = vmatprep.subr.mxu0 0.0
    %1171 = vmatpush1.msra.mxu0 0.0
    %1172 = vmatprep.subr.mxu0 0.0
    %1173 = vmatpush1.msra.mxu0 0.0
    %1174 = vmatprep.subr.mxu0 0.0
    %1175 = vmatpush1.msra.mxu0 0.0
    %1176 = vmatprep.subr.mxu0 0.0
    %1177 = vmatpush1.msra.mxu0 0.0
    %1178 = vmatprep.subr.mxu0 0.0
    %1179 = vmatpush1.msra.mxu0 0.0
    %1180 = vmatprep.subr.mxu0 0.0
    %1181 = vmatpush1.msra.mxu0 0.0
    %1182 = vmatprep.subr.mxu0 0.0
    %1183 = vmatpush1.msra.mxu0 0.0
    %1184 = vmatprep.subr.mxu0 0.0
    %1185 = vmatpush1.msra.mxu0 0.0
    %1186 = vmatprep.subr.mxu0 0.0
    %1187 = vmatpush1.msra.mxu0 0.0
    %1188 = vmatprep.subr.mxu0 0.0
    %1189 = vmatpush1.msra.mxu0 0.0
    %1190 = vmatprep.subr.mxu0 0.0
    %1191 = vmatpush1.msra.mxu0 0.0
    %1192 = vmatprep.subr.mxu0 0.0
    %1193 = vmatpush1.msra.mxu0 0.0
    %1194 = vmatprep.mubr.f32.mxu0 0.0
    %1195 = vmatmul.mubr.f32.gmra.mrb[0].mxu0 %v221
    %v1196 = vpop.f32.mrb[0].mxu0
    %v1197 = vadd.f32 0.0, %v1196
    %v1198 = vpop.f32.mrb[0].mxu0
    %v1199 = vadd.f32 0.0, %v1198
    %1200 = vmatprep.mubr.f32.mxu0 0.0
    %1201 = vmatmul.mubr.f32.gmra.mrb[0].mxu0 %v224
    %v1202 = vpop.f32.mrb[0].mxu0
    %v1203 = vadd.f32 0.0, %v1202
    %v1204 = vpop.f32.mrb[0].mxu0
    %v1205 = vadd.f32 0.0, %v1204
    %1206 = vmatprep.mubr.f32.mxu0 0.0
    %1207 = vmatmul.mubr.f32.gmra.mrb[0].mxu0 %v227
    %v1208 = vpop.f32.mrb[0].mxu0
    %v1209 = vadd.f32 0.0, %v1208
    %v1210 = vpop.f32.mrb[0].mxu0
    %v1211 = vadd.f32 0.0, %v1210
    %1212 = vmatprep.mubr.f32.mxu0 0.0
    %1213 = vmatmul.mubr.f32.gmra.mrb[0].mxu0 %v230
    %v1214 = vpop.f32.mrb[0].mxu0
    %v1215 = vadd.f32 0.0, %v1214
    %v1216 = vpop.f32.mrb[0].mxu0
    %v1217 = vadd.f32 0.0, %v1216
    %1218 = vdwg.mxu0
    %1219 = vmatprep.subr.mxu0 %v80
    %1220 = vmatpush1.msra.mxu0 %v79
    %1221 = vmatprep.subr.mxu0 %v112
    %1222 = vmatpush1.msra.mxu0 %v111
    %1223 = vmatprep.subr.mxu0 %v144
    %1224 = vmatpush1.msra.mxu0 %v143
    %1225 = vmatprep.subr.mxu0 %v176
    %1226 = vmatpush1.msra.mxu0 %v175
    %1227 = vmatprep.subr.mxu0 %v297
    %1228 = vmatpush1.msra.mxu0 %v294
    %1229 = vmatprep.subr.mxu0 0.0
    %1230 = vmatpush1.msra.mxu0 0.0
    %1231 = vmatprep.subr.mxu0 0.0
    %1232 = vmatpush1.msra.mxu0 0.0
    %1233 = vmatprep.subr.mxu0 0.0
    %1234 = vmatpush1.msra.mxu0 0.0
    %1235 = vmatprep.subr.mxu0 0.0
    %1236 = vmatpush1.msra.mxu0 0.0
    %1237 = vmatprep.subr.mxu0 0.0
    %1238 = vmatpush1.msra.mxu0 0.0
    %1239 = vmatprep.subr.mxu0 0.0
    %1240 = vmatpush1.msra.mxu0 0.0
    %1241 = vmatprep.subr.mxu0 0.0
    %1242 = vmatpush1.msra.mxu0 0.0
    %1243 = vmatprep.subr.mxu0 0.0
    %1244 = vmatpush1.msra.mxu0 0.0
    %1245 = vmatprep.subr.mxu0 0.0
    %1246 = vmatpush1.msra.mxu0 0.0
    %1247 = vmatprep.subr.mxu0 0.0
    %1248 = vmatpush1.msra.mxu0 0.0
    %1249 = vmatprep.subr.mxu0 0.0
    %1250 = vmatpush1.msra.mxu0 0.0
    %1251 = vmatprep.subr.mxu0 0.0
    %1252 = vmatpush1.msra.mxu0 0.0
    %1253 = vmatprep.subr.mxu0 0.0
    %1254 = vmatpush1.msra.mxu0 0.0
    %1255 = vmatprep.subr.mxu0 0.0
    %1256 = vmatpush1.msra.mxu0 0.0
    %1257 = vmatprep.subr.mxu0 0.0
    %1258 = vmatpush1.msra.mxu0 0.0
    %1259 = vmatprep.subr.mxu0 0.0
    %1260 = vmatpush1.msra.mxu0 0.0
    %1261 = vmatprep.subr.mxu0 0.0
    %1262 = vmatpush1.msra.mxu0 0.0
    %1263 = vmatprep.subr.mxu0 0.0
    %1264 = vmatpush1.msra.mxu0 0.0
    %1265 = vmatprep.subr.mxu0 0.0
    %1266 = vmatpush1.msra.mxu0 0.0
    %1267 = vmatprep.subr.mxu0 0.0
    %1268 = vmatpush1.msra.mxu0 0.0
    %1269 = vmatprep.subr.mxu0 0.0
    %1270 = vmatpush1.msra.mxu0 0.0
    %1271 = vmatprep.subr.mxu0 0.0
    %1272 = vmatpush1.msra.mxu0 0.0
    %1273 = vmatprep.subr.mxu0 0.0
    %1274 = vmatpush1.msra.mxu0 0.0
    %1275 = vmatprep.subr.mxu0 0.0
    %1276 = vmatpush1.msra.mxu0 0.0
    %1277 = vmatprep.subr.mxu0 0.0
    %1278 = vmatpush1.msra.mxu0 0.0
    %1279 = vmatprep.subr.mxu0 0.0
    %1280 = vmatpush1.msra.mxu0 0.0
    %1281 = vmatprep.subr.mxu0 0.0
    %1282 = vmatpush1.msra.mxu0 0.0
    %1283 = vmatprep.mubr.f32.mxu0 0.0
    %1284 = vmatmul.mubr.f32.gmra.mrb[0].mxu0 %v221
    %v1285 = vpop.f32.mrb[0].mxu0
    %v1286 = vadd.f32 0.0, %v1285
    %v1287 = vpop.f32.mrb[0].mxu0
    %v1288 = vadd.f32 0.0, %v1287
    %1289 = vmatprep.mubr.f32.mxu0 0.0
    %1290 = vmatmul.mubr.f32.gmra.mrb[0].mxu0 %v224
    %v1291 = vpop.f32.mrb[0].mxu0
    %v1292 = vadd.f32 0.0, %v1291
    %v1293 = vpop.f32.mrb[0].mxu0
    %v1294 = vadd.f32 0.0, %v1293
    %1295 = vmatprep.mubr.f32.mxu0 0.0
    %1296 = vmatmul.mubr.f32.gmra.mrb[0].mxu0 %v227
    %v1297 = vpop.f32.mrb[0].mxu0
    %v1298 = vadd.f32 0.0, %v1297
    %v1299 = vpop.f32.mrb[0].mxu0
    %v1300 = vadd.f32 0.0, %v1299
    %1301 = vmatprep.mubr.f32.mxu0 0.0
    %1302 = vmatmul.mubr.f32.gmra.mrb[0].mxu0 %v230
    %v1303 = vpop.f32.mrb[0].mxu0
    %v1304 = vadd.f32 0.0, %v1303
    %v1305 = vpop.f32.mrb[0].mxu0
    %v1306 = vadd.f32 0.0, %v1305
    %1307 = vdwg.mxu0
    %1308 = vmatprep.subr.mxu0 %v82
    %1309 = vmatpush1.msra.mxu0 %v81
    %1310 = vmatprep.subr.mxu0 %v114
    %1311 = vmatpush1.msra.mxu0 %v113
    %1312 = vmatprep.subr.mxu0 %v146
    %1313 = vmatpush1.msra.mxu0 %v145
    %1314 = vmatprep.subr.mxu0 %v178
    %1315 = vmatpush1.msra.mxu0 %v177
    %1316 = vmatprep.subr.mxu0 %v303
    %1317 = vmatpush1.msra.mxu0 %v300
    %1318 = vmatprep.subr.mxu0 0.0
    %1319 = vmatpush1.msra.mxu0 0.0
    %1320 = vmatprep.subr.mxu0 0.0
    %1321 = vmatpush1.msra.mxu0 0.0
    %1322 = vmatprep.subr.mxu0 0.0
    %1323 = vmatpush1.msra.mxu0 0.0
    %1324 = vmatprep.subr.mxu0 0.0
    %1325 = vmatpush1.msra.mxu0 0.0
    %1326 = vmatprep.subr.mxu0 0.0
    %1327 = vmatpush1.msra.mxu0 0.0
    %1328 = vmatprep.subr.mxu0 0.0
    %1329 = vmatpush1.msra.mxu0 0.0
    %1330 = vmatprep.subr.mxu0 0.0
    %1331 = vmatpush1.msra.mxu0 0.0
    %1332 = vmatprep.subr.mxu0 0.0
    %1333 = vmatpush1.msra.mxu0 0.0
    %1334 = vmatprep.subr.mxu0 0.0
    %1335 = vmatpush1.msra.mxu0 0.0
    %1336 = vmatprep.subr.mxu0 0.0
    %1337 = vmatpush1.msra.mxu0 0.0
    %1338 = vmatprep.subr.mxu0 0.0
    %1339 = vmatpush1.msra.mxu0 0.0
    %1340 = vmatprep.subr.mxu0 0.0
    %1341 = vmatpush1.msra.mxu0 0.0
    %1342 = vmatprep.subr.mxu0 0.0
    %1343 = vmatpush1.msra.mxu0 0.0
    %1344 = vmatprep.subr.mxu0 0.0
    %1345 = vmatpush1.msra.mxu0 0.0
    %1346 = vmatprep.subr.mxu0 0.0
    %1347 = vmatpush1.msra.mxu0 0.0
    %1348 = vmatprep.subr.mxu0 0.0
    %1349 = vmatpush1.msra.mxu0 0.0
    %1350 = vmatprep.subr.mxu0 0.0
    %1351 = vmatpush1.msra.mxu0 0.0
    %1352 = vmatprep.subr.mxu0 0.0
    %1353 = vmatpush1.msra.mxu0 0.0
    %1354 = vmatprep.subr.mxu0 0.0
    %1355 = vmatpush1.msra.mxu0 0.0
    %1356 = vmatprep.subr.mxu0 0.0
    %1357 = vmatpush1.msra.mxu0 0.0
    %1358 = vmatprep.subr.mxu0 0.0
    %1359 = vmatpush1.msra.mxu0 0.0
    %1360 = vmatprep.subr.mxu0 0.0
    %1361 = vmatpush1.msra.mxu0 0.0
    %1362 = vmatprep.subr.mxu0 0.0
    %1363 = vmatpush1.msra.mxu0 0.0
    %1364 = vmatprep.subr.mxu0 0.0
    %1365 = vmatpush1.msra.mxu0 0.0
    %1366 = vmatprep.subr.mxu0 0.0
    %1367 = vmatpush1.msra.mxu0 0.0
    %1368 = vmatprep.subr.mxu0 0.0
    %1369 = vmatpush1.msra.mxu0 0.0
    %1370 = vmatprep.subr.mxu0 0.0
    %1371 = vmatpush1.msra.mxu0 0.0
    %1372 = vmatprep.mubr.f32.mxu0 0.0
    %1373 = vmatmul.mubr.f32.gmra.mrb[0].mxu0 %v221
    %v1374 = vpop.f32.mrb[0].mxu0
    %v1375 = vadd.f32 0.0, %v1374
    %v1376 = vpop.f32.mrb[0].mxu0
    %v1377 = vadd.f32 0.0, %v1376
    %1378 = vmatprep.mubr.f32.mxu0 0.0
    %1379 = vmatmul.mubr.f32.gmra.mrb[0].mxu0 %v224
    %v1380 = vpop.f32.mrb[0].mxu0
    %v1381 = vadd.f32 0.0, %v1380
    %v1382 = vpop.f32.mrb[0].mxu0
    %v1383 = vadd.f32 0.0, %v1382
    %1384 = vmatprep.mubr.f32.mxu0 0.0
    %1385 = vmatmul.mubr.f32.gmra.mrb[0].mxu0 %v227
    %v1386 = vpop.f32.mrb[0].mxu0
    %v1387 = vadd.f32 0.0, %v1386
    %v1388 = vpop.f32.mrb[0].mxu0
    %v1389 = vadd.f32 0.0, %v1388
    %1390 = vmatprep.mubr.f32.mxu0 0.0
    %1391 = vmatmul.mubr.f32.gmra.mrb[0].mxu0 %v230
    %v1392 = vpop.f32.mrb[0].mxu0
    %v1393 = vadd.f32 0.0, %v1392
    %v1394 = vpop.f32.mrb[0].mxu0
    %v1395 = vadd.f32 0.0, %v1394
    %1396 = vdwg.mxu0
    %1397 = vmatprep.subr.mxu0 %v84
    %1398 = vmatpush1.msra.mxu0 %v83
    %1399 = vmatprep.subr.mxu0 %v116
    %1400 = vmatpush1.msra.mxu0 %v115
    %1401 = vmatprep.subr.mxu0 %v148
    %1402 = vmatpush1.msra.mxu0 %v147
    %1403 = vmatprep.subr.mxu0 %v180
    %1404 = vmatpush1.msra.mxu0 %v179
    %1405 = vmatprep.subr.mxu0 %v309
    %1406 = vmatpush1.msra.mxu0 %v306
    %1407 = vmatprep.subr.mxu0 0.0
    %1408 = vmatpush1.msra.mxu0 0.0
    %1409 = vmatprep.subr.mxu0 0.0
    %1410 = vmatpush1.msra.mxu0 0.0
    %1411 = vmatprep.subr.mxu0 0.0
    %1412 = vmatpush1.msra.mxu0 0.0
    %1413 = vmatprep.subr.mxu0 0.0
    %1414 = vmatpush1.msra.mxu0 0.0
    %1415 = vmatprep.subr.mxu0 0.0
    %1416 = vmatpush1.msra.mxu0 0.0
    %1417 = vmatprep.subr.mxu0 0.0
    %1418 = vmatpush1.msra.mxu0 0.0
    %1419 = vmatprep.subr.mxu0 0.0
    %1420 = vmatpush1.msra.mxu0 0.0
    %1421 = vmatprep.subr.mxu0 0.0
    %1422 = vmatpush1.msra.mxu0 0.0
    %1423 = vmatprep.subr.mxu0 0.0
    %1424 = vmatpush1.msra.mxu0 0.0
    %1425 = vmatprep.subr.mxu0 0.0
    %1426 = vmatpush1.msra.mxu0 0.0
    %1427 = vmatprep.subr.mxu0 0.0
    %1428 = vmatpush1.msra.mxu0 0.0
    %1429 = vmatprep.subr.mxu0 0.0
    %1430 = vmatpush1.msra.mxu0 0.0
    %1431 = vmatprep.subr.mxu0 0.0
    %1432 = vmatpush1.msra.mxu0 0.0
    %1433 = vmatprep.subr.mxu0 0.0
    %1434 = vmatpush1.msra.mxu0 0.0
    %1435 = vmatprep.subr.mxu0 0.0
    %1436 = vmatpush1.msra.mxu0 0.0
    %1437 = vmatprep.subr.mxu0 0.0
    %1438 = vmatpush1.msra.mxu0 0.0
    %1439 = vmatprep.subr.mxu0 0.0
    %1440 = vmatpush1.msra.mxu0 0.0
    %1441 = vmatprep.subr.mxu0 0.0
    %1442 = vmatpush1.msra.mxu0 0.0
    %1443 = vmatprep.subr.mxu0 0.0
    %1444 = vmatpush1.msra.mxu0 0.0
    %1445 = vmatprep.subr.mxu0 0.0
    %1446 = vmatpush1.msra.mxu0 0.0
    %1447 = vmatprep.subr.mxu0 0.0
    %1448 = vmatpush1.msra.mxu0 0.0
    %1449 = vmatprep.subr.mxu0 0.0
    %1450 = vmatpush1.msra.mxu0 0.0
    %1451 = vmatprep.subr.mxu0 0.0
    %1452 = vmatpush1.msra.mxu0 0.0
    %1453 = vmatprep.subr.mxu0 0.0
    %1454 = vmatpush1.msra.mxu0 0.0
    %1455 = vmatprep.subr.mxu0 0.0
    %1456 = vmatpush1.msra.mxu0 0.0
    %1457 = vmatprep.subr.mxu0 0.0
    %1458 = vmatpush1.msra.mxu0 0.0
    %1459 = vmatprep.subr.mxu0 0.0
    %1460 = vmatpush1.msra.mxu0 0.0
    %1461 = vmatprep.mubr.f32.mxu0 0.0
    %1462 = vmatmul.mubr.f32.gmra.mrb[0].mxu0 %v221
    %v1463 = vpop.f32.mrb[0].mxu0
    %v1464 = vadd.f32 0.0, %v1463
    %v1465 = vpop.f32.mrb[0].mxu0
    %v1466 = vadd.f32 0.0, %v1465
    %1467 = vmatprep.mubr.f32.mxu0 0.0
    %1468 = vmatmul.mubr.f32.gmra.mrb[0].mxu0 %v224
    %v1469 = vpop.f32.mrb[0].mxu0
    %v1470 = vadd.f32 0.0, %v1469
    %v1471 = vpop.f32.mrb[0].mxu0
    %v1472 = vadd.f32 0.0, %v1471
    %1473 = vmatprep.mubr.f32.mxu0 0.0
    %1474 = vmatmul.mubr.f32.gmra.mrb[0].mxu0 %v227
    %v1475 = vpop.f32.mrb[0].mxu0
    %v1476 = vadd.f32 0.0, %v1475
    %v1477 = vpop.f32.mrb[0].mxu0
    %v1478 = vadd.f32 0.0, %v1477
    %1479 = vmatprep.mubr.f32.mxu0 0.0
    %1480 = vmatmul.mubr.f32.gmra.mrb[0].mxu0 %v230
    %v1481 = vpop.f32.mrb[0].mxu0
    %v1482 = vadd.f32 0.0, %v1481
    %v1483 = vpop.f32.mrb[0].mxu0
    %v1484 = vadd.f32 0.0, %v1483
    %1485 = vdwg.mxu0
    %1486 = vmatprep.subr.mxu0 %v86
    %1487 = vmatpush1.msra.mxu0 %v85
    %1488 = vmatprep.subr.mxu0 %v118
    %1489 = vmatpush1.msra.mxu0 %v117
    %1490 = vmatprep.subr.mxu0 %v150
    %1491 = vmatpush1.msra.mxu0 %v149
    %1492 = vmatprep.subr.mxu0 %v182
    %1493 = vmatpush1.msra.mxu0 %v181
    %1494 = vmatprep.subr.mxu0 %v315
    %1495 = vmatpush1.msra.mxu0 %v312
    %1496 = vmatprep.subr.mxu0 0.0
    %1497 = vmatpush1.msra.mxu0 0.0
    %1498 = vmatprep.subr.mxu0 0.0
    %1499 = vmatpush1.msra.mxu0 0.0
    %1500 = vmatprep.subr.mxu0 0.0
    %1501 = vmatpush1.msra.mxu0 0.0
    %1502 = vmatprep.subr.mxu0 0.0
    %1503 = vmatpush1.msra.mxu0 0.0
    %1504 = vmatprep.subr.mxu0 0.0
    %1505 = vmatpush1.msra.mxu0 0.0
    %1506 = vmatprep.subr.mxu0 0.0
    %1507 = vmatpush1.msra.mxu0 0.0
    %1508 = vmatprep.subr.mxu0 0.0
    %1509 = vmatpush1.msra.mxu0 0.0
    %1510 = vmatprep.subr.mxu0 0.0
    %1511 = vmatpush1.msra.mxu0 0.0
    %1512 = vmatprep.subr.mxu0 0.0
    %1513 = vmatpush1.msra.mxu0 0.0
    %1514 = vmatprep.subr.mxu0 0.0
    %1515 = vmatpush1.msra.mxu0 0.0
    %1516 = vmatprep.subr.mxu0 0.0
    %1517 = vmatpush1.msra.mxu0 0.0
    %1518 = vmatprep.subr.mxu0 0.0
    %1519 = vmatpush1.msra.mxu0 0.0
    %1520 = vmatprep.subr.mxu0 0.0
    %1521 = vmatpush1.msra.mxu0 0.0
    %1522 = vmatprep.subr.mxu0 0.0
    %1523 = vmatpush1.msra.mxu0 0.0
    %1524 = vmatprep.subr.mxu0 0.0
    %1525 = vmatpush1.msra.mxu0 0.0
    %1526 = vmatprep.subr.mxu0 0.0
    %1527 = vmatpush1.msra.mxu0 0.0
    %1528 = vmatprep.subr.mxu0 0.0
    %1529 = vmatpush1.msra.mxu0 0.0
    %1530 = vmatprep.subr.mxu0 0.0
    %1531 = vmatpush1.msra.mxu0 0.0
    %1532 = vmatprep.subr.mxu0 0.0
    %1533 = vmatpush1.msra.mxu0 0.0
    %1534 = vmatprep.subr.mxu0 0.0
    %1535 = vmatpush1.msra.mxu0 0.0
    %1536 = vmatprep.subr.mxu0 0.0
    %1537 = vmatpush1.msra.mxu0 0.0
    %1538 = vmatprep.subr.mxu0 0.0
    %1539 = vmatpush1.msra.mxu0 0.0
    %1540 = vmatprep.subr.mxu0 0.0
    %1541 = vmatpush1.msra.mxu0 0.0
    %1542 = vmatprep.subr.mxu0 0.0
    %1543 = vmatpush1.msra.mxu0 0.0
    %1544 = vmatprep.subr.mxu0 0.0
    %1545 = vmatpush1.msra.mxu0 0.0
    %1546 = vmatprep.subr.mxu0 0.0
    %1547 = vmatpush1.msra.mxu0 0.0
    %1548 = vmatprep.subr.mxu0 0.0
    %1549 = vmatpush1.msra.mxu0 0.0
    %1550 = vmatprep.mubr.f32.mxu0 0.0
    %1551 = vmatmul.mubr.f32.gmra.mrb[0].mxu0 %v221
    %v1552 = vpop.f32.mrb[0].mxu0
    %v1553 = vadd.f32 0.0, %v1552
    %v1554 = vpop.f32.mrb[0].mxu0
    %v1555 = vadd.f32 0.0, %v1554
    %1556 = vmatprep.mubr.f32.mxu0 0.0
    %1557 = vmatmul.mubr.f32.gmra.mrb[0].mxu0 %v224
    %v1558 = vpop.f32.mrb[0].mxu0
    %v1559 = vadd.f32 0.0, %v1558
    %v1560 = vpop.f32.mrb[0].mxu0
    %v1561 = vadd.f32 0.0, %v1560
    %1562 = vmatprep.mubr.f32.mxu0 0.0
    %1563 = vmatmul.mubr.f32.gmra.mrb[0].mxu0 %v227
    %v1564 = vpop.f32.mrb[0].mxu0
    %v1565 = vadd.f32 0.0, %v1564
    %v1566 = vpop.f32.mrb[0].mxu0
    %v1567 = vadd.f32 0.0, %v1566
    %1568 = vmatprep.mubr.f32.mxu0 0.0
    %1569 = vmatmul.mubr.f32.gmra.mrb[0].mxu0 %v230
    %v1570 = vpop.f32.mrb[0].mxu0
    %v1571 = vadd.f32 0.0, %v1570
    %v1572 = vpop.f32.mrb[0].mxu0
    %v1573 = vadd.f32 0.0, %v1572
    %1574 = vdwg.mxu0
    %1575 = vmatprep.subr.mxu0 %v88
    %1576 = vmatpush1.msra.mxu0 %v87
    %1577 = vmatprep.subr.mxu0 %v120
    %1578 = vmatpush1.msra.mxu0 %v119
    %1579 = vmatprep.subr.mxu0 %v152
    %1580 = vmatpush1.msra.mxu0 %v151
    %1581 = vmatprep.subr.mxu0 %v184
    %1582 = vmatpush1.msra.mxu0 %v183
    %1583 = vmatprep.subr.mxu0 %v321
    %1584 = vmatpush1.msra.mxu0 %v318
    %1585 = vmatprep.subr.mxu0 0.0
    %1586 = vmatpush1.msra.mxu0 0.0
    %1587 = vmatprep.subr.mxu0 0.0
    %1588 = vmatpush1.msra.mxu0 0.0
    %1589 = vmatprep.subr.mxu0 0.0
    %1590 = vmatpush1.msra.mxu0 0.0
    %1591 = vmatprep.subr.mxu0 0.0
    %1592 = vmatpush1.msra.mxu0 0.0
    %1593 = vmatprep.subr.mxu0 0.0
    %1594 = vmatpush1.msra.mxu0 0.0
    %1595 = vmatprep.subr.mxu0 0.0
    %1596 = vmatpush1.msra.mxu0 0.0
    %1597 = vmatprep.subr.mxu0 0.0
    %1598 = vmatpush1.msra.mxu0 0.0
    %1599 = vmatprep.subr.mxu0 0.0
    %1600 = vmatpush1.msra.mxu0 0.0
    %1601 = vmatprep.subr.mxu0 0.0
    %1602 = vmatpush1.msra.mxu0 0.0
    %1603 = vmatprep.subr.mxu0 0.0
    %1604 = vmatpush1.msra.mxu0 0.0
    %1605 = vmatprep.subr.mxu0 0.0
    %1606 = vmatpush1.msra.mxu0 0.0
    %1607 = vmatprep.subr.mxu0 0.0
    %1608 = vmatpush1.msra.mxu0 0.0
    %1609 = vmatprep.subr.mxu0 0.0
    %1610 = vmatpush1.msra.mxu0 0.0
    %1611 = vmatprep.subr.mxu0 0.0
    %1612 = vmatpush1.msra.mxu0 0.0
    %1613 = vmatprep.subr.mxu0 0.0
    %1614 = vmatpush1.msra.mxu0 0.0
    %1615 = vmatprep.subr.mxu0 0.0
    %1616 = vmatpush1.msra.mxu0 0.0
    %1617 = vmatprep.subr.mxu0 0.0
    %1618 = vmatpush1.msra.mxu0 0.0
    %1619 = vmatprep.subr.mxu0 0.0
    %1620 = vmatpush1.msra.mxu0 0.0
    %1621 = vmatprep.subr.mxu0 0.0
    %1622 = vmatpush1.msra.mxu0 0.0
    %1623 = vmatprep.subr.mxu0 0.0
    %1624 = vmatpush1.msra.mxu0 0.0
    %1625 = vmatprep.subr.mxu0 0.0
    %1626 = vmatpush1.msra.mxu0 0.0
    %1627 = vmatprep.subr.mxu0 0.0
    %1628 = vmatpush1.msra.mxu0 0.0
    %1629 = vmatprep.subr.mxu0 0.0
    %1630 = vmatpush1.msra.mxu0 0.0
    %1631 = vmatprep.subr.mxu0 0.0
    %1632 = vmatpush1.msra.mxu0 0.0
    %1633 = vmatprep.subr.mxu0 0.0
    %1634 = vmatpush1.msra.mxu0 0.0
    %1635 = vmatprep.subr.mxu0 0.0
    %1636 = vmatpush1.msra.mxu0 0.0
    %1637 = vmatprep.subr.mxu0 0.0
    %1638 = vmatpush1.msra.mxu0 0.0
    %1639 = vmatprep.mubr.f32.mxu0 0.0
    %1640 = vmatmul.mubr.f32.gmra.mrb[0].mxu0 %v221
    %v1641 = vpop.f32.mrb[0].mxu0
    %v1642 = vadd.f32 0.0, %v1641
    %v1643 = vpop.f32.mrb[0].mxu0
    %v1644 = vadd.f32 0.0, %v1643
    %1645 = vmatprep.mubr.f32.mxu0 0.0
    %1646 = vmatmul.mubr.f32.gmra.mrb[0].mxu0 %v224
    %v1647 = vpop.f32.mrb[0].mxu0
    %v1648 = vadd.f32 0.0, %v1647
    %v1649 = vpop.f32.mrb[0].mxu0
    %v1650 = vadd.f32 0.0, %v1649
    %1651 = vmatprep.mubr.f32.mxu0 0.0
    %1652 = vmatmul.mubr.f32.gmra.mrb[0].mxu0 %v227
    %v1653 = vpop.f32.mrb[0].mxu0
    %v1654 = vadd.f32 0.0, %v1653
    %v1655 = vpop.f32.mrb[0].mxu0
    %v1656 = vadd.f32 0.0, %v1655
    %1657 = vmatprep.mubr.f32.mxu0 0.0
    %1658 = vmatmul.mubr.f32.gmra.mrb[0].mxu0 %v230
    %v1659 = vpop.f32.mrb[0].mxu0
    %v1660 = vadd.f32 0.0, %v1659
    %v1661 = vpop.f32.mrb[0].mxu0
    %v1662 = vadd.f32 0.0, %v1661
    %1663 = vdwg.mxu0
    %1664 = vmatprep.subr.mxu0 %v90
    %1665 = vmatpush1.msra.mxu0 %v89
    %1666 = vmatprep.subr.mxu0 %v122
    %1667 = vmatpush1.msra.mxu0 %v121
    %1668 = vmatprep.subr.mxu0 %v154
    %1669 = vmatpush1.msra.mxu0 %v153
    %1670 = vmatprep.subr.mxu0 %v186
    %1671 = vmatpush1.msra.mxu0 %v185
    %1672 = vmatprep.subr.mxu0 %v327
    %1673 = vmatpush1.msra.mxu0 %v324
    %1674 = vmatprep.subr.mxu0 0.0
    %1675 = vmatpush1.msra.mxu0 0.0
    %1676 = vmatprep.subr.mxu0 0.0
    %1677 = vmatpush1.msra.mxu0 0.0
    %1678 = vmatprep.subr.mxu0 0.0
    %1679 = vmatpush1.msra.mxu0 0.0
    %1680 = vmatprep.subr.mxu0 0.0
    %1681 = vmatpush1.msra.mxu0 0.0
    %1682 = vmatprep.subr.mxu0 0.0
    %1683 = vmatpush1.msra.mxu0 0.0
    %1684 = vmatprep.subr.mxu0 0.0
    %1685 = vmatpush1.msra.mxu0 0.0
    %1686 = vmatprep.subr.mxu0 0.0
    %1687 = vmatpush1.msra.mxu0 0.0
    %1688 = vmatprep.subr.mxu0 0.0
    %1689 = vmatpush1.msra.mxu0 0.0
    %1690 = vmatprep.subr.mxu0 0.0
    %1691 = vmatpush1.msra.mxu0 0.0
    %1692 = vmatprep.subr.mxu0 0.0
    %1693 = vmatpush1.msra.mxu0 0.0
    %1694 = vmatprep.subr.mxu0 0.0
    %1695 = vmatpush1.msra.mxu0 0.0
    %1696 = vmatprep.subr.mxu0 0.0
    %1697 = vmatpush1.msra.mxu0 0.0
    %1698 = vmatprep.subr.mxu0 0.0
    %1699 = vmatpush1.msra.mxu0 0.0
    %1700 = vmatprep.subr.mxu0 0.0
    %1701 = vmatpush1.msra.mxu0 0.0
    %1702 = vmatprep.subr.mxu0 0.0
    %1703 = vmatpush1.msra.mxu0 0.0
    %1704 = vmatprep.subr.mxu0 0.0
    %1705 = vmatpush1.msra.mxu0 0.0
    %1706 = vmatprep.subr.mxu0 0.0
    %1707 = vmatpush1.msra.mxu0 0.0
    %1708 = vmatprep.subr.mxu0 0.0
    %1709 = vmatpush1.msra.mxu0 0.0
    %1710 = vmatprep.subr.mxu0 0.0
    %1711 = vmatpush1.msra.mxu0 0.0
    %1712 = vmatprep.subr.mxu0 0.0
    %1713 = vmatpush1.msra.mxu0 0.0
    %1714 = vmatprep.subr.mxu0 0.0
    %1715 = vmatpush1.msra.mxu0 0.0
    %1716 = vmatprep.subr.mxu0 0.0
    %1717 = vmatpush1.msra.mxu0 0.0
    %1718 = vmatprep.subr.mxu0 0.0
    %1719 = vmatpush1.msra.mxu0 0.0
    %1720 = vmatprep.subr.mxu0 0.0
    %1721 = vmatpush1.msra.mxu0 0.0
    %1722 = vmatprep.subr.mxu0 0.0
    %1723 = vmatpush1.msra.mxu0 0.0
    %1724 = vmatprep.subr.mxu0 0.0
    %1725 = vmatpush1.msra.mxu0 0.0
    %1726 = vmatprep.subr.mxu0 0.0
    %1727 = vmatpush1.msra.mxu0 0.0
    %1728 = vmatprep.mubr.f32.mxu0 0.0
    %1729 = vmatmul.mubr.f32.gmra.mrb[0].mxu0 %v221
    %v1730 = vpop.f32.mrb[0].mxu0
    %v1731 = vadd.f32 0.0, %v1730
    %v1732 = vpop.f32.mrb[0].mxu0
    %v1733 = vadd.f32 0.0, %v1732
    %1734 = vmatprep.mubr.f32.mxu0 0.0
    %1735 = vmatmul.mubr.f32.gmra.mrb[0].mxu0 %v224
    %v1736 = vpop.f32.mrb[0].mxu0
    %v1737 = vadd.f32 0.0, %v1736
    %v1738 = vpop.f32.mrb[0].mxu0
    %v1739 = vadd.f32 0.0, %v1738
    %1740 = vmatprep.mubr.f32.mxu0 0.0
    %1741 = vmatmul.mubr.f32.gmra.mrb[0].mxu0 %v227
    %v1742 = vpop.f32.mrb[0].mxu0
    %v1743 = vadd.f32 0.0, %v1742
    %v1744 = vpop.f32.mrb[0].mxu0
    %v1745 = vadd.f32 0.0, %v1744
    %1746 = vmatprep.mubr.f32.mxu0 0.0
    %1747 = vmatmul.mubr.f32.gmra.mrb[0].mxu0 %v230
    %v1748 = vpop.f32.mrb[0].mxu0
    %v1749 = vadd.f32 0.0, %v1748
    %v1750 = vpop.f32.mrb[0].mxu0
    %v1751 = vadd.f32 0.0, %v1750
    %1752 = vdwg.mxu0
    %1753 = vst [vmem:[#allocation2] sm:$0xff] %v396
    %1754 = vst [vmem:[#allocation2 + $0x8] sm:$0xff] %v398
    %1755 = vst [vmem:[#allocation2 + $0x10] sm:$0xff] %v485
    %1756 = vst [vmem:[#allocation2 + $0x18] sm:$0xff] %v487
    %1757 = vst [vmem:[#allocation2 + $0x20] sm:$0xff] %v574
    %1758 = vst [vmem:[#allocation2 + $0x28] sm:$0xff] %v576
    %1759 = vst [vmem:[#allocation2 + $0x30] sm:$0xff] %v663
    %1760 = vst [vmem:[#allocation2 + $0x38] sm:$0xff] %v665
    %1761 = vst [vmem:[#allocation2 + $0x40] sm:$0xff] %v752
    %1762 = vst [vmem:[#allocation2 + $0x48] sm:$0xff] %v754
    %1763 = vst [vmem:[#allocation2 + $0x50] sm:$0xff] %v841
    %1764 = vst [vmem:[#allocation2 + $0x58] sm:$0xff] %v843
    %1765 = vst [vmem:[#allocation2 + $0x60] sm:$0xff] %v930
    %1766 = vst [vmem:[#allocation2 + $0x68] sm:$0xff] %v932
    %1767 = vst [vmem:[#allocation2 + $0x70] sm:$0xff] %v1019
    %1768 = vst [vmem:[#allocation2 + $0x78] sm:$0xff] %v1021
    %1769 = vst [vmem:[#allocation2 + $0x80] sm:$0xff] %v1108
    %1770 = vst [vmem:[#allocation2 + $0x88] sm:$0xff] %v1110
    %1771 = vst [vmem:[#allocation2 + $0x90] sm:$0xff] %v1197
    %1772 = vst [vmem:[#allocation2 + $0x98] sm:$0xff] %v1199
    %1773 = vst [vmem:[#allocation2 + $0xa0] sm:$0xff] %v1286
    %1774 = vst [vmem:[#allocation2 + $0xa8] sm:$0xff] %v1288
    %1775 = vst [vmem:[#allocation2 + $0xb0] sm:$0xff] %v1375
    %1776 = vst [vmem:[#allocation2 + $0xb8] sm:$0xff] %v1377
    %1777 = vst [vmem:[#allocation2 + $0xc0] sm:$0xff] %v1464
    %1778 = vst [vmem:[#allocation2 + $0xc8] sm:$0xff] %v1466
    %1779 = vst [vmem:[#allocation2 + $0xd0] sm:$0xff] %v1553
    %1780 = vst [vmem:[#allocation2 + $0xd8] sm:$0xff] %v1555
    %1781 = vst [vmem:[#allocation2 + $0xe0] sm:$0xff] %v1642
    %1782 = vst [vmem:[#allocation2 + $0xe8] sm:$0xff] %v1644
    %1783 = vst [vmem:[#allocation2 + $0xf0] sm:$0xff] %v1731
    %1784 = vst [vmem:[#allocation2 + $0xf8] sm:$0xff] %v1733
    %1785 = vst [vmem:[#allocation2 + $0x100] sm:$0xff] %v402
    %1786 = vst [vmem:[#allocation2 + $0x108] sm:$0xff] %v404
    %1787 = vst [vmem:[#allocation2 + $0x110] sm:$0xff] %v491
    %1788 = vst [vmem:[#allocation2 + $0x118] sm:$0xff] %v493
    %1789 = vst [vmem:[#allocation2 + $0x120] sm:$0xff] %v580
    %1790 = vst [vmem:[#allocation2 + $0x128] sm:$0xff] %v582
    %1791 = vst [vmem:[#allocation2 + $0x130] sm:$0xff] %v669
    %1792 = vst [vmem:[#allocation2 + $0x138] sm:$0xff] %v671
    %1793 = vst [vmem:[#allocation2 + $0x140] sm:$0xff] %v758
    %1794 = vst [vmem:[#allocation2 + $0x148] sm:$0xff] %v760
    %1795 = vst [vmem:[#allocation2 + $0x150] sm:$0xff] %v847
    %1796 = vst [vmem:[#allocation2 + $0x158] sm:$0xff] %v849
    %1797 = vst [vmem:[#allocation2 + $0x160] sm:$0xff] %v936
    %1798 = vst [vmem:[#allocation2 + $0x168] sm:$0xff] %v938
    %1799 = vst [vmem:[#allocation2 + $0x170] sm:$0xff] %v1025
    %1800 = vst [vmem:[#allocation2 + $0x178] sm:$0xff] %v1027
    %1801 = vst [vmem:[#allocation2 + $0x180] sm:$0xff] %v1114
    %1802 = vst [vmem:[#allocation2 + $0x188] sm:$0xff] %v1116
    %1803 = vst [vmem:[#allocation2 + $0x190] sm:$0xff] %v1203
    %1804 = vst [vmem:[#allocation2 + $0x198] sm:$0xff] %v1205
    %1805 = vst [vmem:[#allocation2 + $0x1a0] sm:$0xff] %v1292
    %1806 = vst [vmem:[#allocation2 + $0x1a8] sm:$0xff] %v1294
    %1807 = vst [vmem:[#allocation2 + $0x1b0] sm:$0xff] %v1381
    %1808 = vst [vmem:[#allocation2 + $0x1b8] sm:$0xff] %v1383
    %1809 = vst [vmem:[#allocation2 + $0x1c0] sm:$0xff] %v1470
    %1810 = vst [vmem:[#allocation2 + $0x1c8] sm:$0xff] %v1472
    %1811 = vst [vmem:[#allocation2 + $0x1d0] sm:$0xff] %v1559
    %1812 = vst [vmem:[#allocation2 + $0x1d8] sm:$0xff] %v1561
    %1813 = vst [vmem:[#allocation2 + $0x1e0] sm:$0xff] %v1648
    %1814 = vst [vmem:[#allocation2 + $0x1e8] sm:$0xff] %v1650
    %1815 = vst [vmem:[#allocation2 + $0x1f0] sm:$0xff] %v1737
    %1816 = vst [vmem:[#allocation2 + $0x1f8] sm:$0xff] %v1739
    %1817 = vst [vmem:[#allocation2 + $0x200] sm:$0xff] %v408
    %1818 = vst [vmem:[#allocation2 + $0x208] sm:$0xff] %v410
    %1819 = vst [vmem:[#allocation2 + $0x210] sm:$0xff] %v497
    %1820 = vst [vmem:[#allocation2 + $0x218] sm:$0xff] %v499
    %1821 = vst [vmem:[#allocation2 + $0x220] sm:$0xff] %v586
    %1822 = vst [vmem:[#allocation2 + $0x228] sm:$0xff] %v588
    %1823 = vst [vmem:[#allocation2 + $0x230] sm:$0xff] %v675
    %1824 = vst [vmem:[#allocation2 + $0x238] sm:$0xff] %v677
    %1825 = vst [vmem:[#allocation2 + $0x240] sm:$0xff] %v764
    %1826 = vst [vmem:[#allocation2 + $0x248] sm:$0xff] %v766
    %1827 = vst [vmem:[#allocation2 + $0x250] sm:$0xff] %v853
    %1828 = vst [vmem:[#allocation2 + $0x258] sm:$0xff] %v855
    %1829 = vst [vmem:[#allocation2 + $0x260] sm:$0xff] %v942
    %1830 = vst [vmem:[#allocation2 + $0x268] sm:$0xff] %v944
    %1831 = vst [vmem:[#allocation2 + $0x270] sm:$0xff] %v1031
    %1832 = vst [vmem:[#allocation2 + $0x278] sm:$0xff] %v1033
    %1833 = vst [vmem:[#allocation2 + $0x280] sm:$0xff] %v1120
    %1834 = vst [vmem:[#allocation2 + $0x288] sm:$0xff] %v1122
    %1835 = vst [vmem:[#allocation2 + $0x290] sm:$0xff] %v1209
    %1836 = vst [vmem:[#allocation2 + $0x298] sm:$0xff] %v1211
    %1837 = vst [vmem:[#allocation2 + $0x2a0] sm:$0xff] %v1298
    %1838 = vst [vmem:[#allocation2 + $0x2a8] sm:$0xff] %v1300
    %1839 = vst [vmem:[#allocation2 + $0x2b0] sm:$0xff] %v1387
    %1840 = vst [vmem:[#allocation2 + $0x2b8] sm:$0xff] %v1389
    %1841 = vst [vmem:[#allocation2 + $0x2c0] sm:$0xff] %v1476
    %1842 = vst [vmem:[#allocation2 + $0x2c8] sm:$0xff] %v1478
    %1843 = vst [vmem:[#allocation2 + $0x2d0] sm:$0xff] %v1565
    %1844 = vst [vmem:[#allocation2 + $0x2d8] sm:$0xff] %v1567
    %1845 = vst [vmem:[#allocation2 + $0x2e0] sm:$0xff] %v1654
    %1846 = vst [vmem:[#allocation2 + $0x2e8] sm:$0xff] %v1656
    %1847 = vst [vmem:[#allocation2 + $0x2f0] sm:$0xff] %v1743
    %1848 = vst [vmem:[#allocation2 + $0x2f8] sm:$0xff] %v1745
    %1849 = vst [vmem:[#allocation2 + $0x300] sm:$0xff] %v414
    %1850 = vst [vmem:[#allocation2 + $0x308] sm:$0xff] %v416
    %1851 = vst [vmem:[#allocation2 + $0x310] sm:$0xff] %v503
    %1852 = vst [vmem:[#allocation2 + $0x318] sm:$0xff] %v505
    %1853 = vst [vmem:[#allocation2 + $0x320] sm:$0xff] %v592
    %1854 = vst [vmem:[#allocation2 + $0x328] sm:$0xff] %v594
    %1855 = vst [vmem:[#allocation2 + $0x330] sm:$0xff] %v681
    %1856 = vst [vmem:[#allocation2 + $0x338] sm:$0xff] %v683
    %1857 = vst [vmem:[#allocation2 + $0x340] sm:$0xff] %v770
    %1858 = vst [vmem:[#allocation2 + $0x348] sm:$0xff] %v772
    %1859 = vst [vmem:[#allocation2 + $0x350] sm:$0xff] %v859
    %1860 = vst [vmem:[#allocation2 + $0x358] sm:$0xff] %v861
    %1861 = vst [vmem:[#allocation2 + $0x360] sm:$0xff] %v948
    %1862 = vst [vmem:[#allocation2 + $0x368] sm:$0xff] %v950
    %1863 = vst [vmem:[#allocation2 + $0x370] sm:$0xff] %v1037
    %1864 = vst [vmem:[#allocation2 + $0x378] sm:$0xff] %v1039
    %1865 = vst [vmem:[#allocation2 + $0x380] sm:$0xff] %v1126
    %1866 = vst [vmem:[#allocation2 + $0x388] sm:$0xff] %v1128
    %1867 = vst [vmem:[#allocation2 + $0x390] sm:$0xff] %v1215
    %1868 = vst [vmem:[#allocation2 + $0x398] sm:$0xff] %v1217
    %1869 = vst [vmem:[#allocation2 + $0x3a0] sm:$0xff] %v1304
    %1870 = vst [vmem:[#allocation2 + $0x3a8] sm:$0xff] %v1306
    %1871 = vst [vmem:[#allocation2 + $0x3b0] sm:$0xff] %v1393
    %1872 = vst [vmem:[#allocation2 + $0x3b8] sm:$0xff] %v1395
    %1873 = vst [vmem:[#allocation2 + $0x3c0] sm:$0xff] %v1482
    %1874 = vst [vmem:[#allocation2 + $0x3c8] sm:$0xff] %v1484
    %1875 = vst [vmem:[#allocation2 + $0x3d0] sm:$0xff] %v1571
    %1876 = vst [vmem:[#allocation2 + $0x3d8] sm:$0xff] %v1573
    %1877 = vst [vmem:[#allocation2 + $0x3e0] sm:$0xff] %v1660
    %1878 = vst [vmem:[#allocation2 + $0x3e8] sm:$0xff] %v1662
    %1879 = vst [vmem:[#allocation2 + $0x3f0] sm:$0xff] %v1749
    %1880 = vst [vmem:[#allocation2 + $0x3f8] sm:$0xff] %v1751
    %v1881 = vld [vmem:[%s2] sm:$0xff]
    %v1882 = vld [vmem:[%s2 + $0x8] sm:$0xff]
    %v1883 = vld [vmem:[%s2 + $0x10] sm:$0xff]
    %v1884 = vld [vmem:[%s2 + $0x18] sm:$0xff]
    %v1885 = vld [vmem:[#allocation3] sm:$0xff]
    %v1886 = vld [vmem:[#allocation3 + $0x8] sm:$0xff]
    %v1887 = vld [vmem:[#allocation3 + $0x10] sm:$0xff]
    %v1888 = vld [vmem:[#allocation3 + $0x18] sm:$0xff]
    %v1889 = vld [vmem:[#allocation3 + $0x20] sm:$0xff]
    %v1890 = vld [vmem:[#allocation3 + $0x28] sm:$0xff]
    %v1891 = vld [vmem:[#allocation3 + $0x30] sm:$0xff]
    %v1892 = vld [vmem:[#allocation3 + $0x38] sm:$0xff]
    %v1893 = vld [vmem:[#allocation3 + $0x40] sm:$0xff]
    %v1894 = vld [vmem:[#allocation3 + $0x48] sm:$0xff]
    %v1895 = vld [vmem:[#allocation3 + $0x50] sm:$0xff]
    %v1896 = vld [vmem:[#allocation3 + $0x58] sm:$0xff]
    %v1897 = vld [vmem:[#allocation3 + $0x60] sm:$0xff]
    %v1898 = vld [vmem:[#allocation3 + $0x68] sm:$0xff]
    %v1899 = vld [vmem:[#allocation3 + $0x70] sm:$0xff]
    %v1900 = vld [vmem:[#allocation3 + $0x78] sm:$0xff]
    %v1901 = vld [vmem:[#allocation2 + $0xe0] sm:$0xff]
    %v1902 = vld [vmem:[#allocation2 + $0xe8] sm:$0xff]
    %v1903 = vld [vmem:[#allocation2 + $0xf0] sm:$0xff]
    %v1904 = vld [vmem:[#allocation2 + $0xf8] sm:$0xff]
    %v1905 = vld [vmem:[#allocation2 + $0x1e0] sm:$0xff]
    %v1906 = vld [vmem:[#allocation2 + $0x1e8] sm:$0xff]
    %v1907 = vld [vmem:[#allocation2 + $0x1f0] sm:$0xff]
    %v1908 = vld [vmem:[#allocation2 + $0x1f8] sm:$0xff]
    %v1909 = vld [vmem:[#allocation2 + $0x2e0] sm:$0xff]
    %v1910 = vld [vmem:[#allocation2 + $0x2e8] sm:$0xff]
    %v1911 = vld [vmem:[#allocation2 + $0x2f0] sm:$0xff]
    %v1912 = vld [vmem:[#allocation2 + $0x2f8] sm:$0xff]
    %v1913 = vld [vmem:[#allocation2 + $0x3e0] sm:$0xff]
    %v1914 = vld [vmem:[#allocation2 + $0x3e8] sm:$0xff]
    %v1915 = vld [vmem:[#allocation2 + $0x3f0] sm:$0xff]
    %v1916 = vld [vmem:[#allocation2 + $0x3f8] sm:$0xff]
    %1918 = vset.pattern.permute.xlu0 0
    %1919 = vperm.xlu0 %1918, %v1881
    %v1920 = vpop.permute.xlu0 %1919
    %1923 = vset.pattern.permute.xlu0 0
    %1924 = vperm.xlu0 %1923, %v1882
    %v1925 = vpop.permute.xlu0 %1924
    %1928 = vset.pattern.permute.xlu0 0
    %1929 = vperm.xlu0 %1928, %v1883
    %v1930 = vpop.permute.xlu0 %1929
    %1933 = vset.pattern.permute.xlu0 0
    %1934 = vperm.xlu0 %1933, %v1884
    %v1935 = vpop.permute.xlu0 %1934
    %v1937 = vmul.f32 %v1920, %v1885
    %v1938 = vmul.f32 %v1920, %v1886
    %v1939 = vmul.f32 %v1920, %v1887
    %v1940 = vmul.f32 %v1920, %v1888
    %v1941 = vmul.f32 %v1925, %v1889
    %v1942 = vmul.f32 %v1925, %v1890
    %v1943 = vmul.f32 %v1925, %v1891
    %v1944 = vmul.f32 %v1925, %v1892
    %v1945 = vmul.f32 %v1930, %v1893
    %v1946 = vmul.f32 %v1930, %v1894
    %v1947 = vmul.f32 %v1930, %v1895
    %v1948 = vmul.f32 %v1930, %v1896
    %v1949 = vmul.f32 %v1935, %v1897
    %v1950 = vmul.f32 %v1935, %v1898
    %v1951 = vmul.f32 %v1935, %v1899
    %v1952 = vmul.f32 %v1935, %v1900
    %1953 = vset.pattern.permute.xlu0 1
    %1954 = vperm.xlu0 %1953, %v1881
    %v1955 = vpop.permute.xlu0 %1954
    %1957 = vset.pattern.permute.xlu0 1
    %1958 = vperm.xlu0 %1957, %v1882
    %v1959 = vpop.permute.xlu0 %1958
    %1961 = vset.pattern.permute.xlu0 1
    %1962 = vperm.xlu0 %1961, %v1883
    %v1963 = vpop.permute.xlu0 %1962
    %1965 = vset.pattern.permute.xlu0 1
    %1966 = vperm.xlu0 %1965, %v1884
    %v1967 = vpop.permute.xlu0 %1966
    %v1969 = vadd.f32 %v1937, %v1955
    %v1970 = vadd.f32 %v1938, %v1955
    %v1971 = vadd.f32 %v1939, %v1955
    %v1972 = vadd.f32 %v1940, %v1955
    %v1973 = vadd.f32 %v1941, %v1959
    %v1974 = vadd.f32 %v1942, %v1959
    %v1975 = vadd.f32 %v1943, %v1959
    %v1976 = vadd.f32 %v1944, %v1959
    %v1977 = vadd.f32 %v1945, %v1963
    %v1978 = vadd.f32 %v1946, %v1963
    %v1979 = vadd.f32 %v1947, %v1963
    %v1980 = vadd.f32 %v1948, %v1963
    %v1981 = vadd.f32 %v1949, %v1967
    %v1982 = vadd.f32 %v1950, %v1967
    %v1983 = vadd.f32 %v1951, %v1967
    %v1984 = vadd.f32 %v1952, %v1967
    %1985 = vset.pattern.permute.xlu0 2
    %1986 = vperm.xlu0 %1985, %v1881
    %v1987 = vpop.permute.xlu0 %1986
    %1989 = vset.pattern.permute.xlu0 2
    %1990 = vperm.xlu0 %1989, %v1882
    %v1991 = vpop.permute.xlu0 %1990
    %1993 = vset.pattern.permute.xlu0 2
    %1994 = vperm.xlu0 %1993, %v1883
    %v1995 = vpop.permute.xlu0 %1994
    %1997 = vset.pattern.permute.xlu0 2
    %1998 = vperm.xlu0 %1997, %v1884
    %v1999 = vpop.permute.xlu0 %1998
    %v2001 = vmul.f32 %v1901, %v1987
    %v2002 = vmul.f32 %v1902, %v1987
    %v2003 = vmul.f32 %v1903, %v1987
    %v2004 = vmul.f32 %v1904, %v1987
    %v2005 = vmul.f32 %v1905, %v1991
    %v2006 = vmul.f32 %v1906, %v1991
    %v2007 = vmul.f32 %v1907, %v1991
    %v2008 = vmul.f32 %v1908, %v1991
    %v2009 = vmul.f32 %v1909, %v1995
    %v2010 = vmul.f32 %v1910, %v1995
    %v2011 = vmul.f32 %v1911, %v1995
    %v2012 = vmul.f32 %v1912, %v1995
    %v2013 = vmul.f32 %v1913, %v1999
    %v2014 = vmul.f32 %v1914, %v1999
    %v2015 = vmul.f32 %v1915, %v1999
    %v2016 = vmul.f32 %v1916, %v1999
    %v2017 = vadd.f32 %v1969, %v2001
    %v2018 = vadd.f32 %v1970, %v2002
    %v2019 = vadd.f32 %v1971, %v2003
    %v2020 = vadd.f32 %v1972, %v2004
    %v2021 = vadd.f32 %v1973, %v2005
    %v2022 = vadd.f32 %v1974, %v2006
    %v2023 = vadd.f32 %v1975, %v2007
    %v2024 = vadd.f32 %v1976, %v2008
    %v2025 = vadd.f32 %v1977, %v2009
    %v2026 = vadd.f32 %v1978, %v2010
    %v2027 = vadd.f32 %v1979, %v2011
    %v2028 = vadd.f32 %v1980, %v2012
    %v2029 = vadd.f32 %v1981, %v2013
    %v2030 = vadd.f32 %v1982, %v2014
    %v2031 = vadd.f32 %v1983, %v2015
    %v2032 = vadd.f32 %v1984, %v2016
    %2033 = vset.pattern.permute.xlu0 3
    %2034 = vperm.xlu0 %2033, %v1881
    %v2035 = vpop.permute.xlu0 %2034
    %2037 = vset.pattern.permute.xlu0 3
    %2038 = vperm.xlu0 %2037, %v1882
    %v2039 = vpop.permute.xlu0 %2038
    %2041 = vset.pattern.permute.xlu0 3
    %2042 = vperm.xlu0 %2041, %v1883
    %v2043 = vpop.permute.xlu0 %2042
    %2045 = vset.pattern.permute.xlu0 3
    %2046 = vperm.xlu0 %2045, %v1884
    %v2047 = vpop.permute.xlu0 %2046
    %v2049 = vadd.f32 %v2035, %v1901
    %v2050 = vadd.f32 %v2035, %v1902
    %v2051 = vadd.f32 %v2035, %v1903
    %v2052 = vadd.f32 %v2035, %v1904
    %v2053 = vadd.f32 %v2039, %v1905
    %v2054 = vadd.f32 %v2039, %v1906
    %v2055 = vadd.f32 %v2039, %v1907
    %v2056 = vadd.f32 %v2039, %v1908
    %v2057 = vadd.f32 %v2043, %v1909
    %v2058 = vadd.f32 %v2043, %v1910
    %v2059 = vadd.f32 %v2043, %v1911
    %v2060 = vadd.f32 %v2043, %v1912
    %v2061 = vadd.f32 %v2047, %v1913
    %v2062 = vadd.f32 %v2047, %v1914
    %v2063 = vadd.f32 %v2047, %v1915
    %v2064 = vadd.f32 %v2047, %v1916
    %v2065 = vadd.f32 %v2049, 1e-08
    %v2066 = vadd.f32 %v2050, 1e-08
    %v2067 = vadd.f32 %v2051, 1e-08
    %v2068 = vadd.f32 %v2052, 1e-08
    %v2069 = vadd.f32 %v2053, 1e-08
    %v2070 = vadd.f32 %v2054, 1e-08
    %v2071 = vadd.f32 %v2055, 1e-08
    %v2072 = vadd.f32 %v2056, 1e-08
    %v2073 = vadd.f32 %v2057, 1e-08
    %v2074 = vadd.f32 %v2058, 1e-08
    %v2075 = vadd.f32 %v2059, 1e-08
    %v2076 = vadd.f32 %v2060, 1e-08
    %v2077 = vadd.f32 %v2061, 1e-08
    %v2078 = vadd.f32 %v2062, 1e-08
    %v2079 = vadd.f32 %v2063, 1e-08
    %v2080 = vadd.f32 %v2064, 1e-08
    %v2081 = vrcp.pop %v2065
    %v2082 = vmul.f32 %v2017, %v2081
    %v2083 = vrcp.pop %v2066
    %v2084 = vmul.f32 %v2018, %v2083
    %v2085 = vrcp.pop %v2067
    %v2086 = vmul.f32 %v2019, %v2085
    %v2087 = vrcp.pop %v2068
    %v2088 = vmul.f32 %v2020, %v2087
    %v2089 = vrcp.pop %v2069
    %v2090 = vmul.f32 %v2021, %v2089
    %v2091 = vrcp.pop %v2070
    %v2092 = vmul.f32 %v2022, %v2091
    %v2093 = vrcp.pop %v2071
    %v2094 = vmul.f32 %v2023, %v2093
    %v2095 = vrcp.pop %v2072
    %v2096 = vmul.f32 %v2024, %v2095
    %v2097 = vrcp.pop %v2073
    %v2098 = vmul.f32 %v2025, %v2097
    %v2099 = vrcp.pop %v2074
    %v2100 = vmul.f32 %v2026, %v2099
    %v2101 = vrcp.pop %v2075
    %v2102 = vmul.f32 %v2027, %v2101
    %v2103 = vrcp.pop %v2076
    %v2104 = vmul.f32 %v2028, %v2103
    %v2105 = vrcp.pop %v2077
    %v2106 = vmul.f32 %v2029, %v2105
    %v2107 = vrcp.pop %v2078
    %v2108 = vmul.f32 %v2030, %v2107
    %v2109 = vrcp.pop %v2079
    %v2110 = vmul.f32 %v2031, %v2109
    %v2111 = vrcp.pop %v2080
    %v2112 = vmul.f32 %v2032, %v2111
    %v2113 = vxor.u32 %v2082, 2147483648
    %v2114 = vxor.u32 %v2084, 2147483648
    %v2115 = vxor.u32 %v2086, 2147483648
    %v2116 = vxor.u32 %v2088, 2147483648
    %v2117 = vxor.u32 %v2090, 2147483648
    %v2118 = vxor.u32 %v2092, 2147483648
    %v2119 = vxor.u32 %v2094, 2147483648
    %v2120 = vxor.u32 %v2096, 2147483648
    %v2121 = vxor.u32 %v2098, 2147483648
    %v2122 = vxor.u32 %v2100, 2147483648
    %v2123 = vxor.u32 %v2102, 2147483648
    %v2124 = vxor.u32 %v2104, 2147483648
    %v2125 = vxor.u32 %v2106, 2147483648
    %v2126 = vxor.u32 %v2108, 2147483648
    %v2127 = vxor.u32 %v2110, 2147483648
    %v2128 = vxor.u32 %v2112, 2147483648
    %v2129 = vmul.f32 %v2113, 1.442695
    %v2130 = vpow.pop %v2129
    %v2131 = vmul.f32 %v2114, 1.442695
    %v2132 = vpow.pop %v2131
    %v2133 = vmul.f32 %v2115, 1.442695
    %v2134 = vpow.pop %v2133
    %v2135 = vmul.f32 %v2116, 1.442695
    %v2136 = vpow.pop %v2135
    %v2137 = vmul.f32 %v2117, 1.442695
    %v2138 = vpow.pop %v2137
    %v2139 = vmul.f32 %v2118, 1.442695
    %v2140 = vpow.pop %v2139
    %v2141 = vmul.f32 %v2119, 1.442695
    %v2142 = vpow.pop %v2141
    %v2143 = vmul.f32 %v2120, 1.442695
    %v2144 = vpow.pop %v2143
    %v2145 = vmul.f32 %v2121, 1.442695
    %v2146 = vpow.pop %v2145
    %v2147 = vmul.f32 %v2122, 1.442695
    %v2148 = vpow.pop %v2147
    %v2149 = vmul.f32 %v2123, 1.442695
    %v2150 = vpow.pop %v2149
    %v2151 = vmul.f32 %v2124, 1.442695
    %v2152 = vpow.pop %v2151
    %v2153 = vmul.f32 %v2125, 1.442695
    %v2154 = vpow.pop %v2153
    %v2155 = vmul.f32 %v2126, 1.442695
    %v2156 = vpow.pop %v2155
    %v2157 = vmul.f32 %v2127, 1.442695
    %v2158 = vpow.pop %v2157
    %v2159 = vmul.f32 %v2128, 1.442695
    %v2160 = vpow.pop %v2159
    %v2161 = vadd.f32 %v2130, 1.0
    %v2162 = vadd.f32 %v2132, 1.0
    %v2163 = vadd.f32 %v2134, 1.0
    %v2164 = vadd.f32 %v2136, 1.0
    %v2165 = vadd.f32 %v2138, 1.0
    %v2166 = vadd.f32 %v2140, 1.0
    %v2167 = vadd.f32 %v2142, 1.0
    %v2168 = vadd.f32 %v2144, 1.0
    %v2169 = vadd.f32 %v2146, 1.0
    %v2170 = vadd.f32 %v2148, 1.0
    %v2171 = vadd.f32 %v2150, 1.0
    %v2172 = vadd.f32 %v2152, 1.0
    %v2173 = vadd.f32 %v2154, 1.0
    %v2174 = vadd.f32 %v2156, 1.0
    %v2175 = vadd.f32 %v2158, 1.0
    %v2176 = vadd.f32 %v2160, 1.0
    %v2177 = vrcp.pop %v2161
    %v2178 = vmul.f32 1.0, %v2177
    %v2179 = vrcp.pop %v2162
    %v2180 = vmul.f32 1.0, %v2179
    %v2181 = vrcp.pop %v2163
    %v2182 = vmul.f32 1.0, %v2181
    %v2183 = vrcp.pop %v2164
    %v2184 = vmul.f32 1.0, %v2183
    %v2185 = vrcp.pop %v2165
    %v2186 = vmul.f32 1.0, %v2185
    %v2187 = vrcp.pop %v2166
    %v2188 = vmul.f32 1.0, %v2187
    %v2189 = vrcp.pop %v2167
    %v2190 = vmul.f32 1.0, %v2189
    %v2191 = vrcp.pop %v2168
    %v2192 = vmul.f32 1.0, %v2191
    %v2193 = vrcp.pop %v2169
    %v2194 = vmul.f32 1.0, %v2193
    %v2195 = vrcp.pop %v2170
    %v2196 = vmul.f32 1.0, %v2195
    %v2197 = vrcp.pop %v2171
    %v2198 = vmul.f32 1.0, %v2197
    %v2199 = vrcp.pop %v2172
    %v2200 = vmul.f32 1.0, %v2199
    %v2201 = vrcp.pop %v2173
    %v2202 = vmul.f32 1.0, %v2201
    %v2203 = vrcp.pop %v2174
    %v2204 = vmul.f32 1.0, %v2203
    %v2205 = vrcp.pop %v2175
    %v2206 = vmul.f32 1.0, %v2205
    %v2207 = vrcp.pop %v2176
    %v2208 = vmul.f32 1.0, %v2207
    %v2209 = vld [vmem:[#allocation2 + $0xc0] sm:$0xff]
    %v2210 = vld [vmem:[#allocation2 + $0xc8] sm:$0xff]
    %v2211 = vld [vmem:[#allocation2 + $0xd0] sm:$0xff]
    %v2212 = vld [vmem:[#allocation2 + $0xd8] sm:$0xff]
    %v2213 = vld [vmem:[#allocation2 + $0x1c0] sm:$0xff]
    %v2214 = vld [vmem:[#allocation2 + $0x1c8] sm:$0xff]
    %v2215 = vld [vmem:[#allocation2 + $0x1d0] sm:$0xff]
    %v2216 = vld [vmem:[#allocation2 + $0x1d8] sm:$0xff]
    %v2217 = vld [vmem:[#allocation2 + $0x2c0] sm:$0xff]
    %v2218 = vld [vmem:[#allocation2 + $0x2c8] sm:$0xff]
    %v2219 = vld [vmem:[#allocation2 + $0x2d0] sm:$0xff]
    %v2220 = vld [vmem:[#allocation2 + $0x2d8] sm:$0xff]
    %v2221 = vld [vmem:[#allocation2 + $0x3c0] sm:$0xff]
    %v2222 = vld [vmem:[#allocation2 + $0x3c8] sm:$0xff]
    %v2223 = vld [vmem:[#allocation2 + $0x3d0] sm:$0xff]
    %v2224 = vld [vmem:[#allocation2 + $0x3d8] sm:$0xff]
    %v2225 = vmul.f32 %v1920, %v2178
    %v2226 = vmul.f32 %v1920, %v2180
    %v2227 = vmul.f32 %v1920, %v2182
    %v2228 = vmul.f32 %v1920, %v2184
    %v2229 = vmul.f32 %v1925, %v2186
    %v2230 = vmul.f32 %v1925, %v2188
    %v2231 = vmul.f32 %v1925, %v2190
    %v2232 = vmul.f32 %v1925, %v2192
    %v2233 = vmul.f32 %v1930, %v2194
    %v2234 = vmul.f32 %v1930, %v2196
    %v2235 = vmul.f32 %v1930, %v2198
    %v2236 = vmul.f32 %v1930, %v2200
    %v2237 = vmul.f32 %v1935, %v2202
    %v2238 = vmul.f32 %v1935, %v2204
    %v2239 = vmul.f32 %v1935, %v2206
    %v2240 = vmul.f32 %v1935, %v2208
    %v2241 = vadd.f32 %v2225, %v1955
    %v2242 = vadd.f32 %v2226, %v1955
    %v2243 = vadd.f32 %v2227, %v1955
    %v2244 = vadd.f32 %v2228, %v1955
    %v2245 = vadd.f32 %v2229, %v1959
    %v2246 = vadd.f32 %v2230, %v1959
    %v2247 = vadd.f32 %v2231, %v1959
    %v2248 = vadd.f32 %v2232, %v1959
    %v2249 = vadd.f32 %v2233, %v1963
    %v2250 = vadd.f32 %v2234, %v1963
    %v2251 = vadd.f32 %v2235, %v1963
    %v2252 = vadd.f32 %v2236, %v1963
    %v2253 = vadd.f32 %v2237, %v1967
    %v2254 = vadd.f32 %v2238, %v1967
    %v2255 = vadd.f32 %v2239, %v1967
    %v2256 = vadd.f32 %v2240, %v1967
    %v2257 = vmul.f32 %v2209, %v1987
    %v2258 = vmul.f32 %v2210, %v1987
    %v2259 = vmul.f32 %v2211, %v1987
    %v2260 = vmul.f32 %v2212, %v1987
    %v2261 = vmul.f32 %v2213, %v1991
    %v2262 = vmul.f32 %v2214, %v1991
    %v2263 = vmul.f32 %v2215, %v1991
    %v2264 = vmul.f32 %v2216, %v1991
    %v2265 = vmul.f32 %v2217, %v1995
    %v2266 = vmul.f32 %v2218, %v1995
    %v2267 = vmul.f32 %v2219, %v1995
    %v2268 = vmul.f32 %v2220, %v1995
    %v2269 = vmul.f32 %v2221, %v1999
    %v2270 = vmul.f32 %v2222, %v1999
    %v2271 = vmul.f32 %v2223, %v1999
    %v2272 = vmul.f32 %v2224, %v1999
    %v2273 = vadd.f32 %v2241, %v2257
    %v2274 = vadd.f32 %v2242, %v2258
    %v2275 = vadd.f32 %v2243, %v2259
    %v2276 = vadd.f32 %v2244, %v2260
    %v2277 = vadd.f32 %v2245, %v2261
    %v2278 = vadd.f32 %v2246, %v2262
    %v2279 = vadd.f32 %v2247, %v2263
    %v2280 = vadd.f32 %v2248, %v2264
    %v2281 = vadd.f32 %v2249, %v2265
    %v2282 = vadd.f32 %v2250, %v2266
    %v2283 = vadd.f32 %v2251, %v2267
    %v2284 = vadd.f32 %v2252, %v2268
    %v2285 = vadd.f32 %v2253, %v2269
    %v2286 = vadd.f32 %v2254, %v2270
    %v2287 = vadd.f32 %v2255, %v2271
    %v2288 = vadd.f32 %v2256, %v2272
    %v2289 = vadd.f32 %v2035, %v2209
    %v2290 = vadd.f32 %v2035, %v2210
    %v2291 = vadd.f32 %v2035, %v2211
    %v2292 = vadd.f32 %v2035, %v2212
    %v2293 = vadd.f32 %v2039, %v2213
    %v2294 = vadd.f32 %v2039, %v2214
    %v2295 = vadd.f32 %v2039, %v2215
    %v2296 = vadd.f32 %v2039, %v2216
    %v2297 = vadd.f32 %v2043, %v2217
    %v2298 = vadd.f32 %v2043, %v2218
    %v2299 = vadd.f32 %v2043, %v2219
    %v2300 = vadd.f32 %v2043, %v2220
    %v2301 = vadd.f32 %v2047, %v2221
    %v2302 = vadd.f32 %v2047, %v2222
    %v2303 = vadd.f32 %v2047, %v2223
    %v2304 = vadd.f32 %v2047, %v2224
    %v2305 = vadd.f32 %v2289, 1e-08
    %v2306 = vadd.f32 %v2290, 1e-08
    %v2307 = vadd.f32 %v2291, 1e-08
    %v2308 = vadd.f32 %v2292, 1e-08
    %v2309 = vadd.f32 %v2293, 1e-08
    %v2310 = vadd.f32 %v2294, 1e-08
    %v2311 = vadd.f32 %v2295, 1e-08
    %v2312 = vadd.f32 %v2296, 1e-08
    %v2313 = vadd.f32 %v2297, 1e-08
    %v2314 = vadd.f32 %v2298, 1e-08
    %v2315 = vadd.f32 %v2299, 1e-08
    %v2316 = vadd.f32 %v2300, 1e-08
    %v2317 = vadd.f32 %v2301, 1e-08
    %v2318 = vadd.f32 %v2302, 1e-08
    %v2319 = vadd.f32 %v2303, 1e-08
    %v2320 = vadd.f32 %v2304, 1e-08
    %v2321 = vrcp.pop %v2305
    %v2322 = vmul.f32 %v2273, %v2321
    %v2323 = vrcp.pop %v2306
    %v2324 = vmul.f32 %v2274, %v2323
    %v2325 = vrcp.pop %v2307
    %v2326 = vmul.f32 %v2275, %v2325
    %v2327 = vrcp.pop %v2308
    %v2328 = vmul.f32 %v2276, %v2327
    %v2329 = vrcp.pop %v2309
    %v2330 = vmul.f32 %v2277, %v2329
    %v2331 = vrcp.pop %v2310
    %v2332 = vmul.f32 %v2278, %v2331
    %v2333 = vrcp.pop %v2311
    %v2334 = vmul.f32 %v2279, %v2333
    %v2335 = vrcp.pop %v2312
    %v2336 = vmul.f32 %v2280, %v2335
    %v2337 = vrcp.pop %v2313
    %v2338 = vmul.f32 %v2281, %v2337
    %v2339 = vrcp.pop %v2314
    %v2340 = vmul.f32 %v2282, %v2339
    %v2341 = vrcp.pop %v2315
    %v2342 = vmul.f32 %v2283, %v2341
    %v2343 = vrcp.pop %v2316
    %v2344 = vmul.f32 %v2284, %v2343
    %v2345 = vrcp.pop %v2317
    %v2346 = vmul.f32 %v2285, %v2345
    %v2347 = vrcp.pop %v2318
    %v2348 = vmul.f32 %v2286, %v2347
    %v2349 = vrcp.pop %v2319
    %v2350 = vmul.f32 %v2287, %v2349
    %v2351 = vrcp.pop %v2320
    %v2352 = vmul.f32 %v2288, %v2351
    %v2353 = vxor.u32 %v2322, 2147483648
    %v2354 = vxor.u32 %v2324, 2147483648
    %v2355 = vxor.u32 %v2326, 2147483648
    %v2356 = vxor.u32 %v2328, 2147483648
    %v2357 = vxor.u32 %v2330, 2147483648
    %v2358 = vxor.u32 %v2332, 2147483648
    %v2359 = vxor.u32 %v2334, 2147483648
    %v2360 = vxor.u32 %v2336, 2147483648
    %v2361 = vxor.u32 %v2338, 2147483648
    %v2362 = vxor.u32 %v2340, 2147483648
    %v2363 = vxor.u32 %v2342, 2147483648
    %v2364 = vxor.u32 %v2344, 2147483648
    %v2365 = vxor.u32 %v2346, 2147483648
    %v2366 = vxor.u32 %v2348, 2147483648
    %v2367 = vxor.u32 %v2350, 2147483648
    %v2368 = vxor.u32 %v2352, 2147483648
    %v2369 = vmul.f32 %v2353, 1.442695
    %v2370 = vpow.pop %v2369
    %v2371 = vmul.f32 %v2354, 1.442695
    %v2372 = vpow.pop %v2371
    %v2373 = vmul.f32 %v2355, 1.442695
    %v2374 = vpow.pop %v2373
    %v2375 = vmul.f32 %v2356, 1.442695
    %v2376 = vpow.pop %v2375
    %v2377 = vmul.f32 %v2357, 1.442695
    %v2378 = vpow.pop %v2377
    %v2379 = vmul.f32 %v2358, 1.442695
    %v2380 = vpow.pop %v2379
    %v2381 = vmul.f32 %v2359, 1.442695
    %v2382 = vpow.pop %v2381
    %v2383 = vmul.f32 %v2360, 1.442695
    %v2384 = vpow.pop %v2383
    %v2385 = vmul.f32 %v2361, 1.442695
    %v2386 = vpow.pop %v2385
    %v2387 = vmul.f32 %v2362, 1.442695
    %v2388 = vpow.pop %v2387
    %v2389 = vmul.f32 %v2363, 1.442695
    %v2390 = vpow.pop %v2389
    %v2391 = vmul.f32 %v2364, 1.442695
    %v2392 = vpow.pop %v2391
    %v2393 = vmul.f32 %v2365, 1.442695
    %v2394 = vpow.pop %v2393
    %v2395 = vmul.f32 %v2366, 1.442695
    %v2396 = vpow.pop %v2395
    %v2397 = vmul.f32 %v2367, 1.442695
    %v2398 = vpow.pop %v2397
    %v2399 = vmul.f32 %v2368, 1.442695
    %v2400 = vpow.pop %v2399
    %v2401 = vadd.f32 %v2370, 1.0
    %v2402 = vadd.f32 %v2372, 1.0
    %v2403 = vadd.f32 %v2374, 1.0
    %v2404 = vadd.f32 %v2376, 1.0
    %v2405 = vadd.f32 %v2378, 1.0
    %v2406 = vadd.f32 %v2380, 1.0
    %v2407 = vadd.f32 %v2382, 1.0
    %v2408 = vadd.f32 %v2384, 1.0
    %v2409 = vadd.f32 %v2386, 1.0
    %v2410 = vadd.f32 %v2388, 1.0
    %v2411 = vadd.f32 %v2390, 1.0
    %v2412 = vadd.f32 %v2392, 1.0
    %v2413 = vadd.f32 %v2394, 1.0
    %v2414 = vadd.f32 %v2396, 1.0
    %v2415 = vadd.f32 %v2398, 1.0
    %v2416 = vadd.f32 %v2400, 1.0
    %v2417 = vrcp.pop %v2401
    %v2418 = vmul.f32 1.0, %v2417
    %v2419 = vrcp.pop %v2402
    %v2420 = vmul.f32 1.0, %v2419
    %v2421 = vrcp.pop %v2403
    %v2422 = vmul.f32 1.0, %v2421
    %v2423 = vrcp.pop %v2404
    %v2424 = vmul.f32 1.0, %v2423
    %v2425 = vrcp.pop %v2405
    %v2426 = vmul.f32 1.0, %v2425
    %v2427 = vrcp.pop %v2406
    %v2428 = vmul.f32 1.0, %v2427
    %v2429 = vrcp.pop %v2407
    %v2430 = vmul.f32 1.0, %v2429
    %v2431 = vrcp.pop %v2408
    %v2432 = vmul.f32 1.0, %v2431
    %v2433 = vrcp.pop %v2409
    %v2434 = vmul.f32 1.0, %v2433
    %v2435 = vrcp.pop %v2410
    %v2436 = vmul.f32 1.0, %v2435
    %v2437 = vrcp.pop %v2411
    %v2438 = vmul.f32 1.0, %v2437
    %v2439 = vrcp.pop %v2412
    %v2440 = vmul.f32 1.0, %v2439
    %v2441 = vrcp.pop %v2413
    %v2442 = vmul.f32 1.0, %v2441
    %v2443 = vrcp.pop %v2414
    %v2444 = vmul.f32 1.0, %v2443
    %v2445 = vrcp.pop %v2415
    %v2446 = vmul.f32 1.0, %v2445
    %v2447 = vrcp.pop %v2416
    %v2448 = vmul.f32 1.0, %v2447
    %v2449 = vld [vmem:[#allocation2 + $0xa0] sm:$0xff]
    %v2450 = vld [vmem:[#allocation2 + $0xa8] sm:$0xff]
    %v2451 = vld [vmem:[#allocation2 + $0xb0] sm:$0xff]
    %v2452 = vld [vmem:[#allocation2 + $0xb8] sm:$0xff]
    %v2453 = vld [vmem:[#allocation2 + $0x1a0] sm:$0xff]
    %v2454 = vld [vmem:[#allocation2 + $0x1a8] sm:$0xff]
    %v2455 = vld [vmem:[#allocation2 + $0x1b0] sm:$0xff]
    %v2456 = vld [vmem:[#allocation2 + $0x1b8] sm:$0xff]
    %v2457 = vld [vmem:[#allocation2 + $0x2a0] sm:$0xff]
    %v2458 = vld [vmem:[#allocation2 + $0x2a8] sm:$0xff]
    %v2459 = vld [vmem:[#allocation2 + $0x2b0] sm:$0xff]
    %v2460 = vld [vmem:[#allocation2 + $0x2b8] sm:$0xff]
    %v2461 = vld [vmem:[#allocation2 + $0x3a0] sm:$0xff]
    %v2462 = vld [vmem:[#allocation2 + $0x3a8] sm:$0xff]
    %v2463 = vld [vmem:[#allocation2 + $0x3b0] sm:$0xff]
    %v2464 = vld [vmem:[#allocation2 + $0x3b8] sm:$0xff]
    %v2465 = vmul.f32 %v1920, %v2418
    %v2466 = vmul.f32 %v1920, %v2420
    %v2467 = vmul.f32 %v1920, %v2422
    %v2468 = vmul.f32 %v1920, %v2424
    %v2469 = vmul.f32 %v1925, %v2426
    %v2470 = vmul.f32 %v1925, %v2428
    %v2471 = vmul.f32 %v1925, %v2430
    %v2472 = vmul.f32 %v1925, %v2432
    %v2473 = vmul.f32 %v1930, %v2434
    %v2474 = vmul.f32 %v1930, %v2436
    %v2475 = vmul.f32 %v1930, %v2438
    %v2476 = vmul.f32 %v1930, %v2440
    %v2477 = vmul.f32 %v1935, %v2442
    %v2478 = vmul.f32 %v1935, %v2444
    %v2479 = vmul.f32 %v1935, %v2446
    %v2480 = vmul.f32 %v1935, %v2448
    %v2481 = vadd.f32 %v2465, %v1955
    %v2482 = vadd.f32 %v2466, %v1955
    %v2483 = vadd.f32 %v2467, %v1955
    %v2484 = vadd.f32 %v2468, %v1955
    %v2485 = vadd.f32 %v2469, %v1959
    %v2486 = vadd.f32 %v2470, %v1959
    %v2487 = vadd.f32 %v2471, %v1959
    %v2488 = vadd.f32 %v2472, %v1959
    %v2489 = vadd.f32 %v2473, %v1963
    %v2490 = vadd.f32 %v2474, %v1963
    %v2491 = vadd.f32 %v2475, %v1963
    %v2492 = vadd.f32 %v2476, %v1963
    %v2493 = vadd.f32 %v2477, %v1967
    %v2494 = vadd.f32 %v2478, %v1967
    %v2495 = vadd.f32 %v2479, %v1967
    %v2496 = vadd.f32 %v2480, %v1967
    %v2497 = vmul.f32 %v2449, %v1987
    %v2498 = vmul.f32 %v2450, %v1987
    %v2499 = vmul.f32 %v2451, %v1987
    %v2500 = vmul.f32 %v2452, %v1987
    %v2501 = vmul.f32 %v2453, %v1991
    %v2502 = vmul.f32 %v2454, %v1991
    %v2503 = vmul.f32 %v2455, %v1991
    %v2504 = vmul.f32 %v2456, %v1991
    %v2505 = vmul.f32 %v2457, %v1995
    %v2506 = vmul.f32 %v2458, %v1995
    %v2507 = vmul.f32 %v2459, %v1995
    %v2508 = vmul.f32 %v2460, %v1995
    %v2509 = vmul.f32 %v2461, %v1999
    %v2510 = vmul.f32 %v2462, %v1999
    %v2511 = vmul.f32 %v2463, %v1999
    %v2512 = vmul.f32 %v2464, %v1999
    %v2513 = vadd.f32 %v2481, %v2497
    %v2514 = vadd.f32 %v2482, %v2498
    %v2515 = vadd.f32 %v2483, %v2499
    %v2516 = vadd.f32 %v2484, %v2500
    %v2517 = vadd.f32 %v2485, %v2501
    %v2518 = vadd.f32 %v2486, %v2502
    %v2519 = vadd.f32 %v2487, %v2503
    %v2520 = vadd.f32 %v2488, %v2504
    %v2521 = vadd.f32 %v2489, %v2505
    %v2522 = vadd.f32 %v2490, %v2506
    %v2523 = vadd.f32 %v2491, %v2507
    %v2524 = vadd.f32 %v2492, %v2508
    %v2525 = vadd.f32 %v2493, %v2509
    %v2526 = vadd.f32 %v2494, %v2510
    %v2527 = vadd.f32 %v2495, %v2511
    %v2528 = vadd.f32 %v2496, %v2512
    %v2529 = vadd.f32 %v2035, %v2449
    %v2530 = vadd.f32 %v2035, %v2450
    %v2531 = vadd.f32 %v2035, %v2451
    %v2532 = vadd.f32 %v2035, %v2452
    %v2533 = vadd.f32 %v2039, %v2453
    %v2534 = vadd.f32 %v2039, %v2454
    %v2535 = vadd.f32 %v2039, %v2455
    %v2536 = vadd.f32 %v2039, %v2456
    %v2537 = vadd.f32 %v2043, %v2457
    %v2538 = vadd.f32 %v2043, %v2458
    %v2539 = vadd.f32 %v2043, %v2459
    %v2540 = vadd.f32 %v2043, %v2460
    %v2541 = vadd.f32 %v2047, %v2461
    %v2542 = vadd.f32 %v2047, %v2462
    %v2543 = vadd.f32 %v2047, %v2463
    %v2544 = vadd.f32 %v2047, %v2464
    %v2545 = vadd.f32 %v2529, 1e-08
    %v2546 = vadd.f32 %v2530, 1e-08
    %v2547 = vadd.f32 %v2531, 1e-08
    %v2548 = vadd.f32 %v2532, 1e-08
    %v2549 = vadd.f32 %v2533, 1e-08
    %v2550 = vadd.f32 %v2534, 1e-08
    %v2551 = vadd.f32 %v2535, 1e-08
    %v2552 = vadd.f32 %v2536, 1e-08
    %v2553 = vadd.f32 %v2537, 1e-08
    %v2554 = vadd.f32 %v2538, 1e-08
    %v2555 = vadd.f32 %v2539, 1e-08
    %v2556 = vadd.f32 %v2540, 1e-08
    %v2557 = vadd.f32 %v2541, 1e-08
    %v2558 = vadd.f32 %v2542, 1e-08
    %v2559 = vadd.f32 %v2543, 1e-08
    %v2560 = vadd.f32 %v2544, 1e-08
    %v2561 = vrcp.pop %v2545
    %v2562 = vmul.f32 %v2513, %v2561
    %v2563 = vrcp.pop %v2546
    %v2564 = vmul.f32 %v2514, %v2563
    %v2565 = vrcp.pop %v2547
    %v2566 = vmul.f32 %v2515, %v2565
    %v2567 = vrcp.pop %v2548
    %v2568 = vmul.f32 %v2516, %v2567
    %v2569 = vrcp.pop %v2549
    %v2570 = vmul.f32 %v2517, %v2569
    %v2571 = vrcp.pop %v2550
    %v2572 = vmul.f32 %v2518, %v2571
    %v2573 = vrcp.pop %v2551
    %v2574 = vmul.f32 %v2519, %v2573
    %v2575 = vrcp.pop %v2552
    %v2576 = vmul.f32 %v2520, %v2575
    %v2577 = vrcp.pop %v2553
    %v2578 = vmul.f32 %v2521, %v2577
    %v2579 = vrcp.pop %v2554
    %v2580 = vmul.f32 %v2522, %v2579
    %v2581 = vrcp.pop %v2555
    %v2582 = vmul.f32 %v2523, %v2581
    %v2583 = vrcp.pop %v2556
    %v2584 = vmul.f32 %v2524, %v2583
    %v2585 = vrcp.pop %v2557
    %v2586 = vmul.f32 %v2525, %v2585
    %v2587 = vrcp.pop %v2558
    %v2588 = vmul.f32 %v2526, %v2587
    %v2589 = vrcp.pop %v2559
    %v2590 = vmul.f32 %v2527, %v2589
    %v2591 = vrcp.pop %v2560
    %v2592 = vmul.f32 %v2528, %v2591
    %v2593 = vxor.u32 %v2562, 2147483648
    %v2594 = vxor.u32 %v2564, 2147483648
    %v2595 = vxor.u32 %v2566, 2147483648
    %v2596 = vxor.u32 %v2568, 2147483648
    %v2597 = vxor.u32 %v2570, 2147483648
    %v2598 = vxor.u32 %v2572, 2147483648
    %v2599 = vxor.u32 %v2574, 2147483648
    %v2600 = vxor.u32 %v2576, 2147483648
    %v2601 = vxor.u32 %v2578, 2147483648
    %v2602 = vxor.u32 %v2580, 2147483648
    %v2603 = vxor.u32 %v2582, 2147483648
    %v2604 = vxor.u32 %v2584, 2147483648
    %v2605 = vxor.u32 %v2586, 2147483648
    %v2606 = vxor.u32 %v2588, 2147483648
    %v2607 = vxor.u32 %v2590, 2147483648
    %v2608 = vxor.u32 %v2592, 2147483648
    %v2609 = vmul.f32 %v2593, 1.442695
    %v2610 = vpow.pop %v2609
    %v2611 = vmul.f32 %v2594, 1.442695
    %v2612 = vpow.pop %v2611
    %v2613 = vmul.f32 %v2595, 1.442695
    %v2614 = vpow.pop %v2613
    %v2615 = vmul.f32 %v2596, 1.442695
    %v2616 = vpow.pop %v2615
    %v2617 = vmul.f32 %v2597, 1.442695
    %v2618 = vpow.pop %v2617
    %v2619 = vmul.f32 %v2598, 1.442695
    %v2620 = vpow.pop %v2619
    %v2621 = vmul.f32 %v2599, 1.442695
    %v2622 = vpow.pop %v2621
    %v2623 = vmul.f32 %v2600, 1.442695
    %v2624 = vpow.pop %v2623
    %v2625 = vmul.f32 %v2601, 1.442695
    %v2626 = vpow.pop %v2625
    %v2627 = vmul.f32 %v2602, 1.442695
    %v2628 = vpow.pop %v2627
    %v2629 = vmul.f32 %v2603, 1.442695
    %v2630 = vpow.pop %v2629
    %v2631 = vmul.f32 %v2604, 1.442695
    %v2632 = vpow.pop %v2631
    %v2633 = vmul.f32 %v2605, 1.442695
    %v2634 = vpow.pop %v2633
    %v2635 = vmul.f32 %v2606, 1.442695
    %v2636 = vpow.pop %v2635
    %v2637 = vmul.f32 %v2607, 1.442695
    %v2638 = vpow.pop %v2637
    %v2639 = vmul.f32 %v2608, 1.442695
    %v2640 = vpow.pop %v2639
    %v2641 = vadd.f32 %v2610, 1.0
    %v2642 = vadd.f32 %v2612, 1.0
    %v2643 = vadd.f32 %v2614, 1.0
    %v2644 = vadd.f32 %v2616, 1.0
    %v2645 = vadd.f32 %v2618, 1.0
    %v2646 = vadd.f32 %v2620, 1.0
    %v2647 = vadd.f32 %v2622, 1.0
    %v2648 = vadd.f32 %v2624, 1.0
    %v2649 = vadd.f32 %v2626, 1.0
    %v2650 = vadd.f32 %v2628, 1.0
    %v2651 = vadd.f32 %v2630, 1.0
    %v2652 = vadd.f32 %v2632, 1.0
    %v2653 = vadd.f32 %v2634, 1.0
    %v2654 = vadd.f32 %v2636, 1.0
    %v2655 = vadd.f32 %v2638, 1.0
    %v2656 = vadd.f32 %v2640, 1.0
    %v2657 = vrcp.pop %v2641
    %v2658 = vmul.f32 1.0, %v2657
    %v2659 = vrcp.pop %v2642
    %v2660 = vmul.f32 1.0, %v2659
    %v2661 = vrcp.pop %v2643
    %v2662 = vmul.f32 1.0, %v2661
    %v2663 = vrcp.pop %v2644
    %v2664 = vmul.f32 1.0, %v2663
    %v2665 = vrcp.pop %v2645
    %v2666 = vmul.f32 1.0, %v2665
    %v2667 = vrcp.pop %v2646
    %v2668 = vmul.f32 1.0, %v2667
    %v2669 = vrcp.pop %v2647
    %v2670 = vmul.f32 1.0, %v2669
    %v2671 = vrcp.pop %v2648
    %v2672 = vmul.f32 1.0, %v2671
    %v2673 = vrcp.pop %v2649
    %v2674 = vmul.f32 1.0, %v2673
    %v2675 = vrcp.pop %v2650
    %v2676 = vmul.f32 1.0, %v2675
    %v2677 = vrcp.pop %v2651
    %v2678 = vmul.f32 1.0, %v2677
    %v2679 = vrcp.pop %v2652
    %v2680 = vmul.f32 1.0, %v2679
    %v2681 = vrcp.pop %v2653
    %v2682 = vmul.f32 1.0, %v2681
    %v2683 = vrcp.pop %v2654
    %v2684 = vmul.f32 1.0, %v2683
    %v2685 = vrcp.pop %v2655
    %v2686 = vmul.f32 1.0, %v2685
    %v2687 = vrcp.pop %v2656
    %v2688 = vmul.f32 1.0, %v2687
    %v2689 = vld [vmem:[#allocation2 + $0x80] sm:$0xff]
    %v2690 = vld [vmem:[#allocation2 + $0x88] sm:$0xff]
    %v2691 = vld [vmem:[#allocation2 + $0x90] sm:$0xff]
    %v2692 = vld [vmem:[#allocation2 + $0x98] sm:$0xff]
    %v2693 = vld [vmem:[#allocation2 + $0x180] sm:$0xff]
    %v2694 = vld [vmem:[#allocation2 + $0x188] sm:$0xff]
    %v2695 = vld [vmem:[#allocation2 + $0x190] sm:$0xff]
    %v2696 = vld [vmem:[#allocation2 + $0x198] sm:$0xff]
    %v2697 = vld [vmem:[#allocation2 + $0x280] sm:$0xff]
    %v2698 = vld [vmem:[#allocation2 + $0x288] sm:$0xff]
    %v2699 = vld [vmem:[#allocation2 + $0x290] sm:$0xff]
    %v2700 = vld [vmem:[#allocation2 + $0x298] sm:$0xff]
    %v2701 = vld [vmem:[#allocation2 + $0x380] sm:$0xff]
    %v2702 = vld [vmem:[#allocation2 + $0x388] sm:$0xff]
    %v2703 = vld [vmem:[#allocation2 + $0x390] sm:$0xff]
    %v2704 = vld [vmem:[#allocation2 + $0x398] sm:$0xff]
    %v2705 = vmul.f32 %v1920, %v2658
    %v2706 = vmul.f32 %v1920, %v2660
    %v2707 = vmul.f32 %v1920, %v2662
    %v2708 = vmul.f32 %v1920, %v2664
    %v2709 = vmul.f32 %v1925, %v2666
    %v2710 = vmul.f32 %v1925, %v2668
    %v2711 = vmul.f32 %v1925, %v2670
    %v2712 = vmul.f32 %v1925, %v2672
    %v2713 = vmul.f32 %v1930, %v2674
    %v2714 = vmul.f32 %v1930, %v2676
    %v2715 = vmul.f32 %v1930, %v2678
    %v2716 = vmul.f32 %v1930, %v2680
    %v2717 = vmul.f32 %v1935, %v2682
    %v2718 = vmul.f32 %v1935, %v2684
    %v2719 = vmul.f32 %v1935, %v2686
    %v2720 = vmul.f32 %v1935, %v2688
    %v2721 = vadd.f32 %v2705, %v1955
    %v2722 = vadd.f32 %v2706, %v1955
    %v2723 = vadd.f32 %v2707, %v1955
    %v2724 = vadd.f32 %v2708, %v1955
    %v2725 = vadd.f32 %v2709, %v1959
    %v2726 = vadd.f32 %v2710, %v1959
    %v2727 = vadd.f32 %v2711, %v1959
    %v2728 = vadd.f32 %v2712, %v1959
    %v2729 = vadd.f32 %v2713, %v1963
    %v2730 = vadd.f32 %v2714, %v1963
    %v2731 = vadd.f32 %v2715, %v1963
    %v2732 = vadd.f32 %v2716, %v1963
    %v2733 = vadd.f32 %v2717, %v1967
    %v2734 = vadd.f32 %v2718, %v1967
    %v2735 = vadd.f32 %v2719, %v1967
    %v2736 = vadd.f32 %v2720, %v1967
    %v2737 = vmul.f32 %v2689, %v1987
    %v2738 = vmul.f32 %v2690, %v1987
    %v2739 = vmul.f32 %v2691, %v1987
    %v2740 = vmul.f32 %v2692, %v1987
    %v2741 = vmul.f32 %v2693, %v1991
    %v2742 = vmul.f32 %v2694, %v1991
    %v2743 = vmul.f32 %v2695, %v1991
    %v2744 = vmul.f32 %v2696, %v1991
    %v2745 = vmul.f32 %v2697, %v1995
    %v2746 = vmul.f32 %v2698, %v1995
    %v2747 = vmul.f32 %v2699, %v1995
    %v2748 = vmul.f32 %v2700, %v1995
    %v2749 = vmul.f32 %v2701, %v1999
    %v2750 = vmul.f32 %v2702, %v1999
    %v2751 = vmul.f32 %v2703, %v1999
    %v2752 = vmul.f32 %v2704, %v1999
    %v2753 = vadd.f32 %v2721, %v2737
    %v2754 = vadd.f32 %v2722, %v2738
    %v2755 = vadd.f32 %v2723, %v2739
    %v2756 = vadd.f32 %v2724, %v2740
    %v2757 = vadd.f32 %v2725, %v2741
    %v2758 = vadd.f32 %v2726, %v2742
    %v2759 = vadd.f32 %v2727, %v2743
    %v2760 = vadd.f32 %v2728, %v2744
    %v2761 = vadd.f32 %v2729, %v2745
    %v2762 = vadd.f32 %v2730, %v2746
    %v2763 = vadd.f32 %v2731, %v2747
    %v2764 = vadd.f32 %v2732, %v2748
    %v2765 = vadd.f32 %v2733, %v2749
    %v2766 = vadd.f32 %v2734, %v2750
    %v2767 = vadd.f32 %v2735, %v2751
    %v2768 = vadd.f32 %v2736, %v2752
    %v2769 = vadd.f32 %v2035, %v2689
    %v2770 = vadd.f32 %v2035, %v2690
    %v2771 = vadd.f32 %v2035, %v2691
    %v2772 = vadd.f32 %v2035, %v2692
    %v2773 = vadd.f32 %v2039, %v2693
    %v2774 = vadd.f32 %v2039, %v2694
    %v2775 = vadd.f32 %v2039, %v2695
    %v2776 = vadd.f32 %v2039, %v2696
    %v2777 = vadd.f32 %v2043, %v2697
    %v2778 = vadd.f32 %v2043, %v2698
    %v2779 = vadd.f32 %v2043, %v2699
    %v2780 = vadd.f32 %v2043, %v2700
    %v2781 = vadd.f32 %v2047, %v2701
    %v2782 = vadd.f32 %v2047, %v2702
    %v2783 = vadd.f32 %v2047, %v2703
    %v2784 = vadd.f32 %v2047, %v2704
    %v2785 = vadd.f32 %v2769, 1e-08
    %v2786 = vadd.f32 %v2770, 1e-08
    %v2787 = vadd.f32 %v2771, 1e-08
    %v2788 = vadd.f32 %v2772, 1e-08
    %v2789 = vadd.f32 %v2773, 1e-08
    %v2790 = vadd.f32 %v2774, 1e-08
    %v2791 = vadd.f32 %v2775, 1e-08
    %v2792 = vadd.f32 %v2776, 1e-08
    %v2793 = vadd.f32 %v2777, 1e-08
    %v2794 = vadd.f32 %v2778, 1e-08
    %v2795 = vadd.f32 %v2779, 1e-08
    %v2796 = vadd.f32 %v2780, 1e-08
    %v2797 = vadd.f32 %v2781, 1e-08
    %v2798 = vadd.f32 %v2782, 1e-08
    %v2799 = vadd.f32 %v2783, 1e-08
    %v2800 = vadd.f32 %v2784, 1e-08
    %v2801 = vrcp.pop %v2785
    %v2802 = vmul.f32 %v2753, %v2801
    %v2803 = vrcp.pop %v2786
    %v2804 = vmul.f32 %v2754, %v2803
    %v2805 = vrcp.pop %v2787
    %v2806 = vmul.f32 %v2755, %v2805
    %v2807 = vrcp.pop %v2788
    %v2808 = vmul.f32 %v2756, %v2807
    %v2809 = vrcp.pop %v2789
    %v2810 = vmul.f32 %v2757, %v2809
    %v2811 = vrcp.pop %v2790
    %v2812 = vmul.f32 %v2758, %v2811
    %v2813 = vrcp.pop %v2791
    %v2814 = vmul.f32 %v2759, %v2813
    %v2815 = vrcp.pop %v2792
    %v2816 = vmul.f32 %v2760, %v2815
    %v2817 = vrcp.pop %v2793
    %v2818 = vmul.f32 %v2761, %v2817
    %v2819 = vrcp.pop %v2794
    %v2820 = vmul.f32 %v2762, %v2819
    %v2821 = vrcp.pop %v2795
    %v2822 = vmul.f32 %v2763, %v2821
    %v2823 = vrcp.pop %v2796
    %v2824 = vmul.f32 %v2764, %v2823
    %v2825 = vrcp.pop %v2797
    %v2826 = vmul.f32 %v2765, %v2825
    %v2827 = vrcp.pop %v2798
    %v2828 = vmul.f32 %v2766, %v2827
    %v2829 = vrcp.pop %v2799
    %v2830 = vmul.f32 %v2767, %v2829
    %v2831 = vrcp.pop %v2800
    %v2832 = vmul.f32 %v2768, %v2831
    %v2833 = vxor.u32 %v2802, 2147483648
    %v2834 = vxor.u32 %v2804, 2147483648
    %v2835 = vxor.u32 %v2806, 2147483648
    %v2836 = vxor.u32 %v2808, 2147483648
    %v2837 = vxor.u32 %v2810, 2147483648
    %v2838 = vxor.u32 %v2812, 2147483648
    %v2839 = vxor.u32 %v2814, 2147483648
    %v2840 = vxor.u32 %v2816, 2147483648
    %v2841 = vxor.u32 %v2818, 2147483648
    %v2842 = vxor.u32 %v2820, 2147483648
    %v2843 = vxor.u32 %v2822, 2147483648
    %v2844 = vxor.u32 %v2824, 2147483648
    %v2845 = vxor.u32 %v2826, 2147483648
    %v2846 = vxor.u32 %v2828, 2147483648
    %v2847 = vxor.u32 %v2830, 2147483648
    %v2848 = vxor.u32 %v2832, 2147483648
    %v2849 = vmul.f32 %v2833, 1.442695
    %v2850 = vpow.pop %v2849
    %v2851 = vmul.f32 %v2834, 1.442695
    %v2852 = vpow.pop %v2851
    %v2853 = vmul.f32 %v2835, 1.442695
    %v2854 = vpow.pop %v2853
    %v2855 = vmul.f32 %v2836, 1.442695
    %v2856 = vpow.pop %v2855
    %v2857 = vmul.f32 %v2837, 1.442695
    %v2858 = vpow.pop %v2857
    %v2859 = vmul.f32 %v2838, 1.442695
    %v2860 = vpow.pop %v2859
    %v2861 = vmul.f32 %v2839, 1.442695
    %v2862 = vpow.pop %v2861
    %v2863 = vmul.f32 %v2840, 1.442695
    %v2864 = vpow.pop %v2863
    %v2865 = vmul.f32 %v2841, 1.442695
    %v2866 = vpow.pop %v2865
    %v2867 = vmul.f32 %v2842, 1.442695
    %v2868 = vpow.pop %v2867
    %v2869 = vmul.f32 %v2843, 1.442695
    %v2870 = vpow.pop %v2869
    %v2871 = vmul.f32 %v2844, 1.442695
    %v2872 = vpow.pop %v2871
    %v2873 = vmul.f32 %v2845, 1.442695
    %v2874 = vpow.pop %v2873
    %v2875 = vmul.f32 %v2846, 1.442695
    %v2876 = vpow.pop %v2875
    %v2877 = vmul.f32 %v2847, 1.442695
    %v2878 = vpow.pop %v2877
    %v2879 = vmul.f32 %v2848, 1.442695
    %v2880 = vpow.pop %v2879
    %v2881 = vadd.f32 %v2850, 1.0
    %v2882 = vadd.f32 %v2852, 1.0
    %v2883 = vadd.f32 %v2854, 1.0
    %v2884 = vadd.f32 %v2856, 1.0
    %v2885 = vadd.f32 %v2858, 1.0
    %v2886 = vadd.f32 %v2860, 1.0
    %v2887 = vadd.f32 %v2862, 1.0
    %v2888 = vadd.f32 %v2864, 1.0
    %v2889 = vadd.f32 %v2866, 1.0
    %v2890 = vadd.f32 %v2868, 1.0
    %v2891 = vadd.f32 %v2870, 1.0
    %v2892 = vadd.f32 %v2872, 1.0
    %v2893 = vadd.f32 %v2874, 1.0
    %v2894 = vadd.f32 %v2876, 1.0
    %v2895 = vadd.f32 %v2878, 1.0
    %v2896 = vadd.f32 %v2880, 1.0
    %v2897 = vrcp.pop %v2881
    %v2898 = vmul.f32 1.0, %v2897
    %v2899 = vrcp.pop %v2882
    %v2900 = vmul.f32 1.0, %v2899
    %v2901 = vrcp.pop %v2883
    %v2902 = vmul.f32 1.0, %v2901
    %v2903 = vrcp.pop %v2884
    %v2904 = vmul.f32 1.0, %v2903
    %v2905 = vrcp.pop %v2885
    %v2906 = vmul.f32 1.0, %v2905
    %v2907 = vrcp.pop %v2886
    %v2908 = vmul.f32 1.0, %v2907
    %v2909 = vrcp.pop %v2887
    %v2910 = vmul.f32 1.0, %v2909
    %v2911 = vrcp.pop %v2888
    %v2912 = vmul.f32 1.0, %v2911
    %v2913 = vrcp.pop %v2889
    %v2914 = vmul.f32 1.0, %v2913
    %v2915 = vrcp.pop %v2890
    %v2916 = vmul.f32 1.0, %v2915
    %v2917 = vrcp.pop %v2891
    %v2918 = vmul.f32 1.0, %v2917
    %v2919 = vrcp.pop %v2892
    %v2920 = vmul.f32 1.0, %v2919
    %v2921 = vrcp.pop %v2893
    %v2922 = vmul.f32 1.0, %v2921
    %v2923 = vrcp.pop %v2894
    %v2924 = vmul.f32 1.0, %v2923
    %v2925 = vrcp.pop %v2895
    %v2926 = vmul.f32 1.0, %v2925
    %v2927 = vrcp.pop %v2896
    %v2928 = vmul.f32 1.0, %v2927
    %v2929 = vld [vmem:[#allocation2 + $0x60] sm:$0xff]
    %v2930 = vld [vmem:[#allocation2 + $0x68] sm:$0xff]
    %v2931 = vld [vmem:[#allocation2 + $0x70] sm:$0xff]
    %v2932 = vld [vmem:[#allocation2 + $0x78] sm:$0xff]
    %v2933 = vld [vmem:[#allocation2 + $0x160] sm:$0xff]
    %v2934 = vld [vmem:[#allocation2 + $0x168] sm:$0xff]
    %v2935 = vld [vmem:[#allocation2 + $0x170] sm:$0xff]
    %v2936 = vld [vmem:[#allocation2 + $0x178] sm:$0xff]
    %v2937 = vld [vmem:[#allocation2 + $0x260] sm:$0xff]
    %v2938 = vld [vmem:[#allocation2 + $0x268] sm:$0xff]
    %v2939 = vld [vmem:[#allocation2 + $0x270] sm:$0xff]
    %v2940 = vld [vmem:[#allocation2 + $0x278] sm:$0xff]
    %v2941 = vld [vmem:[#allocation2 + $0x360] sm:$0xff]
    %v2942 = vld [vmem:[#allocation2 + $0x368] sm:$0xff]
    %v2943 = vld [vmem:[#allocation2 + $0x370] sm:$0xff]
    %v2944 = vld [vmem:[#allocation2 + $0x378] sm:$0xff]
    %v2945 = vmul.f32 %v1920, %v2898
    %v2946 = vmul.f32 %v1920, %v2900
    %v2947 = vmul.f32 %v1920, %v2902
    %v2948 = vmul.f32 %v1920, %v2904
    %v2949 = vmul.f32 %v1925, %v2906
    %v2950 = vmul.f32 %v1925, %v2908
    %v2951 = vmul.f32 %v1925, %v2910
    %v2952 = vmul.f32 %v1925, %v2912
    %v2953 = vmul.f32 %v1930, %v2914
    %v2954 = vmul.f32 %v1930, %v2916
    %v2955 = vmul.f32 %v1930, %v2918
    %v2956 = vmul.f32 %v1930, %v2920
    %v2957 = vmul.f32 %v1935, %v2922
    %v2958 = vmul.f32 %v1935, %v2924
    %v2959 = vmul.f32 %v1935, %v2926
    %v2960 = vmul.f32 %v1935, %v2928
    %v2961 = vadd.f32 %v2945, %v1955
    %v2962 = vadd.f32 %v2946, %v1955
    %v2963 = vadd.f32 %v2947, %v1955
    %v2964 = vadd.f32 %v2948, %v1955
    %v2965 = vadd.f32 %v2949, %v1959
    %v2966 = vadd.f32 %v2950, %v1959
    %v2967 = vadd.f32 %v2951, %v1959
    %v2968 = vadd.f32 %v2952, %v1959
    %v2969 = vadd.f32 %v2953, %v1963
    %v2970 = vadd.f32 %v2954, %v1963
    %v2971 = vadd.f32 %v2955, %v1963
    %v2972 = vadd.f32 %v2956, %v1963
    %v2973 = vadd.f32 %v2957, %v1967
    %v2974 = vadd.f32 %v2958, %v1967
    %v2975 = vadd.f32 %v2959, %v1967
    %v2976 = vadd.f32 %v2960, %v1967
    %v2977 = vmul.f32 %v2929, %v1987
    %v2978 = vmul.f32 %v2930, %v1987
    %v2979 = vmul.f32 %v2931, %v1987
    %v2980 = vmul.f32 %v2932, %v1987
    %v2981 = vmul.f32 %v2933, %v1991
    %v2982 = vmul.f32 %v2934, %v1991
    %v2983 = vmul.f32 %v2935, %v1991
    %v2984 = vmul.f32 %v2936, %v1991
    %v2985 = vmul.f32 %v2937, %v1995
    %v2986 = vmul.f32 %v2938, %v1995
    %v2987 = vmul.f32 %v2939, %v1995
    %v2988 = vmul.f32 %v2940, %v1995
    %v2989 = vmul.f32 %v2941, %v1999
    %v2990 = vmul.f32 %v2942, %v1999
    %v2991 = vmul.f32 %v2943, %v1999
    %v2992 = vmul.f32 %v2944, %v1999
    %v2993 = vadd.f32 %v2961, %v2977
    %v2994 = vadd.f32 %v2962, %v2978
    %v2995 = vadd.f32 %v2963, %v2979
    %v2996 = vadd.f32 %v2964, %v2980
    %v2997 = vadd.f32 %v2965, %v2981
    %v2998 = vadd.f32 %v2966, %v2982
    %v2999 = vadd.f32 %v2967, %v2983
    %v3000 = vadd.f32 %v2968, %v2984
    %v3001 = vadd.f32 %v2969, %v2985
    %v3002 = vadd.f32 %v2970, %v2986
    %v3003 = vadd.f32 %v2971, %v2987
    %v3004 = vadd.f32 %v2972, %v2988
    %v3005 = vadd.f32 %v2973, %v2989
    %v3006 = vadd.f32 %v2974, %v2990
    %v3007 = vadd.f32 %v2975, %v2991
    %v3008 = vadd.f32 %v2976, %v2992
    %v3009 = vadd.f32 %v2035, %v2929
    %v3010 = vadd.f32 %v2035, %v2930
    %v3011 = vadd.f32 %v2035, %v2931
    %v3012 = vadd.f32 %v2035, %v2932
    %v3013 = vadd.f32 %v2039, %v2933
    %v3014 = vadd.f32 %v2039, %v2934
    %v3015 = vadd.f32 %v2039, %v2935
    %v3016 = vadd.f32 %v2039, %v2936
    %v3017 = vadd.f32 %v2043, %v2937
    %v3018 = vadd.f32 %v2043, %v2938
    %v3019 = vadd.f32 %v2043, %v2939
    %v3020 = vadd.f32 %v2043, %v2940
    %v3021 = vadd.f32 %v2047, %v2941
    %v3022 = vadd.f32 %v2047, %v2942
    %v3023 = vadd.f32 %v2047, %v2943
    %v3024 = vadd.f32 %v2047, %v2944
    %v3025 = vadd.f32 %v3009, 1e-08
    %v3026 = vadd.f32 %v3010, 1e-08
    %v3027 = vadd.f32 %v3011, 1e-08
    %v3028 = vadd.f32 %v3012, 1e-08
    %v3029 = vadd.f32 %v3013, 1e-08
    %v3030 = vadd.f32 %v3014, 1e-08
    %v3031 = vadd.f32 %v3015, 1e-08
    %v3032 = vadd.f32 %v3016, 1e-08
    %v3033 = vadd.f32 %v3017, 1e-08
    %v3034 = vadd.f32 %v3018, 1e-08
    %v3035 = vadd.f32 %v3019, 1e-08
    %v3036 = vadd.f32 %v3020, 1e-08
    %v3037 = vadd.f32 %v3021, 1e-08
    %v3038 = vadd.f32 %v3022, 1e-08
    %v3039 = vadd.f32 %v3023, 1e-08
    %v3040 = vadd.f32 %v3024, 1e-08
    %v3041 = vrcp.pop %v3025
    %v3042 = vmul.f32 %v2993, %v3041
    %v3043 = vrcp.pop %v3026
    %v3044 = vmul.f32 %v2994, %v3043
    %v3045 = vrcp.pop %v3027
    %v3046 = vmul.f32 %v2995, %v3045
    %v3047 = vrcp.pop %v3028
    %v3048 = vmul.f32 %v2996, %v3047
    %v3049 = vrcp.pop %v3029
    %v3050 = vmul.f32 %v2997, %v3049
    %v3051 = vrcp.pop %v3030
    %v3052 = vmul.f32 %v2998, %v3051
    %v3053 = vrcp.pop %v3031
    %v3054 = vmul.f32 %v2999, %v3053
    %v3055 = vrcp.pop %v3032
    %v3056 = vmul.f32 %v3000, %v3055
    %v3057 = vrcp.pop %v3033
    %v3058 = vmul.f32 %v3001, %v3057
    %v3059 = vrcp.pop %v3034
    %v3060 = vmul.f32 %v3002, %v3059
    %v3061 = vrcp.pop %v3035
    %v3062 = vmul.f32 %v3003, %v3061
    %v3063 = vrcp.pop %v3036
    %v3064 = vmul.f32 %v3004, %v3063
    %v3065 = vrcp.pop %v3037
    %v3066 = vmul.f32 %v3005, %v3065
    %v3067 = vrcp.pop %v3038
    %v3068 = vmul.f32 %v3006, %v3067
    %v3069 = vrcp.pop %v3039
    %v3070 = vmul.f32 %v3007, %v3069
    %v3071 = vrcp.pop %v3040
    %v3072 = vmul.f32 %v3008, %v3071
    %v3073 = vxor.u32 %v3042, 2147483648
    %v3074 = vxor.u32 %v3044, 2147483648
    %v3075 = vxor.u32 %v3046, 2147483648
    %v3076 = vxor.u32 %v3048, 2147483648
    %v3077 = vxor.u32 %v3050, 2147483648
    %v3078 = vxor.u32 %v3052, 2147483648
    %v3079 = vxor.u32 %v3054, 2147483648
    %v3080 = vxor.u32 %v3056, 2147483648
    %v3081 = vxor.u32 %v3058, 2147483648
    %v3082 = vxor.u32 %v3060, 2147483648
    %v3083 = vxor.u32 %v3062, 2147483648
    %v3084 = vxor.u32 %v3064, 2147483648
    %v3085 = vxor.u32 %v3066, 2147483648
    %v3086 = vxor.u32 %v3068, 2147483648
    %v3087 = vxor.u32 %v3070, 2147483648
    %v3088 = vxor.u32 %v3072, 2147483648
    %v3089 = vmul.f32 %v3073, 1.442695
    %v3090 = vpow.pop %v3089
    %v3091 = vmul.f32 %v3074, 1.442695
    %v3092 = vpow.pop %v3091
    %v3093 = vmul.f32 %v3075, 1.442695
    %v3094 = vpow.pop %v3093
    %v3095 = vmul.f32 %v3076, 1.442695
    %v3096 = vpow.pop %v3095
    %v3097 = vmul.f32 %v3077, 1.442695
    %v3098 = vpow.pop %v3097
    %v3099 = vmul.f32 %v3078, 1.442695
    %v3100 = vpow.pop %v3099
    %v3101 = vmul.f32 %v3079, 1.442695
    %v3102 = vpow.pop %v3101
    %v3103 = vmul.f32 %v3080, 1.442695
    %v3104 = vpow.pop %v3103
    %v3105 = vmul.f32 %v3081, 1.442695
    %v3106 = vpow.pop %v3105
    %v3107 = vmul.f32 %v3082, 1.442695
    %v3108 = vpow.pop %v3107
    %v3109 = vmul.f32 %v3083, 1.442695
    %v3110 = vpow.pop %v3109
    %v3111 = vmul.f32 %v3084, 1.442695
    %v3112 = vpow.pop %v3111
    %v3113 = vmul.f32 %v3085, 1.442695
    %v3114 = vpow.pop %v3113
    %v3115 = vmul.f32 %v3086, 1.442695
    %v3116 = vpow.pop %v3115
    %v3117 = vmul.f32 %v3087, 1.442695
    %v3118 = vpow.pop %v3117
    %v3119 = vmul.f32 %v3088, 1.442695
    %v3120 = vpow.pop %v3119
    %v3121 = vadd.f32 %v3090, 1.0
    %v3122 = vadd.f32 %v3092, 1.0
    %v3123 = vadd.f32 %v3094, 1.0
    %v3124 = vadd.f32 %v3096, 1.0
    %v3125 = vadd.f32 %v3098, 1.0
    %v3126 = vadd.f32 %v3100, 1.0
    %v3127 = vadd.f32 %v3102, 1.0
    %v3128 = vadd.f32 %v3104, 1.0
    %v3129 = vadd.f32 %v3106, 1.0
    %v3130 = vadd.f32 %v3108, 1.0
    %v3131 = vadd.f32 %v3110, 1.0
    %v3132 = vadd.f32 %v3112, 1.0
    %v3133 = vadd.f32 %v3114, 1.0
    %v3134 = vadd.f32 %v3116, 1.0
    %v3135 = vadd.f32 %v3118, 1.0
    %v3136 = vadd.f32 %v3120, 1.0
    %v3137 = vrcp.pop %v3121
    %v3138 = vmul.f32 1.0, %v3137
    %v3139 = vrcp.pop %v3122
    %v3140 = vmul.f32 1.0, %v3139
    %v3141 = vrcp.pop %v3123
    %v3142 = vmul.f32 1.0, %v3141
    %v3143 = vrcp.pop %v3124
    %v3144 = vmul.f32 1.0, %v3143
    %v3145 = vrcp.pop %v3125
    %v3146 = vmul.f32 1.0, %v3145
    %v3147 = vrcp.pop %v3126
    %v3148 = vmul.f32 1.0, %v3147
    %v3149 = vrcp.pop %v3127
    %v3150 = vmul.f32 1.0, %v3149
    %v3151 = vrcp.pop %v3128
    %v3152 = vmul.f32 1.0, %v3151
    %v3153 = vrcp.pop %v3129
    %v3154 = vmul.f32 1.0, %v3153
    %v3155 = vrcp.pop %v3130
    %v3156 = vmul.f32 1.0, %v3155
    %v3157 = vrcp.pop %v3131
    %v3158 = vmul.f32 1.0, %v3157
    %v3159 = vrcp.pop %v3132
    %v3160 = vmul.f32 1.0, %v3159
    %v3161 = vrcp.pop %v3133
    %v3162 = vmul.f32 1.0, %v3161
    %v3163 = vrcp.pop %v3134
    %v3164 = vmul.f32 1.0, %v3163
    %v3165 = vrcp.pop %v3135
    %v3166 = vmul.f32 1.0, %v3165
    %v3167 = vrcp.pop %v3136
    %v3168 = vmul.f32 1.0, %v3167
    %v3169 = vld [vmem:[#allocation2 + $0x40] sm:$0xff]
    %v3170 = vld [vmem:[#allocation2 + $0x48] sm:$0xff]
    %v3171 = vld [vmem:[#allocation2 + $0x50] sm:$0xff]
    %v3172 = vld [vmem:[#allocation2 + $0x58] sm:$0xff]
    %v3173 = vld [vmem:[#allocation2 + $0x140] sm:$0xff]
    %v3174 = vld [vmem:[#allocation2 + $0x148] sm:$0xff]
    %v3175 = vld [vmem:[#allocation2 + $0x150] sm:$0xff]
    %v3176 = vld [vmem:[#allocation2 + $0x158] sm:$0xff]
    %v3177 = vld [vmem:[#allocation2 + $0x240] sm:$0xff]
    %v3178 = vld [vmem:[#allocation2 + $0x248] sm:$0xff]
    %v3179 = vld [vmem:[#allocation2 + $0x250] sm:$0xff]
    %v3180 = vld [vmem:[#allocation2 + $0x258] sm:$0xff]
    %v3181 = vld [vmem:[#allocation2 + $0x340] sm:$0xff]
    %v3182 = vld [vmem:[#allocation2 + $0x348] sm:$0xff]
    %v3183 = vld [vmem:[#allocation2 + $0x350] sm:$0xff]
    %v3184 = vld [vmem:[#allocation2 + $0x358] sm:$0xff]
    %v3185 = vmul.f32 %v1920, %v3138
    %v3186 = vmul.f32 %v1920, %v3140
    %v3187 = vmul.f32 %v1920, %v3142
    %v3188 = vmul.f32 %v1920, %v3144
    %v3189 = vmul.f32 %v1925, %v3146
    %v3190 = vmul.f32 %v1925, %v3148
    %v3191 = vmul.f32 %v1925, %v3150
    %v3192 = vmul.f32 %v1925, %v3152
    %v3193 = vmul.f32 %v1930, %v3154
    %v3194 = vmul.f32 %v1930, %v3156
    %v3195 = vmul.f32 %v1930, %v3158
    %v3196 = vmul.f32 %v1930, %v3160
    %v3197 = vmul.f32 %v1935, %v3162
    %v3198 = vmul.f32 %v1935, %v3164
    %v3199 = vmul.f32 %v1935, %v3166
    %v3200 = vmul.f32 %v1935, %v3168
    %v3201 = vadd.f32 %v3185, %v1955
    %v3202 = vadd.f32 %v3186, %v1955
    %v3203 = vadd.f32 %v3187, %v1955
    %v3204 = vadd.f32 %v3188, %v1955
    %v3205 = vadd.f32 %v3189, %v1959
    %v3206 = vadd.f32 %v3190, %v1959
    %v3207 = vadd.f32 %v3191, %v1959
    %v3208 = vadd.f32 %v3192, %v1959
    %v3209 = vadd.f32 %v3193, %v1963
    %v3210 = vadd.f32 %v3194, %v1963
    %v3211 = vadd.f32 %v3195, %v1963
    %v3212 = vadd.f32 %v3196, %v1963
    %v3213 = vadd.f32 %v3197, %v1967
    %v3214 = vadd.f32 %v3198, %v1967
    %v3215 = vadd.f32 %v3199, %v1967
    %v3216 = vadd.f32 %v3200, %v1967
    %v3217 = vmul.f32 %v3169, %v1987
    %v3218 = vmul.f32 %v3170, %v1987
    %v3219 = vmul.f32 %v3171, %v1987
    %v3220 = vmul.f32 %v3172, %v1987
    %v3221 = vmul.f32 %v3173, %v1991
    %v3222 = vmul.f32 %v3174, %v1991
    %v3223 = vmul.f32 %v3175, %v1991
    %v3224 = vmul.f32 %v3176, %v1991
    %v3225 = vmul.f32 %v3177, %v1995
    %v3226 = vmul.f32 %v3178, %v1995
    %v3227 = vmul.f32 %v3179, %v1995
    %v3228 = vmul.f32 %v3180, %v1995
    %v3229 = vmul.f32 %v3181, %v1999
    %v3230 = vmul.f32 %v3182, %v1999
    %v3231 = vmul.f32 %v3183, %v1999
    %v3232 = vmul.f32 %v3184, %v1999
    %v3233 = vadd.f32 %v3201, %v3217
    %v3234 = vadd.f32 %v3202, %v3218
    %v3235 = vadd.f32 %v3203, %v3219
    %v3236 = vadd.f32 %v3204, %v3220
    %v3237 = vadd.f32 %v3205, %v3221
    %v3238 = vadd.f32 %v3206, %v3222
    %v3239 = vadd.f32 %v3207, %v3223
    %v3240 = vadd.f32 %v3208, %v3224
    %v3241 = vadd.f32 %v3209, %v3225
    %v3242 = vadd.f32 %v3210, %v3226
    %v3243 = vadd.f32 %v3211, %v3227
    %v3244 = vadd.f32 %v3212, %v3228
    %v3245 = vadd.f32 %v3213, %v3229
    %v3246 = vadd.f32 %v3214, %v3230
    %v3247 = vadd.f32 %v3215, %v3231
    %v3248 = vadd.f32 %v3216, %v3232
    %v3249 = vadd.f32 %v2035, %v3169
    %v3250 = vadd.f32 %v2035, %v3170
    %v3251 = vadd.f32 %v2035, %v3171
    %v3252 = vadd.f32 %v2035, %v3172
    %v3253 = vadd.f32 %v2039, %v3173
    %v3254 = vadd.f32 %v2039, %v3174
    %v3255 = vadd.f32 %v2039, %v3175
    %v3256 = vadd.f32 %v2039, %v3176
    %v3257 = vadd.f32 %v2043, %v3177
    %v3258 = vadd.f32 %v2043, %v3178
    %v3259 = vadd.f32 %v2043, %v3179
    %v3260 = vadd.f32 %v2043, %v3180
    %v3261 = vadd.f32 %v2047, %v3181
    %v3262 = vadd.f32 %v2047, %v3182
    %v3263 = vadd.f32 %v2047, %v3183
    %v3264 = vadd.f32 %v2047, %v3184
    %v3265 = vadd.f32 %v3249, 1e-08
    %v3266 = vadd.f32 %v3250, 1e-08
    %v3267 = vadd.f32 %v3251, 1e-08
    %v3268 = vadd.f32 %v3252, 1e-08
    %v3269 = vadd.f32 %v3253, 1e-08
    %v3270 = vadd.f32 %v3254, 1e-08
    %v3271 = vadd.f32 %v3255, 1e-08
    %v3272 = vadd.f32 %v3256, 1e-08
    %v3273 = vadd.f32 %v3257, 1e-08
    %v3274 = vadd.f32 %v3258, 1e-08
    %v3275 = vadd.f32 %v3259, 1e-08
    %v3276 = vadd.f32 %v3260, 1e-08
    %v3277 = vadd.f32 %v3261, 1e-08
    %v3278 = vadd.f32 %v3262, 1e-08
    %v3279 = vadd.f32 %v3263, 1e-08
    %v3280 = vadd.f32 %v3264, 1e-08
    %v3281 = vrcp.pop %v3265
    %v3282 = vmul.f32 %v3233, %v3281
    %v3283 = vrcp.pop %v3266
    %v3284 = vmul.f32 %v3234, %v3283
    %v3285 = vrcp.pop %v3267
    %v3286 = vmul.f32 %v3235, %v3285
    %v3287 = vrcp.pop %v3268
    %v3288 = vmul.f32 %v3236, %v3287
    %v3289 = vrcp.pop %v3269
    %v3290 = vmul.f32 %v3237, %v3289
    %v3291 = vrcp.pop %v3270
    %v3292 = vmul.f32 %v3238, %v3291
    %v3293 = vrcp.pop %v3271
    %v3294 = vmul.f32 %v3239, %v3293
    %v3295 = vrcp.pop %v3272
    %v3296 = vmul.f32 %v3240, %v3295
    %v3297 = vrcp.pop %v3273
    %v3298 = vmul.f32 %v3241, %v3297
    %v3299 = vrcp.pop %v3274
    %v3300 = vmul.f32 %v3242, %v3299
    %v3301 = vrcp.pop %v3275
    %v3302 = vmul.f32 %v3243, %v3301
    %v3303 = vrcp.pop %v3276
    %v3304 = vmul.f32 %v3244, %v3303
    %v3305 = vrcp.pop %v3277
    %v3306 = vmul.f32 %v3245, %v3305
    %v3307 = vrcp.pop %v3278
    %v3308 = vmul.f32 %v3246, %v3307
    %v3309 = vrcp.pop %v3279
    %v3310 = vmul.f32 %v3247, %v3309
    %v3311 = vrcp.pop %v3280
    %v3312 = vmul.f32 %v3248, %v3311
    %v3313 = vxor.u32 %v3282, 2147483648
    %v3314 = vxor.u32 %v3284, 2147483648
    %v3315 = vxor.u32 %v3286, 2147483648
    %v3316 = vxor.u32 %v3288, 2147483648
    %v3317 = vxor.u32 %v3290, 2147483648
    %v3318 = vxor.u32 %v3292, 2147483648
    %v3319 = vxor.u32 %v3294, 2147483648
    %v3320 = vxor.u32 %v3296, 2147483648
    %v3321 = vxor.u32 %v3298, 2147483648
    %v3322 = vxor.u32 %v3300, 2147483648
    %v3323 = vxor.u32 %v3302, 2147483648
    %v3324 = vxor.u32 %v3304, 2147483648
    %v3325 = vxor.u32 %v3306, 2147483648
    %v3326 = vxor.u32 %v3308, 2147483648
    %v3327 = vxor.u32 %v3310, 2147483648
    %v3328 = vxor.u32 %v3312, 2147483648
    %v3329 = vmul.f32 %v3313, 1.442695
    %v3330 = vpow.pop %v3329
    %v3331 = vmul.f32 %v3314, 1.442695
    %v3332 = vpow.pop %v3331
    %v3333 = vmul.f32 %v3315, 1.442695
    %v3334 = vpow.pop %v3333
    %v3335 = vmul.f32 %v3316, 1.442695
    %v3336 = vpow.pop %v3335
    %v3337 = vmul.f32 %v3317, 1.442695
    %v3338 = vpow.pop %v3337
    %v3339 = vmul.f32 %v3318, 1.442695
    %v3340 = vpow.pop %v3339
    %v3341 = vmul.f32 %v3319, 1.442695
    %v3342 = vpow.pop %v3341
    %v3343 = vmul.f32 %v3320, 1.442695
    %v3344 = vpow.pop %v3343
    %v3345 = vmul.f32 %v3321, 1.442695
    %v3346 = vpow.pop %v3345
    %v3347 = vmul.f32 %v3322, 1.442695
    %v3348 = vpow.pop %v3347
    %v3349 = vmul.f32 %v3323, 1.442695
    %v3350 = vpow.pop %v3349
    %v3351 = vmul.f32 %v3324, 1.442695
    %v3352 = vpow.pop %v3351
    %v3353 = vmul.f32 %v3325, 1.442695
    %v3354 = vpow.pop %v3353
    %v3355 = vmul.f32 %v3326, 1.442695
    %v3356 = vpow.pop %v3355
    %v3357 = vmul.f32 %v3327, 1.442695
    %v3358 = vpow.pop %v3357
    %v3359 = vmul.f32 %v3328, 1.442695
    %v3360 = vpow.pop %v3359
    %v3361 = vadd.f32 %v3330, 1.0
    %v3362 = vadd.f32 %v3332, 1.0
    %v3363 = vadd.f32 %v3334, 1.0
    %v3364 = vadd.f32 %v3336, 1.0
    %v3365 = vadd.f32 %v3338, 1.0
    %v3366 = vadd.f32 %v3340, 1.0
    %v3367 = vadd.f32 %v3342, 1.0
    %v3368 = vadd.f32 %v3344, 1.0
    %v3369 = vadd.f32 %v3346, 1.0
    %v3370 = vadd.f32 %v3348, 1.0
    %v3371 = vadd.f32 %v3350, 1.0
    %v3372 = vadd.f32 %v3352, 1.0
    %v3373 = vadd.f32 %v3354, 1.0
    %v3374 = vadd.f32 %v3356, 1.0
    %v3375 = vadd.f32 %v3358, 1.0
    %v3376 = vadd.f32 %v3360, 1.0
    %v3377 = vrcp.pop %v3361
    %v3378 = vmul.f32 1.0, %v3377
    %v3379 = vrcp.pop %v3362
    %v3380 = vmul.f32 1.0, %v3379
    %v3381 = vrcp.pop %v3363
    %v3382 = vmul.f32 1.0, %v3381
    %v3383 = vrcp.pop %v3364
    %v3384 = vmul.f32 1.0, %v3383
    %v3385 = vrcp.pop %v3365
    %v3386 = vmul.f32 1.0, %v3385
    %v3387 = vrcp.pop %v3366
    %v3388 = vmul.f32 1.0, %v3387
    %v3389 = vrcp.pop %v3367
    %v3390 = vmul.f32 1.0, %v3389
    %v3391 = vrcp.pop %v3368
    %v3392 = vmul.f32 1.0, %v3391
    %v3393 = vrcp.pop %v3369
    %v3394 = vmul.f32 1.0, %v3393
    %v3395 = vrcp.pop %v3370
    %v3396 = vmul.f32 1.0, %v3395
    %v3397 = vrcp.pop %v3371
    %v3398 = vmul.f32 1.0, %v3397
    %v3399 = vrcp.pop %v3372
    %v3400 = vmul.f32 1.0, %v3399
    %v3401 = vrcp.pop %v3373
    %v3402 = vmul.f32 1.0, %v3401
    %v3403 = vrcp.pop %v3374
    %v3404 = vmul.f32 1.0, %v3403
    %v3405 = vrcp.pop %v3375
    %v3406 = vmul.f32 1.0, %v3405
    %v3407 = vrcp.pop %v3376
    %v3408 = vmul.f32 1.0, %v3407
    %v3409 = vld [vmem:[#allocation2 + $0x20] sm:$0xff]
    %v3410 = vld [vmem:[#allocation2 + $0x28] sm:$0xff]
    %v3411 = vld [vmem:[#allocation2 + $0x30] sm:$0xff]
    %v3412 = vld [vmem:[#allocation2 + $0x38] sm:$0xff]
    %v3413 = vld [vmem:[#allocation2 + $0x120] sm:$0xff]
    %v3414 = vld [vmem:[#allocation2 + $0x128] sm:$0xff]
    %v3415 = vld [vmem:[#allocation2 + $0x130] sm:$0xff]
    %v3416 = vld [vmem:[#allocation2 + $0x138] sm:$0xff]
    %v3417 = vld [vmem:[#allocation2 + $0x220] sm:$0xff]
    %v3418 = vld [vmem:[#allocation2 + $0x228] sm:$0xff]
    %v3419 = vld [vmem:[#allocation2 + $0x230] sm:$0xff]
    %v3420 = vld [vmem:[#allocation2 + $0x238] sm:$0xff]
    %v3421 = vld [vmem:[#allocation2 + $0x320] sm:$0xff]
    %v3422 = vld [vmem:[#allocation2 + $0x328] sm:$0xff]
    %v3423 = vld [vmem:[#allocation2 + $0x330] sm:$0xff]
    %v3424 = vld [vmem:[#allocation2 + $0x338] sm:$0xff]
    %v3425 = vmul.f32 %v1920, %v3378
    %v3426 = vmul.f32 %v1920, %v3380
    %v3427 = vmul.f32 %v1920, %v3382
    %v3428 = vmul.f32 %v1920, %v3384
    %v3429 = vmul.f32 %v1925, %v3386
    %v3430 = vmul.f32 %v1925, %v3388
    %v3431 = vmul.f32 %v1925, %v3390
    %v3432 = vmul.f32 %v1925, %v3392
    %v3433 = vmul.f32 %v1930, %v3394
    %v3434 = vmul.f32 %v1930, %v3396
    %v3435 = vmul.f32 %v1930, %v3398
    %v3436 = vmul.f32 %v1930, %v3400
    %v3437 = vmul.f32 %v1935, %v3402
    %v3438 = vmul.f32 %v1935, %v3404
    %v3439 = vmul.f32 %v1935, %v3406
    %v3440 = vmul.f32 %v1935, %v3408
    %v3441 = vadd.f32 %v3425, %v1955
    %v3442 = vadd.f32 %v3426, %v1955
    %v3443 = vadd.f32 %v3427, %v1955
    %v3444 = vadd.f32 %v3428, %v1955
    %v3445 = vadd.f32 %v3429, %v1959
    %v3446 = vadd.f32 %v3430, %v1959
    %v3447 = vadd.f32 %v3431, %v1959
    %v3448 = vadd.f32 %v3432, %v1959
    %v3449 = vadd.f32 %v3433, %v1963
    %v3450 = vadd.f32 %v3434, %v1963
    %v3451 = vadd.f32 %v3435, %v1963
    %v3452 = vadd.f32 %v3436, %v1963
    %v3453 = vadd.f32 %v3437, %v1967
    %v3454 = vadd.f32 %v3438, %v1967
    %v3455 = vadd.f32 %v3439, %v1967
    %v3456 = vadd.f32 %v3440, %v1967
    %v3457 = vmul.f32 %v3409, %v1987
    %v3458 = vmul.f32 %v3410, %v1987
    %v3459 = vmul.f32 %v3411, %v1987
    %v3460 = vmul.f32 %v3412, %v1987
    %v3461 = vmul.f32 %v3413, %v1991
    %v3462 = vmul.f32 %v3414, %v1991
    %v3463 = vmul.f32 %v3415, %v1991
    %v3464 = vmul.f32 %v3416, %v1991
    %v3465 = vmul.f32 %v3417, %v1995
    %v3466 = vmul.f32 %v3418, %v1995
    %v3467 = vmul.f32 %v3419, %v1995
    %v3468 = vmul.f32 %v3420, %v1995
    %v3469 = vmul.f32 %v3421, %v1999
    %v3470 = vmul.f32 %v3422, %v1999
    %v3471 = vmul.f32 %v3423, %v1999
    %v3472 = vmul.f32 %v3424, %v1999
    %v3473 = vadd.f32 %v3441, %v3457
    %v3474 = vadd.f32 %v3442, %v3458
    %v3475 = vadd.f32 %v3443, %v3459
    %v3476 = vadd.f32 %v3444, %v3460
    %v3477 = vadd.f32 %v3445, %v3461
    %v3478 = vadd.f32 %v3446, %v3462
    %v3479 = vadd.f32 %v3447, %v3463
    %v3480 = vadd.f32 %v3448, %v3464
    %v3481 = vadd.f32 %v3449, %v3465
    %v3482 = vadd.f32 %v3450, %v3466
    %v3483 = vadd.f32 %v3451, %v3467
    %v3484 = vadd.f32 %v3452, %v3468
    %v3485 = vadd.f32 %v3453, %v3469
    %v3486 = vadd.f32 %v3454, %v3470
    %v3487 = vadd.f32 %v3455, %v3471
    %v3488 = vadd.f32 %v3456, %v3472
    %v3489 = vadd.f32 %v2035, %v3409
    %v3490 = vadd.f32 %v2035, %v3410
    %v3491 = vadd.f32 %v2035, %v3411
    %v3492 = vadd.f32 %v2035, %v3412
    %v3493 = vadd.f32 %v2039, %v3413
    %v3494 = vadd.f32 %v2039, %v3414
    %v3495 = vadd.f32 %v2039, %v3415
    %v3496 = vadd.f32 %v2039, %v3416
    %v3497 = vadd.f32 %v2043, %v3417
    %v3498 = vadd.f32 %v2043, %v3418
    %v3499 = vadd.f32 %v2043, %v3419
    %v3500 = vadd.f32 %v2043, %v3420
    %v3501 = vadd.f32 %v2047, %v3421
    %v3502 = vadd.f32 %v2047, %v3422
    %v3503 = vadd.f32 %v2047, %v3423
    %v3504 = vadd.f32 %v2047, %v3424
    %v3505 = vadd.f32 %v3489, 1e-08
    %v3506 = vadd.f32 %v3490, 1e-08
    %v3507 = vadd.f32 %v3491, 1e-08
    %v3508 = vadd.f32 %v3492, 1e-08
    %v3509 = vadd.f32 %v3493, 1e-08
    %v3510 = vadd.f32 %v3494, 1e-08
    %v3511 = vadd.f32 %v3495, 1e-08
    %v3512 = vadd.f32 %v3496, 1e-08
    %v3513 = vadd.f32 %v3497, 1e-08
    %v3514 = vadd.f32 %v3498, 1e-08
    %v3515 = vadd.f32 %v3499, 1e-08
    %v3516 = vadd.f32 %v3500, 1e-08
    %v3517 = vadd.f32 %v3501, 1e-08
    %v3518 = vadd.f32 %v3502, 1e-08
    %v3519 = vadd.f32 %v3503, 1e-08
    %v3520 = vadd.f32 %v3504, 1e-08
    %v3521 = vrcp.pop %v3505
    %v3522 = vmul.f32 %v3473, %v3521
    %v3523 = vrcp.pop %v3506
    %v3524 = vmul.f32 %v3474, %v3523
    %v3525 = vrcp.pop %v3507
    %v3526 = vmul.f32 %v3475, %v3525
    %v3527 = vrcp.pop %v3508
    %v3528 = vmul.f32 %v3476, %v3527
    %v3529 = vrcp.pop %v3509
    %v3530 = vmul.f32 %v3477, %v3529
    %v3531 = vrcp.pop %v3510
    %v3532 = vmul.f32 %v3478, %v3531
    %v3533 = vrcp.pop %v3511
    %v3534 = vmul.f32 %v3479, %v3533
    %v3535 = vrcp.pop %v3512
    %v3536 = vmul.f32 %v3480, %v3535
    %v3537 = vrcp.pop %v3513
    %v3538 = vmul.f32 %v3481, %v3537
    %v3539 = vrcp.pop %v3514
    %v3540 = vmul.f32 %v3482, %v3539
    %v3541 = vrcp.pop %v3515
    %v3542 = vmul.f32 %v3483, %v3541
    %v3543 = vrcp.pop %v3516
    %v3544 = vmul.f32 %v3484, %v3543
    %v3545 = vrcp.pop %v3517
    %v3546 = vmul.f32 %v3485, %v3545
    %v3547 = vrcp.pop %v3518
    %v3548 = vmul.f32 %v3486, %v3547
    %v3549 = vrcp.pop %v3519
    %v3550 = vmul.f32 %v3487, %v3549
    %v3551 = vrcp.pop %v3520
    %v3552 = vmul.f32 %v3488, %v3551
    %v3553 = vxor.u32 %v3522, 2147483648
    %v3554 = vxor.u32 %v3524, 2147483648
    %v3555 = vxor.u32 %v3526, 2147483648
    %v3556 = vxor.u32 %v3528, 2147483648
    %v3557 = vxor.u32 %v3530, 2147483648
    %v3558 = vxor.u32 %v3532, 2147483648
    %v3559 = vxor.u32 %v3534, 2147483648
    %v3560 = vxor.u32 %v3536, 2147483648
    %v3561 = vxor.u32 %v3538, 2147483648
    %v3562 = vxor.u32 %v3540, 2147483648
    %v3563 = vxor.u32 %v3542, 2147483648
    %v3564 = vxor.u32 %v3544, 2147483648
    %v3565 = vxor.u32 %v3546, 2147483648
    %v3566 = vxor.u32 %v3548, 2147483648
    %v3567 = vxor.u32 %v3550, 2147483648
    %v3568 = vxor.u32 %v3552, 2147483648
    %v3569 = vmul.f32 %v3553, 1.442695
    %v3570 = vpow.pop %v3569
    %v3571 = vmul.f32 %v3554, 1.442695
    %v3572 = vpow.pop %v3571
    %v3573 = vmul.f32 %v3555, 1.442695
    %v3574 = vpow.pop %v3573
    %v3575 = vmul.f32 %v3556, 1.442695
    %v3576 = vpow.pop %v3575
    %v3577 = vmul.f32 %v3557, 1.442695
    %v3578 = vpow.pop %v3577
    %v3579 = vmul.f32 %v3558, 1.442695
    %v3580 = vpow.pop %v3579
    %v3581 = vmul.f32 %v3559, 1.442695
    %v3582 = vpow.pop %v3581
    %v3583 = vmul.f32 %v3560, 1.442695
    %v3584 = vpow.pop %v3583
    %v3585 = vmul.f32 %v3561, 1.442695
    %v3586 = vpow.pop %v3585
    %v3587 = vmul.f32 %v3562, 1.442695
    %v3588 = vpow.pop %v3587
    %v3589 = vmul.f32 %v3563, 1.442695
    %v3590 = vpow.pop %v3589
    %v3591 = vmul.f32 %v3564, 1.442695
    %v3592 = vpow.pop %v3591
    %v3593 = vmul.f32 %v3565, 1.442695
    %v3594 = vpow.pop %v3593
    %v3595 = vmul.f32 %v3566, 1.442695
    %v3596 = vpow.pop %v3595
    %v3597 = vmul.f32 %v3567, 1.442695
    %v3598 = vpow.pop %v3597
    %v3599 = vmul.f32 %v3568, 1.442695
    %v3600 = vpow.pop %v3599
    %v3601 = vadd.f32 %v3570, 1.0
    %v3602 = vadd.f32 %v3572, 1.0
    %v3603 = vadd.f32 %v3574, 1.0
    %v3604 = vadd.f32 %v3576, 1.0
    %v3605 = vadd.f32 %v3578, 1.0
    %v3606 = vadd.f32 %v3580, 1.0
    %v3607 = vadd.f32 %v3582, 1.0
    %v3608 = vadd.f32 %v3584, 1.0
    %v3609 = vadd.f32 %v3586, 1.0
    %v3610 = vadd.f32 %v3588, 1.0
    %v3611 = vadd.f32 %v3590, 1.0
    %v3612 = vadd.f32 %v3592, 1.0
    %v3613 = vadd.f32 %v3594, 1.0
    %v3614 = vadd.f32 %v3596, 1.0
    %v3615 = vadd.f32 %v3598, 1.0
    %v3616 = vadd.f32 %v3600, 1.0
    %v3617 = vrcp.pop %v3601
    %v3618 = vmul.f32 1.0, %v3617
    %v3619 = vrcp.pop %v3602
    %v3620 = vmul.f32 1.0, %v3619
    %v3621 = vrcp.pop %v3603
    %v3622 = vmul.f32 1.0, %v3621
    %v3623 = vrcp.pop %v3604
    %v3624 = vmul.f32 1.0, %v3623
    %v3625 = vrcp.pop %v3605
    %v3626 = vmul.f32 1.0, %v3625
    %v3627 = vrcp.pop %v3606
    %v3628 = vmul.f32 1.0, %v3627
    %v3629 = vrcp.pop %v3607
    %v3630 = vmul.f32 1.0, %v3629
    %v3631 = vrcp.pop %v3608
    %v3632 = vmul.f32 1.0, %v3631
    %v3633 = vrcp.pop %v3609
    %v3634 = vmul.f32 1.0, %v3633
    %v3635 = vrcp.pop %v3610
    %v3636 = vmul.f32 1.0, %v3635
    %v3637 = vrcp.pop %v3611
    %v3638 = vmul.f32 1.0, %v3637
    %v3639 = vrcp.pop %v3612
    %v3640 = vmul.f32 1.0, %v3639
    %v3641 = vrcp.pop %v3613
    %v3642 = vmul.f32 1.0, %v3641
    %v3643 = vrcp.pop %v3614
    %v3644 = vmul.f32 1.0, %v3643
    %v3645 = vrcp.pop %v3615
    %v3646 = vmul.f32 1.0, %v3645
    %v3647 = vrcp.pop %v3616
    %v3648 = vmul.f32 1.0, %v3647
    %v3649 = vld [vmem:[#allocation2] sm:$0xff]
    %v3650 = vld [vmem:[#allocation2 + $0x8] sm:$0xff]
    %v3651 = vld [vmem:[#allocation2 + $0x10] sm:$0xff]
    %v3652 = vld [vmem:[#allocation2 + $0x18] sm:$0xff]
    %v3653 = vld [vmem:[#allocation2 + $0x100] sm:$0xff]
    %v3654 = vld [vmem:[#allocation2 + $0x108] sm:$0xff]
    %v3655 = vld [vmem:[#allocation2 + $0x110] sm:$0xff]
    %v3656 = vld [vmem:[#allocation2 + $0x118] sm:$0xff]
    %v3657 = vld [vmem:[#allocation2 + $0x200] sm:$0xff]
    %v3658 = vld [vmem:[#allocation2 + $0x208] sm:$0xff]
    %v3659 = vld [vmem:[#allocation2 + $0x210] sm:$0xff]
    %v3660 = vld [vmem:[#allocation2 + $0x218] sm:$0xff]
    %v3661 = vld [vmem:[#allocation2 + $0x300] sm:$0xff]
    %v3662 = vld [vmem:[#allocation2 + $0x308] sm:$0xff]
    %v3663 = vld [vmem:[#allocation2 + $0x310] sm:$0xff]
    %v3664 = vld [vmem:[#allocation2 + $0x318] sm:$0xff]
    %v3665 = vmul.f32 %v1920, %v3618
    %v3666 = vmul.f32 %v1920, %v3620
    %v3667 = vmul.f32 %v1920, %v3622
    %v3668 = vmul.f32 %v1920, %v3624
    %v3669 = vmul.f32 %v1925, %v3626
    %v3670 = vmul.f32 %v1925, %v3628
    %v3671 = vmul.f32 %v1925, %v3630
    %v3672 = vmul.f32 %v1925, %v3632
    %v3673 = vmul.f32 %v1930, %v3634
    %v3674 = vmul.f32 %v1930, %v3636
    %v3675 = vmul.f32 %v1930, %v3638
    %v3676 = vmul.f32 %v1930, %v3640
    %v3677 = vmul.f32 %v1935, %v3642
    %v3678 = vmul.f32 %v1935, %v3644
    %v3679 = vmul.f32 %v1935, %v3646
    %v3680 = vmul.f32 %v1935, %v3648
    %v3681 = vadd.f32 %v3665, %v1955
    %v3682 = vadd.f32 %v3666, %v1955
    %v3683 = vadd.f32 %v3667, %v1955
    %v3684 = vadd.f32 %v3668, %v1955
    %v3685 = vadd.f32 %v3669, %v1959
    %v3686 = vadd.f32 %v3670, %v1959
    %v3687 = vadd.f32 %v3671, %v1959
    %v3688 = vadd.f32 %v3672, %v1959
    %v3689 = vadd.f32 %v3673, %v1963
    %v3690 = vadd.f32 %v3674, %v1963
    %v3691 = vadd.f32 %v3675, %v1963
    %v3692 = vadd.f32 %v3676, %v1963
    %v3693 = vadd.f32 %v3677, %v1967
    %v3694 = vadd.f32 %v3678, %v1967
    %v3695 = vadd.f32 %v3679, %v1967
    %v3696 = vadd.f32 %v3680, %v1967
    %v3697 = vmul.f32 %v3649, %v1987
    %v3698 = vmul.f32 %v3650, %v1987
    %v3699 = vmul.f32 %v3651, %v1987
    %v3700 = vmul.f32 %v3652, %v1987
    %v3701 = vmul.f32 %v3653, %v1991
    %v3702 = vmul.f32 %v3654, %v1991
    %v3703 = vmul.f32 %v3655, %v1991
    %v3704 = vmul.f32 %v3656, %v1991
    %v3705 = vmul.f32 %v3657, %v1995
    %v3706 = vmul.f32 %v3658, %v1995
    %v3707 = vmul.f32 %v3659, %v1995
    %v3708 = vmul.f32 %v3660, %v1995
    %v3709 = vmul.f32 %v3661, %v1999
    %v3710 = vmul.f32 %v3662, %v1999
    %v3711 = vmul.f32 %v3663, %v1999
    %v3712 = vmul.f32 %v3664, %v1999
    %v3713 = vadd.f32 %v3681, %v3697
    %v3714 = vadd.f32 %v3682, %v3698
    %v3715 = vadd.f32 %v3683, %v3699
    %v3716 = vadd.f32 %v3684, %v3700
    %v3717 = vadd.f32 %v3685, %v3701
    %v3718 = vadd.f32 %v3686, %v3702
    %v3719 = vadd.f32 %v3687, %v3703
    %v3720 = vadd.f32 %v3688, %v3704
    %v3721 = vadd.f32 %v3689, %v3705
    %v3722 = vadd.f32 %v3690, %v3706
    %v3723 = vadd.f32 %v3691, %v3707
    %v3724 = vadd.f32 %v3692, %v3708
    %v3725 = vadd.f32 %v3693, %v3709
    %v3726 = vadd.f32 %v3694, %v3710
    %v3727 = vadd.f32 %v3695, %v3711
    %v3728 = vadd.f32 %v3696, %v3712
    %v3729 = vadd.f32 %v2035, %v3649
    %v3730 = vadd.f32 %v2035, %v3650
    %v3731 = vadd.f32 %v2035, %v3651
    %v3732 = vadd.f32 %v2035, %v3652
    %v3733 = vadd.f32 %v2039, %v3653
    %v3734 = vadd.f32 %v2039, %v3654
    %v3735 = vadd.f32 %v2039, %v3655
    %v3736 = vadd.f32 %v2039, %v3656
    %v3737 = vadd.f32 %v2043, %v3657
    %v3738 = vadd.f32 %v2043, %v3658
    %v3739 = vadd.f32 %v2043, %v3659
    %v3740 = vadd.f32 %v2043, %v3660
    %v3741 = vadd.f32 %v2047, %v3661
    %v3742 = vadd.f32 %v2047, %v3662
    %v3743 = vadd.f32 %v2047, %v3663
    %v3744 = vadd.f32 %v2047, %v3664
    %v3745 = vadd.f32 %v3729, 1e-08
    %v3746 = vadd.f32 %v3730, 1e-08
    %v3747 = vadd.f32 %v3731, 1e-08
    %v3748 = vadd.f32 %v3732, 1e-08
    %v3749 = vadd.f32 %v3733, 1e-08
    %v3750 = vadd.f32 %v3734, 1e-08
    %v3751 = vadd.f32 %v3735, 1e-08
    %v3752 = vadd.f32 %v3736, 1e-08
    %v3753 = vadd.f32 %v3737, 1e-08
    %v3754 = vadd.f32 %v3738, 1e-08
    %v3755 = vadd.f32 %v3739, 1e-08
    %v3756 = vadd.f32 %v3740, 1e-08
    %v3757 = vadd.f32 %v3741, 1e-08
    %v3758 = vadd.f32 %v3742, 1e-08
    %v3759 = vadd.f32 %v3743, 1e-08
    %v3760 = vadd.f32 %v3744, 1e-08
    %v3761 = vrcp.pop %v3745
    %v3762 = vmul.f32 %v3713, %v3761
    %v3763 = vrcp.pop %v3746
    %v3764 = vmul.f32 %v3714, %v3763
    %v3765 = vrcp.pop %v3747
    %v3766 = vmul.f32 %v3715, %v3765
    %v3767 = vrcp.pop %v3748
    %v3768 = vmul.f32 %v3716, %v3767
    %v3769 = vrcp.pop %v3749
    %v3770 = vmul.f32 %v3717, %v3769
    %v3771 = vrcp.pop %v3750
    %v3772 = vmul.f32 %v3718, %v3771
    %v3773 = vrcp.pop %v3751
    %v3774 = vmul.f32 %v3719, %v3773
    %v3775 = vrcp.pop %v3752
    %v3776 = vmul.f32 %v3720, %v3775
    %v3777 = vrcp.pop %v3753
    %v3778 = vmul.f32 %v3721, %v3777
    %v3779 = vrcp.pop %v3754
    %v3780 = vmul.f32 %v3722, %v3779
    %v3781 = vrcp.pop %v3755
    %v3782 = vmul.f32 %v3723, %v3781
    %v3783 = vrcp.pop %v3756
    %v3784 = vmul.f32 %v3724, %v3783
    %v3785 = vrcp.pop %v3757
    %v3786 = vmul.f32 %v3725, %v3785
    %v3787 = vrcp.pop %v3758
    %v3788 = vmul.f32 %v3726, %v3787
    %v3789 = vrcp.pop %v3759
    %v3790 = vmul.f32 %v3727, %v3789
    %v3791 = vrcp.pop %v3760
    %v3792 = vmul.f32 %v3728, %v3791
    %v3793 = vxor.u32 %v3762, 2147483648
    %v3794 = vxor.u32 %v3764, 2147483648
    %v3795 = vxor.u32 %v3766, 2147483648
    %v3796 = vxor.u32 %v3768, 2147483648
    %v3797 = vxor.u32 %v3770, 2147483648
    %v3798 = vxor.u32 %v3772, 2147483648
    %v3799 = vxor.u32 %v3774, 2147483648
    %v3800 = vxor.u32 %v3776, 2147483648
    %v3801 = vxor.u32 %v3778, 2147483648
    %v3802 = vxor.u32 %v3780, 2147483648
    %v3803 = vxor.u32 %v3782, 2147483648
    %v3804 = vxor.u32 %v3784, 2147483648
    %v3805 = vxor.u32 %v3786, 2147483648
    %v3806 = vxor.u32 %v3788, 2147483648
    %v3807 = vxor.u32 %v3790, 2147483648
    %v3808 = vxor.u32 %v3792, 2147483648
    %v3809 = vmul.f32 %v3793, 1.442695
    %v3810 = vpow.pop %v3809
    %v3811 = vmul.f32 %v3794, 1.442695
    %v3812 = vpow.pop %v3811
    %v3813 = vmul.f32 %v3795, 1.442695
    %v3814 = vpow.pop %v3813
    %v3815 = vmul.f32 %v3796, 1.442695
    %v3816 = vpow.pop %v3815
    %v3817 = vmul.f32 %v3797, 1.442695
    %v3818 = vpow.pop %v3817
    %v3819 = vmul.f32 %v3798, 1.442695
    %v3820 = vpow.pop %v3819
    %v3821 = vmul.f32 %v3799, 1.442695
    %v3822 = vpow.pop %v3821
    %v3823 = vmul.f32 %v3800, 1.442695
    %v3824 = vpow.pop %v3823
    %v3825 = vmul.f32 %v3801, 1.442695
    %v3826 = vpow.pop %v3825
    %v3827 = vmul.f32 %v3802, 1.442695
    %v3828 = vpow.pop %v3827
    %v3829 = vmul.f32 %v3803, 1.442695
    %v3830 = vpow.pop %v3829
    %v3831 = vmul.f32 %v3804, 1.442695
    %v3832 = vpow.pop %v3831
    %v3833 = vmul.f32 %v3805, 1.442695
    %v3834 = vpow.pop %v3833
    %v3835 = vmul.f32 %v3806, 1.442695
    %v3836 = vpow.pop %v3835
    %v3837 = vmul.f32 %v3807, 1.442695
    %v3838 = vpow.pop %v3837
    %v3839 = vmul.f32 %v3808, 1.442695
    %v3840 = vpow.pop %v3839
    %v3841 = vadd.f32 %v3810, 1.0
    %v3842 = vadd.f32 %v3812, 1.0
    %v3843 = vadd.f32 %v3814, 1.0
    %v3844 = vadd.f32 %v3816, 1.0
    %v3845 = vadd.f32 %v3818, 1.0
    %v3846 = vadd.f32 %v3820, 1.0
    %v3847 = vadd.f32 %v3822, 1.0
    %v3848 = vadd.f32 %v3824, 1.0
    %v3849 = vadd.f32 %v3826, 1.0
    %v3850 = vadd.f32 %v3828, 1.0
    %v3851 = vadd.f32 %v3830, 1.0
    %v3852 = vadd.f32 %v3832, 1.0
    %v3853 = vadd.f32 %v3834, 1.0
    %v3854 = vadd.f32 %v3836, 1.0
    %v3855 = vadd.f32 %v3838, 1.0
    %v3856 = vadd.f32 %v3840, 1.0
    %v3857 = vrcp.pop %v3841
    %v3858 = vmul.f32 1.0, %v3857
    %v3859 = vrcp.pop %v3842
    %v3860 = vmul.f32 1.0, %v3859
    %v3861 = vrcp.pop %v3843
    %v3862 = vmul.f32 1.0, %v3861
    %v3863 = vrcp.pop %v3844
    %v3864 = vmul.f32 1.0, %v3863
    %v3865 = vrcp.pop %v3845
    %v3866 = vmul.f32 1.0, %v3865
    %v3867 = vrcp.pop %v3846
    %v3868 = vmul.f32 1.0, %v3867
    %v3869 = vrcp.pop %v3847
    %v3870 = vmul.f32 1.0, %v3869
    %v3871 = vrcp.pop %v3848
    %v3872 = vmul.f32 1.0, %v3871
    %v3873 = vrcp.pop %v3849
    %v3874 = vmul.f32 1.0, %v3873
    %v3875 = vrcp.pop %v3850
    %v3876 = vmul.f32 1.0, %v3875
    %v3877 = vrcp.pop %v3851
    %v3878 = vmul.f32 1.0, %v3877
    %v3879 = vrcp.pop %v3852
    %v3880 = vmul.f32 1.0, %v3879
    %v3881 = vrcp.pop %v3853
    %v3882 = vmul.f32 1.0, %v3881
    %v3883 = vrcp.pop %v3854
    %v3884 = vmul.f32 1.0, %v3883
    %v3885 = vrcp.pop %v3855
    %v3886 = vmul.f32 1.0, %v3885
    %v3887 = vrcp.pop %v3856
    %v3888 = vmul.f32 1.0, %v3887
    %3889 = vst [vmem:[#allocation3] sm:$0xff] %v3858
    %3890 = vst [vmem:[#allocation3 + $0x8] sm:$0xff] %v3860
    %3891 = vst [vmem:[#allocation3 + $0x10] sm:$0xff] %v3862
    %3892 = vst [vmem:[#allocation3 + $0x18] sm:$0xff] %v3864
    %3893 = vst [vmem:[#allocation3 + $0x20] sm:$0xff] %v3866
    %3894 = vst [vmem:[#allocation3 + $0x28] sm:$0xff] %v3868
    %3895 = vst [vmem:[#allocation3 + $0x30] sm:$0xff] %v3870
    %3896 = vst [vmem:[#allocation3 + $0x38] sm:$0xff] %v3872
    %3897 = vst [vmem:[#allocation3 + $0x40] sm:$0xff] %v3874
    %3898 = vst [vmem:[#allocation3 + $0x48] sm:$0xff] %v3876
    %3899 = vst [vmem:[#allocation3 + $0x50] sm:$0xff] %v3878
    %3900 = vst [vmem:[#allocation3 + $0x58] sm:$0xff] %v3880
    %3901 = vst [vmem:[#allocation3 + $0x60] sm:$0xff] %v3882
    %3902 = vst [vmem:[#allocation3 + $0x68] sm:$0xff] %v3884
    %3903 = vst [vmem:[#allocation3 + $0x70] sm:$0xff] %v3886
    %3904 = vst [vmem:[#allocation3 + $0x78] sm:$0xff] %v3888
    // Predicated region
    $region18: #{tpu_custom_call.1} parent=1 // pred_check
      _
    $region19: #{tpu_custom_call.1} parent=1 // pred_check_branch
      %3906 = sbr.rel (0) target = $region21
    $region20: #{tpu_custom_call.1} parent=1 // pred_region
      %s3908 = ssub.s32 2048, 2048
      %3909 = vsyncadd [#allocation4], %s3908
      %s3910 = sshll.u32 [#allocation3], 4
      %s3911 = int_to_ptr.vmem [resolvable:$true] %s3910
      %3916 = dma.vmem_to_hbm [thread:$0]  %s3911, 2048, %s3, [#allocation4], 512, 512, 32
    $region21: #{tpu_custom_call.1} parent=1 // pred_fallthru
      _
    // Predicated region
    $region22: #{tpu_custom_call.1} parent=1 // pred_check
      _
    $region23: #{tpu_custom_call.1} parent=1 // pred_check_branch
      %3918 = sbr.rel (0) target = $region25
    $region24: #{tpu_custom_call.1} parent=1 // pred_region
      %3919 = dma.done [#allocation4], 2048
    $region25: #{tpu_custom_call.1} parent=1 // pred_fallthru
      _
    %3920 = vsyncpa [#allocation4], 1

</llo_original>
